<compile_context>
chip_gen: v6e
topology: v6e:2x2x1
jax: 0.10.0
libtpu: 0.0.40
codegen_flags: <defaults>
</compile_context>

<pallas_src>
import jax
import jax.numpy as jnp
from jax import lax
from jax.experimental import pallas as pl
from jax.experimental.pallas import tpu as pltpu

MAX_NORM = 1.0


def _cbow_fused_kernel(idx_ref, emb_hbm, w_ref, out_ref,
                       xmean_ref, rows_vmem, sems):
    """Fused CBoW forward.

    idx_ref   : SMEM (B, 2C) int32   (scalar prefetch)
    emb_hbm   : ANY  (V, E)  f32     (stays in HBM; rows DMA'd on demand)
    w_ref     : VMEM (tile_v, E) f32 streamed linear-weight tile (PyTorch layout)
    out_ref   : VMEM (B, tile_v) f32 lane-dense output tile
    xmean_ref : VMEM (B, E) f32      scratch, persists across grid steps
    rows_vmem : VMEM (2C, B, E) f32  scratch for gathered rows
    sems      : DMA semaphores, one per context slot (shared across batch).
                Sharing is valid ONLY because every copy is the same (1, E) size.
    """
    B, twoC = idx_ref.shape

    @pl.when(pl.program_id(0) == 0)
    def _gather_renorm_mean():
        # Issue all B*2C row DMAs up front so they all overlap.
        # TODO(synk): roll these loops with lax.fori_loop once B*2C reaches the
        # hundreds to bound trace/instruction size; unrolled is cheapest here.
        for b in range(B):
            for c in range(twoC):
                vid = idx_ref[b, c]
                pltpu.make_async_copy(
                    emb_hbm.at[pl.ds(vid, 1)],        # (1, E) row in HBM
                    rows_vmem.at[c, pl.ds(b, 1)],     # (1, E) slot in VMEM
                    sems.at[c],
                ).start()

        # Aggregated waits: one wait per context slot for the combined (B, E)
        # bytes (DMA semaphores count bytes; all copies are equal-size).  No
        # idx re-reads after waits, so SMEM sst->sld forwarding stays intact.
        for c in range(twoC):
            pltpu.make_async_copy(
                emb_hbm.at[pl.ds(0, B)],              # (B, E) — byte count only
                rows_vmem.at[c],                      # (B, E)
                sems.at[c],
            ).wait()

        rows = rows_vmem[...]                          # (2C, B, E)

        # nn.Embedding(max_norm=1): looked-up rows with L2 norm > max_norm are
        # rescaled.  rsqrt of the squared norm keeps the transcendental on the
        # EUP and avoids a VPU divide.  (PyTorch uses norm + 1e-7 in the
        # denominator; the difference is ~1e-8 relative — far below tolerance.)
        sq = jnp.sum(rows * rows, axis=-1, keepdims=True)          # (2C, B, 1)
        inv_norm = lax.rsqrt(jnp.maximum(sq, 1e-30))
        scale = jnp.where(sq > MAX_NORM * MAX_NORM, MAX_NORM * inv_norm, 1.0)

        # Mean over the context dimension (axis 0 of the (2C, B, E) scratch).
        xmean_ref[...] = jnp.sum(rows * scale, axis=0) * (1.0 / twoC)

    # Every grid step: out tile = x_mean @ w_tile.T, contracting E with E
    # (weight kept in its PyTorch (V, E) layout — no transpose op needed).
    out_ref[...] = lax.dot_general(
        xmean_ref[...], w_ref[...],
        dimension_numbers=(((1,), (1,)), ((), ())),
        preferred_element_type=jnp.float32,
    )


def cbow_forward(idx, emb_w, lin_w, *, tile_v=512):
    """idx: (B, 2C) int; emb_w: (V, E) f32; lin_w: (V, E) f32 (PyTorch Linear layout)."""
    B, twoC = idx.shape
    V, E = emb_w.shape
    # Guard the HBM row gather against out-of-range indices.
    idx = jnp.clip(idx.astype(jnp.int32), 0, V - 1)

    # Lane-dense vocab tiles: pick tile_v as a multiple of 128 that divides the
    # 128-padded vocab, so padding (if needed at all) is at most 127 rows and
    # the common case (V already a multiple of 128) never calls jnp.pad.
    v128 = pl.cdiv(V, 128) * 128
    tile_v = max(128, min((tile_v // 128) * 128, v128))
    while v128 % tile_v != 0:
        tile_v -= 128
    lin_w_p = lin_w if v128 == V else jnp.pad(lin_w, ((0, v128 - V), (0, 0)))

    out = pl.pallas_call(
        _cbow_fused_kernel,
        out_shape=jax.ShapeDtypeStruct((B, v128), jnp.float32),
        grid_spec=pltpu.PrefetchScalarGridSpec(
            num_scalar_prefetch=1,                               # idx -> SMEM
            grid=(v128 // tile_v,),
            in_specs=[
                pl.BlockSpec(memory_space=pl.ANY),               # embedding stays in HBM
                pl.BlockSpec((tile_v, E), lambda j, idx_ref: (j, 0)),
            ],
            out_specs=pl.BlockSpec((B, tile_v), lambda j, idx_ref: (0, j)),
            scratch_shapes=[
                pltpu.VMEM((B, E), jnp.float32),                 # resident x_mean
                pltpu.VMEM((twoC, B, E), jnp.float32),           # gathered rows
                pltpu.SemaphoreType.DMA((twoC,)),                # per-context-slot sems
            ],
        ),
        # Fused variant: the gather/init runs only at program_id==0, so the
        # grid must stay sequential on one core ("arbitrary").  'parallel' is
        # measured ~no-op on single-TC v5e/v6e anyway.
        compiler_params=pltpu.CompilerParams(
            dimension_semantics=("arbitrary",)),
    )(idx, emb_w, lin_w_p)

    return out[:, :V] if v128 != V else out


def cbow_reference(idx, emb_w, lin_w):
    norm = jnp.linalg.norm(emb_w, axis=-1, keepdims=True)
    w = jnp.where(norm > MAX_NORM, MAX_NORM * emb_w / (norm + 1e-7), emb_w)
    x = w[idx]                 # (B, 2C, E)
    x = x.mean(axis=1)         # (B, E)
    return x @ lin_w.T         # (B, V)


if __name__ == "__main__":
    vocab_size = 1024
    embed_dim = 128
    batch_size = 8
    context_size = 4           # input is (batch, 2 * context_size)

    key = jax.random.PRNGKey(0)
    k_emb, k_lin, k_idx = jax.random.split(key, 3)

    # nn.Embedding default init: N(0, 1)  (rows have norm >> 1 -> renorm path exercised)
    emb_w = jax.random.normal(k_emb, (vocab_size, embed_dim), dtype=jnp.float32)
    # nn.Linear default init: U(-1/sqrt(in), 1/sqrt(in)), bias=False
    bound = 1.0 / (embed_dim ** 0.5)
    lin_w = jax.random.uniform(k_lin, (vocab_size, embed_dim),
                               minval=-bound, maxval=bound, dtype=jnp.float32)

    idx = jax.random.randint(k_idx, (batch_size, 2 * context_size),
                             0, vocab_size, dtype=jnp.int32)

    out = cbow_forward(idx, emb_w, lin_w, tile_v=512)
    out = jax.block_until_ready(out)

    ref = cbow_reference(idx, emb_w, lin_w)
    assert out.shape == (batch_size, vocab_size)
    assert jnp.allclose(out, ref, atol=1e-5, rtol=1e-5), "mismatch vs reference"

    print("KERNEL_OK")
</pallas_src>

<mosaic_0001>
module attributes {stable_mosaic.version = 11 : i64} {
  func.func @_cbow_fused_kernel(%arg0: i32, %arg1: memref<8x8xi32, #tpu.memory_space<smem>>, %arg2: memref<1024x128xf32, #tpu.memory_space<any>>, %arg3: memref<512x128xf32, #tpu.memory_space<vmem>>, %arg4: memref<8x512xf32, #tpu.memory_space<vmem>>, %arg5: memref<8x128xf32, #tpu.memory_space<vmem>>, %arg6: memref<8x8x128xf32, #tpu.memory_space<vmem>>, %arg7: memref<8x!tpu.dma_semaphore, #tpu.memory_space<semaphore_mem>>) attributes {dimension_semantics = [#tpu.dimension_semantics<arbitrary>], iteration_bounds = array<i64: 2>, scalar_prefetch = 1 : i64, scratch_operands = 3 : i64, tpu.core_type = #tpu.core_type<tc>, window_params = [{}, {transform_indices = @transform_1, window_bounds = array<i64: 512, 128>}, {transform_indices = @transform_2, window_bounds = array<i64: 8, 512>}]} {
    %c0_i32 = arith.constant 0 : i32
    %0 = arith.cmpi eq, %arg0, %c0_i32 : i32
    %1 = arith.extui %0 : i1 to i32
    %c0_i32_0 = arith.constant 0 : i32
    %2 = arith.cmpi ne, %1, %c0_i32_0 : i32
    scf.if %2 {
      %c0_6 = arith.constant 0 : index
      %c0_7 = arith.constant 0 : index
      %7 = memref.load %arg1[%c0_6, %c0_7] : memref<8x8xi32, #tpu.memory_space<smem>>
      %c0_i32_8 = arith.constant 0 : i32
      %c0_i32_9 = arith.constant 0 : i32
      %c0_i32_10 = arith.constant 0 : i32
      %8 = tpu.memref_slice %arg2[%7, %c0_i32_10] : memref<1024x128xf32, #tpu.memory_space<any>> -> memref<1x128xf32, #tpu.memory_space<any>>
      %c0_i32_11 = arith.constant 0 : i32
      %c0_i32_12 = arith.constant 0 : i32
      %9 = tpu.memref_slice %arg6[%c0_i32_8, %c0_i32_11, %c0_i32_12] : memref<8x8x128xf32, #tpu.memory_space<vmem>> -> memref<1x1x128xf32, #tpu.memory_space<vmem>>
      %10 = tpu.memref_squeeze %9 : memref<1x1x128xf32, #tpu.memory_space<vmem>> -> memref<1x128xf32, #tpu.memory_space<vmem>>
      %11 = tpu.memref_slice %arg7[%c0_i32_9] : memref<8x!tpu.dma_semaphore, #tpu.memory_space<semaphore_mem>> -> memref<1x!tpu.dma_semaphore, #tpu.memory_space<semaphore_mem>>
      %12 = tpu.memref_squeeze %11 : memref<1x!tpu.dma_semaphore, #tpu.memory_space<semaphore_mem>> -> memref<!tpu.dma_semaphore, #tpu.memory_space<semaphore_mem>>
      tpu.enqueue_dma source(%8 : memref<1x128xf32, #tpu.memory_space<any>>) target(%10 : memref<1x128xf32, #tpu.memory_space<vmem>>) target_semaphore(%12 : memref<!tpu.dma_semaphore, #tpu.memory_space<semaphore_mem>>)
      %c0_13 = arith.constant 0 : index
      %c1 = arith.constant 1 : index
      %13 = memref.load %arg1[%c0_13, %c1] : memref<8x8xi32, #tpu.memory_space<smem>>
      %c1_i32 = arith.constant 1 : i32
      %c1_i32_14 = arith.constant 1 : i32
      %c0_i32_15 = arith.constant 0 : i32
      %14 = tpu.memref_slice %arg2[%13, %c0_i32_15] : memref<1024x128xf32, #tpu.memory_space<any>> -> memref<1x128xf32, #tpu.memory_space<any>>
      %c0_i32_16 = arith.constant 0 : i32
      %c0_i32_17 = arith.constant 0 : i32
      %15 = tpu.memref_slice %arg6[%c1_i32, %c0_i32_16, %c0_i32_17] : memref<8x8x128xf32, #tpu.memory_space<vmem>> -> memref<1x1x128xf32, #tpu.memory_space<vmem>>
      %16 = tpu.memref_squeeze %15 : memref<1x1x128xf32, #tpu.memory_space<vmem>> -> memref<1x128xf32, #tpu.memory_space<vmem>>
      %17 = tpu.memref_slice %arg7[%c1_i32_14] : memref<8x!tpu.dma_semaphore, #tpu.memory_space<semaphore_mem>> -> memref<1x!tpu.dma_semaphore, #tpu.memory_space<semaphore_mem>>
      %18 = tpu.memref_squeeze %17 : memref<1x!tpu.dma_semaphore, #tpu.memory_space<semaphore_mem>> -> memref<!tpu.dma_semaphore, #tpu.memory_space<semaphore_mem>>
      tpu.enqueue_dma source(%14 : memref<1x128xf32, #tpu.memory_space<any>>) target(%16 : memref<1x128xf32, #tpu.memory_space<vmem>>) target_semaphore(%18 : memref<!tpu.dma_semaphore, #tpu.memory_space<semaphore_mem>>)
      %c0_18 = arith.constant 0 : index
      %c2 = arith.constant 2 : index
      %19 = memref.load %arg1[%c0_18, %c2] : memref<8x8xi32, #tpu.memory_space<smem>>
      %c2_i32 = arith.constant 2 : i32
      %c2_i32_19 = arith.constant 2 : i32
      %c0_i32_20 = arith.constant 0 : i32
      %20 = tpu.memref_slice %arg2[%19, %c0_i32_20] : memref<1024x128xf32, #tpu.memory_space<any>> -> memref<1x128xf32, #tpu.memory_space<any>>
      %c0_i32_21 = arith.constant 0 : i32
      %c0_i32_22 = arith.constant 0 : i32
      %21 = tpu.memref_slice %arg6[%c2_i32, %c0_i32_21, %c0_i32_22] : memref<8x8x128xf32, #tpu.memory_space<vmem>> -> memref<1x1x128xf32, #tpu.memory_space<vmem>>
      %22 = tpu.memref_squeeze %21 : memref<1x1x128xf32, #tpu.memory_space<vmem>> -> memref<1x128xf32, #tpu.memory_space<vmem>>
      %23 = tpu.memref_slice %arg7[%c2_i32_19] : memref<8x!tpu.dma_semaphore, #tpu.memory_space<semaphore_mem>> -> memref<1x!tpu.dma_semaphore, #tpu.memory_space<semaphore_mem>>
      %24 = tpu.memref_squeeze %23 : memref<1x!tpu.dma_semaphore, #tpu.memory_space<semaphore_mem>> -> memref<!tpu.dma_semaphore, #tpu.memory_space<semaphore_mem>>
      tpu.enqueue_dma source(%20 : memref<1x128xf32, #tpu.memory_space<any>>) target(%22 : memref<1x128xf32, #tpu.memory_space<vmem>>) target_semaphore(%24 : memref<!tpu.dma_semaphore, #tpu.memory_space<semaphore_mem>>)
      %c0_23 = arith.constant 0 : index
      %c3 = arith.constant 3 : index
      %25 = memref.load %arg1[%c0_23, %c3] : memref<8x8xi32, #tpu.memory_space<smem>>
      %c3_i32 = arith.constant 3 : i32
      %c3_i32_24 = arith.constant 3 : i32
      %c0_i32_25 = arith.constant 0 : i32
      %26 = tpu.memref_slice %arg2[%25, %c0_i32_25] : memref<1024x128xf32, #tpu.memory_space<any>> -> memref<1x128xf32, #tpu.memory_space<any>>
      %c0_i32_26 = arith.constant 0 : i32
      %c0_i32_27 = arith.constant 0 : i32
      %27 = tpu.memref_slice %arg6[%c3_i32, %c0_i32_26, %c0_i32_27] : memref<8x8x128xf32, #tpu.memory_space<vmem>> -> memref<1x1x128xf32, #tpu.memory_space<vmem>>
      %28 = tpu.memref_squeeze %27 : memref<1x1x128xf32, #tpu.memory_space<vmem>> -> memref<1x128xf32, #tpu.memory_space<vmem>>
      %29 = tpu.memref_slice %arg7[%c3_i32_24] : memref<8x!tpu.dma_semaphore, #tpu.memory_space<semaphore_mem>> -> memref<1x!tpu.dma_semaphore, #tpu.memory_space<semaphore_mem>>
      %30 = tpu.memref_squeeze %29 : memref<1x!tpu.dma_semaphore, #tpu.memory_space<semaphore_mem>> -> memref<!tpu.dma_semaphore, #tpu.memory_space<semaphore_mem>>
      tpu.enqueue_dma source(%26 : memref<1x128xf32, #tpu.memory_space<any>>) target(%28 : memref<1x128xf32, #tpu.memory_space<vmem>>) target_semaphore(%30 : memref<!tpu.dma_semaphore, #tpu.memory_space<semaphore_mem>>)
      %c0_28 = arith.constant 0 : index
      %c4 = arith.constant 4 : index
      %31 = memref.load %arg1[%c0_28, %c4] : memref<8x8xi32, #tpu.memory_space<smem>>
      %c4_i32 = arith.constant 4 : i32
      %c4_i32_29 = arith.constant 4 : i32
      %c0_i32_30 = arith.constant 0 : i32
      %32 = tpu.memref_slice %arg2[%31, %c0_i32_30] : memref<1024x128xf32, #tpu.memory_space<any>> -> memref<1x128xf32, #tpu.memory_space<any>>
      %c0_i32_31 = arith.constant 0 : i32
      %c0_i32_32 = arith.constant 0 : i32
      %33 = tpu.memref_slice %arg6[%c4_i32, %c0_i32_31, %c0_i32_32] : memref<8x8x128xf32, #tpu.memory_space<vmem>> -> memref<1x1x128xf32, #tpu.memory_space<vmem>>
      %34 = tpu.memref_squeeze %33 : memref<1x1x128xf32, #tpu.memory_space<vmem>> -> memref<1x128xf32, #tpu.memory_space<vmem>>
      %35 = tpu.memref_slice %arg7[%c4_i32_29] : memref<8x!tpu.dma_semaphore, #tpu.memory_space<semaphore_mem>> -> memref<1x!tpu.dma_semaphore, #tpu.memory_space<semaphore_mem>>
      %36 = tpu.memref_squeeze %35 : memref<1x!tpu.dma_semaphore, #tpu.memory_space<semaphore_mem>> -> memref<!tpu.dma_semaphore, #tpu.memory_space<semaphore_mem>>
      tpu.enqueue_dma source(%32 : memref<1x128xf32, #tpu.memory_space<any>>) target(%34 : memref<1x128xf32, #tpu.memory_space<vmem>>) target_semaphore(%36 : memref<!tpu.dma_semaphore, #tpu.memory_space<semaphore_mem>>)
      %c0_33 = arith.constant 0 : index
      %c5 = arith.constant 5 : index
      %37 = memref.load %arg1[%c0_33, %c5] : memref<8x8xi32, #tpu.memory_space<smem>>
      %c5_i32 = arith.constant 5 : i32
      %c5_i32_34 = arith.constant 5 : i32
      %c0_i32_35 = arith.constant 0 : i32
      %38 = tpu.memref_slice %arg2[%37, %c0_i32_35] : memref<1024x128xf32, #tpu.memory_space<any>> -> memref<1x128xf32, #tpu.memory_space<any>>
      %c0_i32_36 = arith.constant 0 : i32
      %c0_i32_37 = arith.constant 0 : i32
      %39 = tpu.memref_slice %arg6[%c5_i32, %c0_i32_36, %c0_i32_37] : memref<8x8x128xf32, #tpu.memory_space<vmem>> -> memref<1x1x128xf32, #tpu.memory_space<vmem>>
      %40 = tpu.memref_squeeze %39 : memref<1x1x128xf32, #tpu.memory_space<vmem>> -> memref<1x128xf32, #tpu.memory_space<vmem>>
      %41 = tpu.memref_slice %arg7[%c5_i32_34] : memref<8x!tpu.dma_semaphore, #tpu.memory_space<semaphore_mem>> -> memref<1x!tpu.dma_semaphore, #tpu.memory_space<semaphore_mem>>
      %42 = tpu.memref_squeeze %41 : memref<1x!tpu.dma_semaphore, #tpu.memory_space<semaphore_mem>> -> memref<!tpu.dma_semaphore, #tpu.memory_space<semaphore_mem>>
      tpu.enqueue_dma source(%38 : memref<1x128xf32, #tpu.memory_space<any>>) target(%40 : memref<1x128xf32, #tpu.memory_space<vmem>>) target_semaphore(%42 : memref<!tpu.dma_semaphore, #tpu.memory_space<semaphore_mem>>)
      %c0_38 = arith.constant 0 : index
      %c6 = arith.constant 6 : index
      %43 = memref.load %arg1[%c0_38, %c6] : memref<8x8xi32, #tpu.memory_space<smem>>
      %c6_i32 = arith.constant 6 : i32
      %c6_i32_39 = arith.constant 6 : i32
      %c0_i32_40 = arith.constant 0 : i32
      %44 = tpu.memref_slice %arg2[%43, %c0_i32_40] : memref<1024x128xf32, #tpu.memory_space<any>> -> memref<1x128xf32, #tpu.memory_space<any>>
      %c0_i32_41 = arith.constant 0 : i32
      %c0_i32_42 = arith.constant 0 : i32
      %45 = tpu.memref_slice %arg6[%c6_i32, %c0_i32_41, %c0_i32_42] : memref<8x8x128xf32, #tpu.memory_space<vmem>> -> memref<1x1x128xf32, #tpu.memory_space<vmem>>
      %46 = tpu.memref_squeeze %45 : memref<1x1x128xf32, #tpu.memory_space<vmem>> -> memref<1x128xf32, #tpu.memory_space<vmem>>
      %47 = tpu.memref_slice %arg7[%c6_i32_39] : memref<8x!tpu.dma_semaphore, #tpu.memory_space<semaphore_mem>> -> memref<1x!tpu.dma_semaphore, #tpu.memory_space<semaphore_mem>>
      %48 = tpu.memref_squeeze %47 : memref<1x!tpu.dma_semaphore, #tpu.memory_space<semaphore_mem>> -> memref<!tpu.dma_semaphore, #tpu.memory_space<semaphore_mem>>
      tpu.enqueue_dma source(%44 : memref<1x128xf32, #tpu.memory_space<any>>) target(%46 : memref<1x128xf32, #tpu.memory_space<vmem>>) target_semaphore(%48 : memref<!tpu.dma_semaphore, #tpu.memory_space<semaphore_mem>>)
      %c0_43 = arith.constant 0 : index
      %c7 = arith.constant 7 : index
      %49 = memref.load %arg1[%c0_43, %c7] : memref<8x8xi32, #tpu.memory_space<smem>>
      %c7_i32 = arith.constant 7 : i32
      %c7_i32_44 = arith.constant 7 : i32
      %c0_i32_45 = arith.constant 0 : i32
      %50 = tpu.memref_slice %arg2[%49, %c0_i32_45] : memref<1024x128xf32, #tpu.memory_space<any>> -> memref<1x128xf32, #tpu.memory_space<any>>
      %c0_i32_46 = arith.constant 0 : i32
      %c0_i32_47 = arith.constant 0 : i32
      %51 = tpu.memref_slice %arg6[%c7_i32, %c0_i32_46, %c0_i32_47] : memref<8x8x128xf32, #tpu.memory_space<vmem>> -> memref<1x1x128xf32, #tpu.memory_space<vmem>>
      %52 = tpu.memref_squeeze %51 : memref<1x1x128xf32, #tpu.memory_space<vmem>> -> memref<1x128xf32, #tpu.memory_space<vmem>>
      %53 = tpu.memref_slice %arg7[%c7_i32_44] : memref<8x!tpu.dma_semaphore, #tpu.memory_space<semaphore_mem>> -> memref<1x!tpu.dma_semaphore, #tpu.memory_space<semaphore_mem>>
      %54 = tpu.memref_squeeze %53 : memref<1x!tpu.dma_semaphore, #tpu.memory_space<semaphore_mem>> -> memref<!tpu.dma_semaphore, #tpu.memory_space<semaphore_mem>>
      tpu.enqueue_dma source(%50 : memref<1x128xf32, #tpu.memory_space<any>>) target(%52 : memref<1x128xf32, #tpu.memory_space<vmem>>) target_semaphore(%54 : memref<!tpu.dma_semaphore, #tpu.memory_space<semaphore_mem>>)
      %c1_48 = arith.constant 1 : index
      %c0_49 = arith.constant 0 : index
      %55 = memref.load %arg1[%c1_48, %c0_49] : memref<8x8xi32, #tpu.memory_space<smem>>
      %c0_i32_50 = arith.constant 0 : i32
      %c0_i32_51 = arith.constant 0 : i32
      %c0_i32_52 = arith.constant 0 : i32
      %56 = tpu.memref_slice %arg2[%55, %c0_i32_52] : memref<1024x128xf32, #tpu.memory_space<any>> -> memref<1x128xf32, #tpu.memory_space<any>>
      %c1_i32_53 = arith.constant 1 : i32
      %c0_i32_54 = arith.constant 0 : i32
      %57 = tpu.memref_slice %arg6[%c0_i32_50, %c1_i32_53, %c0_i32_54] : memref<8x8x128xf32, #tpu.memory_space<vmem>> -> memref<1x1x128xf32, #tpu.memory_space<vmem>>
      %58 = tpu.memref_squeeze %57 : memref<1x1x128xf32, #tpu.memory_space<vmem>> -> memref<1x128xf32, #tpu.memory_space<vmem>>
      %59 = tpu.memref_slice %arg7[%c0_i32_51] : memref<8x!tpu.dma_semaphore, #tpu.memory_space<semaphore_mem>> -> memref<1x!tpu.dma_semaphore, #tpu.memory_space<semaphore_mem>>
      %60 = tpu.memref_squeeze %59 : memref<1x!tpu.dma_semaphore, #tpu.memory_space<semaphore_mem>> -> memref<!tpu.dma_semaphore, #tpu.memory_space<semaphore_mem>>
      tpu.enqueue_dma source(%56 : memref<1x128xf32, #tpu.memory_space<any>>) target(%58 : memref<1x128xf32, #tpu.memory_space<vmem>>) target_semaphore(%60 : memref<!tpu.dma_semaphore, #tpu.memory_space<semaphore_mem>>)
      %c1_55 = arith.constant 1 : index
      %c1_56 = arith.constant 1 : index
      %61 = memref.load %arg1[%c1_55, %c1_56] : memref<8x8xi32, #tpu.memory_space<smem>>
      %c1_i32_57 = arith.constant 1 : i32
      %c1_i32_58 = arith.constant 1 : i32
      %c0_i32_59 = arith.constant 0 : i32
      %62 = tpu.memref_slice %arg2[%61, %c0_i32_59] : memref<1024x128xf32, #tpu.memory_space<any>> -> memref<1x128xf32, #tpu.memory_space<any>>
      %c1_i32_60 = arith.constant 1 : i32
      %c0_i32_61 = arith.constant 0 : i32
      %63 = tpu.memref_slice %arg6[%c1_i32_57, %c1_i32_60, %c0_i32_61] : memref<8x8x128xf32, #tpu.memory_space<vmem>> -> memref<1x1x128xf32, #tpu.memory_space<vmem>>
      %64 = tpu.memref_squeeze %63 : memref<1x1x128xf32, #tpu.memory_space<vmem>> -> memref<1x128xf32, #tpu.memory_space<vmem>>
      %65 = tpu.memref_slice %arg7[%c1_i32_58] : memref<8x!tpu.dma_semaphore, #tpu.memory_space<semaphore_mem>> -> memref<1x!tpu.dma_semaphore, #tpu.memory_space<semaphore_mem>>
      %66 = tpu.memref_squeeze %65 : memref<1x!tpu.dma_semaphore, #tpu.memory_space<semaphore_mem>> -> memref<!tpu.dma_semaphore, #tpu.memory_space<semaphore_mem>>
      tpu.enqueue_dma source(%62 : memref<1x128xf32, #tpu.memory_space<any>>) target(%64 : memref<1x128xf32, #tpu.memory_space<vmem>>) target_semaphore(%66 : memref<!tpu.dma_semaphore, #tpu.memory_space<semaphore_mem>>)
      %c1_62 = arith.constant 1 : index
      %c2_63 = arith.constant 2 : index
      %67 = memref.load %arg1[%c1_62, %c2_63] : memref<8x8xi32, #tpu.memory_space<smem>>
      %c2_i32_64 = arith.constant 2 : i32
      %c2_i32_65 = arith.constant 2 : i32
      %c0_i32_66 = arith.constant 0 : i32
      %68 = tpu.memref_slice %arg2[%67, %c0_i32_66] : memref<1024x128xf32, #tpu.memory_space<any>> -> memref<1x128xf32, #tpu.memory_space<any>>
      %c1_i32_67 = arith.constant 1 : i32
      %c0_i32_68 = arith.constant 0 : i32
      %69 = tpu.memref_slice %arg6[%c2_i32_64, %c1_i32_67, %c0_i32_68] : memref<8x8x128xf32, #tpu.memory_space<vmem>> -> memref<1x1x128xf32, #tpu.memory_space<vmem>>
      %70 = tpu.memref_squeeze %69 : memref<1x1x128xf32, #tpu.memory_space<vmem>> -> memref<1x128xf32, #tpu.memory_space<vmem>>
      %71 = tpu.memref_slice %arg7[%c2_i32_65] : memref<8x!tpu.dma_semaphore, #tpu.memory_space<semaphore_mem>> -> memref<1x!tpu.dma_semaphore, #tpu.memory_space<semaphore_mem>>
      %72 = tpu.memref_squeeze %71 : memref<1x!tpu.dma_semaphore, #tpu.memory_space<semaphore_mem>> -> memref<!tpu.dma_semaphore, #tpu.memory_space<semaphore_mem>>
      tpu.enqueue_dma source(%68 : memref<1x128xf32, #tpu.memory_space<any>>) target(%70 : memref<1x128xf32, #tpu.memory_space<vmem>>) target_semaphore(%72 : memref<!tpu.dma_semaphore, #tpu.memory_space<semaphore_mem>>)
      %c1_69 = arith.constant 1 : index
      %c3_70 = arith.constant 3 : index
      %73 = memref.load %arg1[%c1_69, %c3_70] : memref<8x8xi32, #tpu.memory_space<smem>>
      %c3_i32_71 = arith.constant 3 : i32
      %c3_i32_72 = arith.constant 3 : i32
      %c0_i32_73 = arith.constant 0 : i32
      %74 = tpu.memref_slice %arg2[%73, %c0_i32_73] : memref<1024x128xf32, #tpu.memory_space<any>> -> memref<1x128xf32, #tpu.memory_space<any>>
      %c1_i32_74 = arith.constant 1 : i32
      %c0_i32_75 = arith.constant 0 : i32
      %75 = tpu.memref_slice %arg6[%c3_i32_71, %c1_i32_74, %c0_i32_75] : memref<8x8x128xf32, #tpu.memory_space<vmem>> -> memref<1x1x128xf32, #tpu.memory_space<vmem>>
      %76 = tpu.memref_squeeze %75 : memref<1x1x128xf32, #tpu.memory_space<vmem>> -> memref<1x128xf32, #tpu.memory_space<vmem>>
      %77 = tpu.memref_slice %arg7[%c3_i32_72] : memref<8x!tpu.dma_semaphore, #tpu.memory_space<semaphore_mem>> -> memref<1x!tpu.dma_semaphore, #tpu.memory_space<semaphore_mem>>
      %78 = tpu.memref_squeeze %77 : memref<1x!tpu.dma_semaphore, #tpu.memory_space<semaphore_mem>> -> memref<!tpu.dma_semaphore, #tpu.memory_space<semaphore_mem>>
      tpu.enqueue_dma source(%74 : memref<1x128xf32, #tpu.memory_space<any>>) target(%76 : memref<1x128xf32, #tpu.memory_space<vmem>>) target_semaphore(%78 : memref<!tpu.dma_semaphore, #tpu.memory_space<semaphore_mem>>)
      %c1_76 = arith.constant 1 : index
      %c4_77 = arith.constant 4 : index
      %79 = memref.load %arg1[%c1_76, %c4_77] : memref<8x8xi32, #tpu.memory_space<smem>>
      %c4_i32_78 = arith.constant 4 : i32
      %c4_i32_79 = arith.constant 4 : i32
      %c0_i32_80 = arith.constant 0 : i32
      %80 = tpu.memref_slice %arg2[%79, %c0_i32_80] : memref<1024x128xf32, #tpu.memory_space<any>> -> memref<1x128xf32, #tpu.memory_space<any>>
      %c1_i32_81 = arith.constant 1 : i32
      %c0_i32_82 = arith.constant 0 : i32
      %81 = tpu.memref_slice %arg6[%c4_i32_78, %c1_i32_81, %c0_i32_82] : memref<8x8x128xf32, #tpu.memory_space<vmem>> -> memref<1x1x128xf32, #tpu.memory_space<vmem>>
      %82 = tpu.memref_squeeze %81 : memref<1x1x128xf32, #tpu.memory_space<vmem>> -> memref<1x128xf32, #tpu.memory_space<vmem>>
      %83 = tpu.memref_slice %arg7[%c4_i32_79] : memref<8x!tpu.dma_semaphore, #tpu.memory_space<semaphore_mem>> -> memref<1x!tpu.dma_semaphore, #tpu.memory_space<semaphore_mem>>
      %84 = tpu.memref_squeeze %83 : memref<1x!tpu.dma_semaphore, #tpu.memory_space<semaphore_mem>> -> memref<!tpu.dma_semaphore, #tpu.memory_space<semaphore_mem>>
      tpu.enqueue_dma source(%80 : memref<1x128xf32, #tpu.memory_space<any>>) target(%82 : memref<1x128xf32, #tpu.memory_space<vmem>>) target_semaphore(%84 : memref<!tpu.dma_semaphore, #tpu.memory_space<semaphore_mem>>)
      %c1_83 = arith.constant 1 : index
      %c5_84 = arith.constant 5 : index
      %85 = memref.load %arg1[%c1_83, %c5_84] : memref<8x8xi32, #tpu.memory_space<smem>>
      %c5_i32_85 = arith.constant 5 : i32
      %c5_i32_86 = arith.constant 5 : i32
      %c0_i32_87 = arith.constant 0 : i32
      %86 = tpu.memref_slice %arg2[%85, %c0_i32_87] : memref<1024x128xf32, #tpu.memory_space<any>> -> memref<1x128xf32, #tpu.memory_space<any>>
      %c1_i32_88 = arith.constant 1 : i32
      %c0_i32_89 = arith.constant 0 : i32
      %87 = tpu.memref_slice %arg6[%c5_i32_85, %c1_i32_88, %c0_i32_89] : memref<8x8x128xf32, #tpu.memory_space<vmem>> -> memref<1x1x128xf32, #tpu.memory_space<vmem>>
      %88 = tpu.memref_squeeze %87 : memref<1x1x128xf32, #tpu.memory_space<vmem>> -> memref<1x128xf32, #tpu.memory_space<vmem>>
      %89 = tpu.memref_slice %arg7[%c5_i32_86] : memref<8x!tpu.dma_semaphore, #tpu.memory_space<semaphore_mem>> -> memref<1x!tpu.dma_semaphore, #tpu.memory_space<semaphore_mem>>
      %90 = tpu.memref_squeeze %89 : memref<1x!tpu.dma_semaphore, #tpu.memory_space<semaphore_mem>> -> memref<!tpu.dma_semaphore, #tpu.memory_space<semaphore_mem>>
      tpu.enqueue_dma source(%86 : memref<1x128xf32, #tpu.memory_space<any>>) target(%88 : memref<1x128xf32, #tpu.memory_space<vmem>>) target_semaphore(%90 : memref<!tpu.dma_semaphore, #tpu.memory_space<semaphore_mem>>)
      %c1_90 = arith.constant 1 : index
      %c6_91 = arith.constant 6 : index
      %91 = memref.load %arg1[%c1_90, %c6_91] : memref<8x8xi32, #tpu.memory_space<smem>>
      %c6_i32_92 = arith.constant 6 : i32
      %c6_i32_93 = arith.constant 6 : i32
      %c0_i32_94 = arith.constant 0 : i32
      %92 = tpu.memref_slice %arg2[%91, %c0_i32_94] : memref<1024x128xf32, #tpu.memory_space<any>> -> memref<1x128xf32, #tpu.memory_space<any>>
      %c1_i32_95 = arith.constant 1 : i32
      %c0_i32_96 = arith.constant 0 : i32
      %93 = tpu.memref_slice %arg6[%c6_i32_92, %c1_i32_95, %c0_i32_96] : memref<8x8x128xf32, #tpu.memory_space<vmem>> -> memref<1x1x128xf32, #tpu.memory_space<vmem>>
      %94 = tpu.memref_squeeze %93 : memref<1x1x128xf32, #tpu.memory_space<vmem>> -> memref<1x128xf32, #tpu.memory_space<vmem>>
      %95 = tpu.memref_slice %arg7[%c6_i32_93] : memref<8x!tpu.dma_semaphore, #tpu.memory_space<semaphore_mem>> -> memref<1x!tpu.dma_semaphore, #tpu.memory_space<semaphore_mem>>
      %96 = tpu.memref_squeeze %95 : memref<1x!tpu.dma_semaphore, #tpu.memory_space<semaphore_mem>> -> memref<!tpu.dma_semaphore, #tpu.memory_space<semaphore_mem>>
      tpu.enqueue_dma source(%92 : memref<1x128xf32, #tpu.memory_space<any>>) target(%94 : memref<1x128xf32, #tpu.memory_space<vmem>>) target_semaphore(%96 : memref<!tpu.dma_semaphore, #tpu.memory_space<semaphore_mem>>)
      %c1_97 = arith.constant 1 : index
      %c7_98 = arith.constant 7 : index
      %97 = memref.load %arg1[%c1_97, %c7_98] : memref<8x8xi32, #tpu.memory_space<smem>>
      %c7_i32_99 = arith.constant 7 : i32
      %c7_i32_100 = arith.constant 7 : i32
      %c0_i32_101 = arith.constant 0 : i32
      %98 = tpu.memref_slice %arg2[%97, %c0_i32_101] : memref<1024x128xf32, #tpu.memory_space<any>> -> memref<1x128xf32, #tpu.memory_space<any>>
      %c1_i32_102 = arith.constant 1 : i32
      %c0_i32_103 = arith.constant 0 : i32
      %99 = tpu.memref_slice %arg6[%c7_i32_99, %c1_i32_102, %c0_i32_103] : memref<8x8x128xf32, #tpu.memory_space<vmem>> -> memref<1x1x128xf32, #tpu.memory_space<vmem>>
      %100 = tpu.memref_squeeze %99 : memref<1x1x128xf32, #tpu.memory_space<vmem>> -> memref<1x128xf32, #tpu.memory_space<vmem>>
      %101 = tpu.memref_slice %arg7[%c7_i32_100] : memref<8x!tpu.dma_semaphore, #tpu.memory_space<semaphore_mem>> -> memref<1x!tpu.dma_semaphore, #tpu.memory_space<semaphore_mem>>
      %102 = tpu.memref_squeeze %101 : memref<1x!tpu.dma_semaphore, #tpu.memory_space<semaphore_mem>> -> memref<!tpu.dma_semaphore, #tpu.memory_space<semaphore_mem>>
      tpu.enqueue_dma source(%98 : memref<1x128xf32, #tpu.memory_space<any>>) target(%100 : memref<1x128xf32, #tpu.memory_space<vmem>>) target_semaphore(%102 : memref<!tpu.dma_semaphore, #tpu.memory_space<semaphore_mem>>)
      %c2_104 = arith.constant 2 : index
      %c0_105 = arith.constant 0 : index
      %103 = memref.load %arg1[%c2_104, %c0_105] : memref<8x8xi32, #tpu.memory_space<smem>>
      %c0_i32_106 = arith.constant 0 : i32
      %c0_i32_107 = arith.constant 0 : i32
      %c0_i32_108 = arith.constant 0 : i32
      %104 = tpu.memref_slice %arg2[%103, %c0_i32_108] : memref<1024x128xf32, #tpu.memory_space<any>> -> memref<1x128xf32, #tpu.memory_space<any>>
      %c2_i32_109 = arith.constant 2 : i32
      %c0_i32_110 = arith.constant 0 : i32
      %105 = tpu.memref_slice %arg6[%c0_i32_106, %c2_i32_109, %c0_i32_110] : memref<8x8x128xf32, #tpu.memory_space<vmem>> -> memref<1x1x128xf32, #tpu.memory_space<vmem>>
      %106 = tpu.memref_squeeze %105 : memref<1x1x128xf32, #tpu.memory_space<vmem>> -> memref<1x128xf32, #tpu.memory_space<vmem>>
      %107 = tpu.memref_slice %arg7[%c0_i32_107] : memref<8x!tpu.dma_semaphore, #tpu.memory_space<semaphore_mem>> -> memref<1x!tpu.dma_semaphore, #tpu.memory_space<semaphore_mem>>
      %108 = tpu.memref_squeeze %107 : memref<1x!tpu.dma_semaphore, #tpu.memory_space<semaphore_mem>> -> memref<!tpu.dma_semaphore, #tpu.memory_space<semaphore_mem>>
      tpu.enqueue_dma source(%104 : memref<1x128xf32, #tpu.memory_space<any>>) target(%106 : memref<1x128xf32, #tpu.memory_space<vmem>>) target_semaphore(%108 : memref<!tpu.dma_semaphore, #tpu.memory_space<semaphore_mem>>)
      %c2_111 = arith.constant 2 : index
      %c1_112 = arith.constant 1 : index
      %109 = memref.load %arg1[%c2_111, %c1_112] : memref<8x8xi32, #tpu.memory_space<smem>>
      %c1_i32_113 = arith.constant 1 : i32
      %c1_i32_114 = arith.constant 1 : i32
      %c0_i32_115 = arith.constant 0 : i32
      %110 = tpu.memref_slice %arg2[%109, %c0_i32_115] : memref<1024x128xf32, #tpu.memory_space<any>> -> memref<1x128xf32, #tpu.memory_space<any>>
      %c2_i32_116 = arith.constant 2 : i32
      %c0_i32_117 = arith.constant 0 : i32
      %111 = tpu.memref_slice %arg6[%c1_i32_113, %c2_i32_116, %c0_i32_117] : memref<8x8x128xf32, #tpu.memory_space<vmem>> -> memref<1x1x128xf32, #tpu.memory_space<vmem>>
      %112 = tpu.memref_squeeze %111 : memref<1x1x128xf32, #tpu.memory_space<vmem>> -> memref<1x128xf32, #tpu.memory_space<vmem>>
      %113 = tpu.memref_slice %arg7[%c1_i32_114] : memref<8x!tpu.dma_semaphore, #tpu.memory_space<semaphore_mem>> -> memref<1x!tpu.dma_semaphore, #tpu.memory_space<semaphore_mem>>
      %114 = tpu.memref_squeeze %113 : memref<1x!tpu.dma_semaphore, #tpu.memory_space<semaphore_mem>> -> memref<!tpu.dma_semaphore, #tpu.memory_space<semaphore_mem>>
      tpu.enqueue_dma source(%110 : memref<1x128xf32, #tpu.memory_space<any>>) target(%112 : memref<1x128xf32, #tpu.memory_space<vmem>>) target_semaphore(%114 : memref<!tpu.dma_semaphore, #tpu.memory_space<semaphore_mem>>)
      %c2_118 = arith.constant 2 : index
      %c2_119 = arith.constant 2 : index
      %115 = memref.load %arg1[%c2_118, %c2_119] : memref<8x8xi32, #tpu.memory_space<smem>>
      %c2_i32_120 = arith.constant 2 : i32
      %c2_i32_121 = arith.constant 2 : i32
      %c0_i32_122 = arith.constant 0 : i32
      %116 = tpu.memref_slice %arg2[%115, %c0_i32_122] : memref<1024x128xf32, #tpu.memory_space<any>> -> memref<1x128xf32, #tpu.memory_space<any>>
      %c2_i32_123 = arith.constant 2 : i32
      %c0_i32_124 = arith.constant 0 : i32
      %117 = tpu.memref_slice %arg6[%c2_i32_120, %c2_i32_123, %c0_i32_124] : memref<8x8x128xf32, #tpu.memory_space<vmem>> -> memref<1x1x128xf32, #tpu.memory_space<vmem>>
      %118 = tpu.memref_squeeze %117 : memref<1x1x128xf32, #tpu.memory_space<vmem>> -> memref<1x128xf32, #tpu.memory_space<vmem>>
      %119 = tpu.memref_slice %arg7[%c2_i32_121] : memref<8x!tpu.dma_semaphore, #tpu.memory_space<semaphore_mem>> -> memref<1x!tpu.dma_semaphore, #tpu.memory_space<semaphore_mem>>
      %120 = tpu.memref_squeeze %119 : memref<1x!tpu.dma_semaphore, #tpu.memory_space<semaphore_mem>> -> memref<!tpu.dma_semaphore, #tpu.memory_space<semaphore_mem>>
      tpu.enqueue_dma source(%116 : memref<1x128xf32, #tpu.memory_space<any>>) target(%118 : memref<1x128xf32, #tpu.memory_space<vmem>>) target_semaphore(%120 : memref<!tpu.dma_semaphore, #tpu.memory_space<semaphore_mem>>)
      %c2_125 = arith.constant 2 : index
      %c3_126 = arith.constant 3 : index
      %121 = memref.load %arg1[%c2_125, %c3_126] : memref<8x8xi32, #tpu.memory_space<smem>>
      %c3_i32_127 = arith.constant 3 : i32
      %c3_i32_128 = arith.constant 3 : i32
      %c0_i32_129 = arith.constant 0 : i32
      %122 = tpu.memref_slice %arg2[%121, %c0_i32_129] : memref<1024x128xf32, #tpu.memory_space<any>> -> memref<1x128xf32, #tpu.memory_space<any>>
      %c2_i32_130 = arith.constant 2 : i32
      %c0_i32_131 = arith.constant 0 : i32
      %123 = tpu.memref_slice %arg6[%c3_i32_127, %c2_i32_130, %c0_i32_131] : memref<8x8x128xf32, #tpu.memory_space<vmem>> -> memref<1x1x128xf32, #tpu.memory_space<vmem>>
      %124 = tpu.memref_squeeze %123 : memref<1x1x128xf32, #tpu.memory_space<vmem>> -> memref<1x128xf32, #tpu.memory_space<vmem>>
      %125 = tpu.memref_slice %arg7[%c3_i32_128] : memref<8x!tpu.dma_semaphore, #tpu.memory_space<semaphore_mem>> -> memref<1x!tpu.dma_semaphore, #tpu.memory_space<semaphore_mem>>
      %126 = tpu.memref_squeeze %125 : memref<1x!tpu.dma_semaphore, #tpu.memory_space<semaphore_mem>> -> memref<!tpu.dma_semaphore, #tpu.memory_space<semaphore_mem>>
      tpu.enqueue_dma source(%122 : memref<1x128xf32, #tpu.memory_space<any>>) target(%124 : memref<1x128xf32, #tpu.memory_space<vmem>>) target_semaphore(%126 : memref<!tpu.dma_semaphore, #tpu.memory_space<semaphore_mem>>)
      %c2_132 = arith.constant 2 : index
      %c4_133 = arith.constant 4 : index
      %127 = memref.load %arg1[%c2_132, %c4_133] : memref<8x8xi32, #tpu.memory_space<smem>>
      %c4_i32_134 = arith.constant 4 : i32
      %c4_i32_135 = arith.constant 4 : i32
      %c0_i32_136 = arith.constant 0 : i32
      %128 = tpu.memref_slice %arg2[%127, %c0_i32_136] : memref<1024x128xf32, #tpu.memory_space<any>> -> memref<1x128xf32, #tpu.memory_space<any>>
      %c2_i32_137 = arith.constant 2 : i32
      %c0_i32_138 = arith.constant 0 : i32
      %129 = tpu.memref_slice %arg6[%c4_i32_134, %c2_i32_137, %c0_i32_138] : memref<8x8x128xf32, #tpu.memory_space<vmem>> -> memref<1x1x128xf32, #tpu.memory_space<vmem>>
      %130 = tpu.memref_squeeze %129 : memref<1x1x128xf32, #tpu.memory_space<vmem>> -> memref<1x128xf32, #tpu.memory_space<vmem>>
      %131 = tpu.memref_slice %arg7[%c4_i32_135] : memref<8x!tpu.dma_semaphore, #tpu.memory_space<semaphore_mem>> -> memref<1x!tpu.dma_semaphore, #tpu.memory_space<semaphore_mem>>
      %132 = tpu.memref_squeeze %131 : memref<1x!tpu.dma_semaphore, #tpu.memory_space<semaphore_mem>> -> memref<!tpu.dma_semaphore, #tpu.memory_space<semaphore_mem>>
      tpu.enqueue_dma source(%128 : memref<1x128xf32, #tpu.memory_space<any>>) target(%130 : memref<1x128xf32, #tpu.memory_space<vmem>>) target_semaphore(%132 : memref<!tpu.dma_semaphore, #tpu.memory_space<semaphore_mem>>)
      %c2_139 = arith.constant 2 : index
      %c5_140 = arith.constant 5 : index
      %133 = memref.load %arg1[%c2_139, %c5_140] : memref<8x8xi32, #tpu.memory_space<smem>>
      %c5_i32_141 = arith.constant 5 : i32
      %c5_i32_142 = arith.constant 5 : i32
      %c0_i32_143 = arith.constant 0 : i32
      %134 = tpu.memref_slice %arg2[%133, %c0_i32_143] : memref<1024x128xf32, #tpu.memory_space<any>> -> memref<1x128xf32, #tpu.memory_space<any>>
      %c2_i32_144 = arith.constant 2 : i32
      %c0_i32_145 = arith.constant 0 : i32
      %135 = tpu.memref_slice %arg6[%c5_i32_141, %c2_i32_144, %c0_i32_145] : memref<8x8x128xf32, #tpu.memory_space<vmem>> -> memref<1x1x128xf32, #tpu.memory_space<vmem>>
      %136 = tpu.memref_squeeze %135 : memref<1x1x128xf32, #tpu.memory_space<vmem>> -> memref<1x128xf32, #tpu.memory_space<vmem>>
      %137 = tpu.memref_slice %arg7[%c5_i32_142] : memref<8x!tpu.dma_semaphore, #tpu.memory_space<semaphore_mem>> -> memref<1x!tpu.dma_semaphore, #tpu.memory_space<semaphore_mem>>
      %138 = tpu.memref_squeeze %137 : memref<1x!tpu.dma_semaphore, #tpu.memory_space<semaphore_mem>> -> memref<!tpu.dma_semaphore, #tpu.memory_space<semaphore_mem>>
      tpu.enqueue_dma source(%134 : memref<1x128xf32, #tpu.memory_space<any>>) target(%136 : memref<1x128xf32, #tpu.memory_space<vmem>>) target_semaphore(%138 : memref<!tpu.dma_semaphore, #tpu.memory_space<semaphore_mem>>)
      %c2_146 = arith.constant 2 : index
      %c6_147 = arith.constant 6 : index
      %139 = memref.load %arg1[%c2_146, %c6_147] : memref<8x8xi32, #tpu.memory_space<smem>>
      %c6_i32_148 = arith.constant 6 : i32
      %c6_i32_149 = arith.constant 6 : i32
      %c0_i32_150 = arith.constant 0 : i32
      %140 = tpu.memref_slice %arg2[%139, %c0_i32_150] : memref<1024x128xf32, #tpu.memory_space<any>> -> memref<1x128xf32, #tpu.memory_space<any>>
      %c2_i32_151 = arith.constant 2 : i32
      %c0_i32_152 = arith.constant 0 : i32
      %141 = tpu.memref_slice %arg6[%c6_i32_148, %c2_i32_151, %c0_i32_152] : memref<8x8x128xf32, #tpu.memory_space<vmem>> -> memref<1x1x128xf32, #tpu.memory_space<vmem>>
      %142 = tpu.memref_squeeze %141 : memref<1x1x128xf32, #tpu.memory_space<vmem>> -> memref<1x128xf32, #tpu.memory_space<vmem>>
      %143 = tpu.memref_slice %arg7[%c6_i32_149] : memref<8x!tpu.dma_semaphore, #tpu.memory_space<semaphore_mem>> -> memref<1x!tpu.dma_semaphore, #tpu.memory_space<semaphore_mem>>
      %144 = tpu.memref_squeeze %143 : memref<1x!tpu.dma_semaphore, #tpu.memory_space<semaphore_mem>> -> memref<!tpu.dma_semaphore, #tpu.memory_space<semaphore_mem>>
      tpu.enqueue_dma source(%140 : memref<1x128xf32, #tpu.memory_space<any>>) target(%142 : memref<1x128xf32, #tpu.memory_space<vmem>>) target_semaphore(%144 : memref<!tpu.dma_semaphore, #tpu.memory_space<semaphore_mem>>)
      %c2_153 = arith.constant 2 : index
      %c7_154 = arith.constant 7 : index
      %145 = memref.load %arg1[%c2_153, %c7_154] : memref<8x8xi32, #tpu.memory_space<smem>>
      %c7_i32_155 = arith.constant 7 : i32
      %c7_i32_156 = arith.constant 7 : i32
      %c0_i32_157 = arith.constant 0 : i32
      %146 = tpu.memref_slice %arg2[%145, %c0_i32_157] : memref<1024x128xf32, #tpu.memory_space<any>> -> memref<1x128xf32, #tpu.memory_space<any>>
      %c2_i32_158 = arith.constant 2 : i32
      %c0_i32_159 = arith.constant 0 : i32
      %147 = tpu.memref_slice %arg6[%c7_i32_155, %c2_i32_158, %c0_i32_159] : memref<8x8x128xf32, #tpu.memory_space<vmem>> -> memref<1x1x128xf32, #tpu.memory_space<vmem>>
      %148 = tpu.memref_squeeze %147 : memref<1x1x128xf32, #tpu.memory_space<vmem>> -> memref<1x128xf32, #tpu.memory_space<vmem>>
      %149 = tpu.memref_slice %arg7[%c7_i32_156] : memref<8x!tpu.dma_semaphore, #tpu.memory_space<semaphore_mem>> -> memref<1x!tpu.dma_semaphore, #tpu.memory_space<semaphore_mem>>
      %150 = tpu.memref_squeeze %149 : memref<1x!tpu.dma_semaphore, #tpu.memory_space<semaphore_mem>> -> memref<!tpu.dma_semaphore, #tpu.memory_space<semaphore_mem>>
      tpu.enqueue_dma source(%146 : memref<1x128xf32, #tpu.memory_space<any>>) target(%148 : memref<1x128xf32, #tpu.memory_space<vmem>>) target_semaphore(%150 : memref<!tpu.dma_semaphore, #tpu.memory_space<semaphore_mem>>)
      %c3_160 = arith.constant 3 : index
      %c0_161 = arith.constant 0 : index
      %151 = memref.load %arg1[%c3_160, %c0_161] : memref<8x8xi32, #tpu.memory_space<smem>>
      %c0_i32_162 = arith.constant 0 : i32
      %c0_i32_163 = arith.constant 0 : i32
      %c0_i32_164 = arith.constant 0 : i32
      %152 = tpu.memref_slice %arg2[%151, %c0_i32_164] : memref<1024x128xf32, #tpu.memory_space<any>> -> memref<1x128xf32, #tpu.memory_space<any>>
      %c3_i32_165 = arith.constant 3 : i32
      %c0_i32_166 = arith.constant 0 : i32
      %153 = tpu.memref_slice %arg6[%c0_i32_162, %c3_i32_165, %c0_i32_166] : memref<8x8x128xf32, #tpu.memory_space<vmem>> -> memref<1x1x128xf32, #tpu.memory_space<vmem>>
      %154 = tpu.memref_squeeze %153 : memref<1x1x128xf32, #tpu.memory_space<vmem>> -> memref<1x128xf32, #tpu.memory_space<vmem>>
      %155 = tpu.memref_slice %arg7[%c0_i32_163] : memref<8x!tpu.dma_semaphore, #tpu.memory_space<semaphore_mem>> -> memref<1x!tpu.dma_semaphore, #tpu.memory_space<semaphore_mem>>
      %156 = tpu.memref_squeeze %155 : memref<1x!tpu.dma_semaphore, #tpu.memory_space<semaphore_mem>> -> memref<!tpu.dma_semaphore, #tpu.memory_space<semaphore_mem>>
      tpu.enqueue_dma source(%152 : memref<1x128xf32, #tpu.memory_space<any>>) target(%154 : memref<1x128xf32, #tpu.memory_space<vmem>>) target_semaphore(%156 : memref<!tpu.dma_semaphore, #tpu.memory_space<semaphore_mem>>)
      %c3_167 = arith.constant 3 : index
      %c1_168 = arith.constant 1 : index
      %157 = memref.load %arg1[%c3_167, %c1_168] : memref<8x8xi32, #tpu.memory_space<smem>>
      %c1_i32_169 = arith.constant 1 : i32
      %c1_i32_170 = arith.constant 1 : i32
      %c0_i32_171 = arith.constant 0 : i32
      %158 = tpu.memref_slice %arg2[%157, %c0_i32_171] : memref<1024x128xf32, #tpu.memory_space<any>> -> memref<1x128xf32, #tpu.memory_space<any>>
      %c3_i32_172 = arith.constant 3 : i32
      %c0_i32_173 = arith.constant 0 : i32
      %159 = tpu.memref_slice %arg6[%c1_i32_169, %c3_i32_172, %c0_i32_173] : memref<8x8x128xf32, #tpu.memory_space<vmem>> -> memref<1x1x128xf32, #tpu.memory_space<vmem>>
      %160 = tpu.memref_squeeze %159 : memref<1x1x128xf32, #tpu.memory_space<vmem>> -> memref<1x128xf32, #tpu.memory_space<vmem>>
      %161 = tpu.memref_slice %arg7[%c1_i32_170] : memref<8x!tpu.dma_semaphore, #tpu.memory_space<semaphore_mem>> -> memref<1x!tpu.dma_semaphore, #tpu.memory_space<semaphore_mem>>
      %162 = tpu.memref_squeeze %161 : memref<1x!tpu.dma_semaphore, #tpu.memory_space<semaphore_mem>> -> memref<!tpu.dma_semaphore, #tpu.memory_space<semaphore_mem>>
      tpu.enqueue_dma source(%158 : memref<1x128xf32, #tpu.memory_space<any>>) target(%160 : memref<1x128xf32, #tpu.memory_space<vmem>>) target_semaphore(%162 : memref<!tpu.dma_semaphore, #tpu.memory_space<semaphore_mem>>)
      %c3_174 = arith.constant 3 : index
      %c2_175 = arith.constant 2 : index
      %163 = memref.load %arg1[%c3_174, %c2_175] : memref<8x8xi32, #tpu.memory_space<smem>>
      %c2_i32_176 = arith.constant 2 : i32
      %c2_i32_177 = arith.constant 2 : i32
      %c0_i32_178 = arith.constant 0 : i32
      %164 = tpu.memref_slice %arg2[%163, %c0_i32_178] : memref<1024x128xf32, #tpu.memory_space<any>> -> memref<1x128xf32, #tpu.memory_space<any>>
      %c3_i32_179 = arith.constant 3 : i32
      %c0_i32_180 = arith.constant 0 : i32
      %165 = tpu.memref_slice %arg6[%c2_i32_176, %c3_i32_179, %c0_i32_180] : memref<8x8x128xf32, #tpu.memory_space<vmem>> -> memref<1x1x128xf32, #tpu.memory_space<vmem>>
      %166 = tpu.memref_squeeze %165 : memref<1x1x128xf32, #tpu.memory_space<vmem>> -> memref<1x128xf32, #tpu.memory_space<vmem>>
      %167 = tpu.memref_slice %arg7[%c2_i32_177] : memref<8x!tpu.dma_semaphore, #tpu.memory_space<semaphore_mem>> -> memref<1x!tpu.dma_semaphore, #tpu.memory_space<semaphore_mem>>
      %168 = tpu.memref_squeeze %167 : memref<1x!tpu.dma_semaphore, #tpu.memory_space<semaphore_mem>> -> memref<!tpu.dma_semaphore, #tpu.memory_space<semaphore_mem>>
      tpu.enqueue_dma source(%164 : memref<1x128xf32, #tpu.memory_space<any>>) target(%166 : memref<1x128xf32, #tpu.memory_space<vmem>>) target_semaphore(%168 : memref<!tpu.dma_semaphore, #tpu.memory_space<semaphore_mem>>)
      %c3_181 = arith.constant 3 : index
      %c3_182 = arith.constant 3 : index
      %169 = memref.load %arg1[%c3_181, %c3_182] : memref<8x8xi32, #tpu.memory_space<smem>>
      %c3_i32_183 = arith.constant 3 : i32
      %c3_i32_184 = arith.constant 3 : i32
      %c0_i32_185 = arith.constant 0 : i32
      %170 = tpu.memref_slice %arg2[%169, %c0_i32_185] : memref<1024x128xf32, #tpu.memory_space<any>> -> memref<1x128xf32, #tpu.memory_space<any>>
      %c3_i32_186 = arith.constant 3 : i32
      %c0_i32_187 = arith.constant 0 : i32
      %171 = tpu.memref_slice %arg6[%c3_i32_183, %c3_i32_186, %c0_i32_187] : memref<8x8x128xf32, #tpu.memory_space<vmem>> -> memref<1x1x128xf32, #tpu.memory_space<vmem>>
      %172 = tpu.memref_squeeze %171 : memref<1x1x128xf32, #tpu.memory_space<vmem>> -> memref<1x128xf32, #tpu.memory_space<vmem>>
      %173 = tpu.memref_slice %arg7[%c3_i32_184] : memref<8x!tpu.dma_semaphore, #tpu.memory_space<semaphore_mem>> -> memref<1x!tpu.dma_semaphore, #tpu.memory_space<semaphore_mem>>
      %174 = tpu.memref_squeeze %173 : memref<1x!tpu.dma_semaphore, #tpu.memory_space<semaphore_mem>> -> memref<!tpu.dma_semaphore, #tpu.memory_space<semaphore_mem>>
      tpu.enqueue_dma source(%170 : memref<1x128xf32, #tpu.memory_space<any>>) target(%172 : memref<1x128xf32, #tpu.memory_space<vmem>>) target_semaphore(%174 : memref<!tpu.dma_semaphore, #tpu.memory_space<semaphore_mem>>)
      %c3_188 = arith.constant 3 : index
      %c4_189 = arith.constant 4 : index
      %175 = memref.load %arg1[%c3_188, %c4_189] : memref<8x8xi32, #tpu.memory_space<smem>>
      %c4_i32_190 = arith.constant 4 : i32
      %c4_i32_191 = arith.constant 4 : i32
      %c0_i32_192 = arith.constant 0 : i32
      %176 = tpu.memref_slice %arg2[%175, %c0_i32_192] : memref<1024x128xf32, #tpu.memory_space<any>> -> memref<1x128xf32, #tpu.memory_space<any>>
      %c3_i32_193 = arith.constant 3 : i32
      %c0_i32_194 = arith.constant 0 : i32
      %177 = tpu.memref_slice %arg6[%c4_i32_190, %c3_i32_193, %c0_i32_194] : memref<8x8x128xf32, #tpu.memory_space<vmem>> -> memref<1x1x128xf32, #tpu.memory_space<vmem>>
      %178 = tpu.memref_squeeze %177 : memref<1x1x128xf32, #tpu.memory_space<vmem>> -> memref<1x128xf32, #tpu.memory_space<vmem>>
      %179 = tpu.memref_slice %arg7[%c4_i32_191] : memref<8x!tpu.dma_semaphore, #tpu.memory_space<semaphore_mem>> -> memref<1x!tpu.dma_semaphore, #tpu.memory_space<semaphore_mem>>
      %180 = tpu.memref_squeeze %179 : memref<1x!tpu.dma_semaphore, #tpu.memory_space<semaphore_mem>> -> memref<!tpu.dma_semaphore, #tpu.memory_space<semaphore_mem>>
      tpu.enqueue_dma source(%176 : memref<1x128xf32, #tpu.memory_space<any>>) target(%178 : memref<1x128xf32, #tpu.memory_space<vmem>>) target_semaphore(%180 : memref<!tpu.dma_semaphore, #tpu.memory_space<semaphore_mem>>)
      %c3_195 = arith.constant 3 : index
      %c5_196 = arith.constant 5 : index
      %181 = memref.load %arg1[%c3_195, %c5_196] : memref<8x8xi32, #tpu.memory_space<smem>>
      %c5_i32_197 = arith.constant 5 : i32
      %c5_i32_198 = arith.constant 5 : i32
      %c0_i32_199 = arith.constant 0 : i32
      %182 = tpu.memref_slice %arg2[%181, %c0_i32_199] : memref<1024x128xf32, #tpu.memory_space<any>> -> memref<1x128xf32, #tpu.memory_space<any>>
      %c3_i32_200 = arith.constant 3 : i32
      %c0_i32_201 = arith.constant 0 : i32
      %183 = tpu.memref_slice %arg6[%c5_i32_197, %c3_i32_200, %c0_i32_201] : memref<8x8x128xf32, #tpu.memory_space<vmem>> -> memref<1x1x128xf32, #tpu.memory_space<vmem>>
      %184 = tpu.memref_squeeze %183 : memref<1x1x128xf32, #tpu.memory_space<vmem>> -> memref<1x128xf32, #tpu.memory_space<vmem>>
      %185 = tpu.memref_slice %arg7[%c5_i32_198] : memref<8x!tpu.dma_semaphore, #tpu.memory_space<semaphore_mem>> -> memref<1x!tpu.dma_semaphore, #tpu.memory_space<semaphore_mem>>
      %186 = tpu.memref_squeeze %185 : memref<1x!tpu.dma_semaphore, #tpu.memory_space<semaphore_mem>> -> memref<!tpu.dma_semaphore, #tpu.memory_space<semaphore_mem>>
      tpu.enqueue_dma source(%182 : memref<1x128xf32, #tpu.memory_space<any>>) target(%184 : memref<1x128xf32, #tpu.memory_space<vmem>>) target_semaphore(%186 : memref<!tpu.dma_semaphore, #tpu.memory_space<semaphore_mem>>)
      %c3_202 = arith.constant 3 : index
      %c6_203 = arith.constant 6 : index
      %187 = memref.load %arg1[%c3_202, %c6_203] : memref<8x8xi32, #tpu.memory_space<smem>>
      %c6_i32_204 = arith.constant 6 : i32
      %c6_i32_205 = arith.constant 6 : i32
      %c0_i32_206 = arith.constant 0 : i32
      %188 = tpu.memref_slice %arg2[%187, %c0_i32_206] : memref<1024x128xf32, #tpu.memory_space<any>> -> memref<1x128xf32, #tpu.memory_space<any>>
      %c3_i32_207 = arith.constant 3 : i32
      %c0_i32_208 = arith.constant 0 : i32
      %189 = tpu.memref_slice %arg6[%c6_i32_204, %c3_i32_207, %c0_i32_208] : memref<8x8x128xf32, #tpu.memory_space<vmem>> -> memref<1x1x128xf32, #tpu.memory_space<vmem>>
      %190 = tpu.memref_squeeze %189 : memref<1x1x128xf32, #tpu.memory_space<vmem>> -> memref<1x128xf32, #tpu.memory_space<vmem>>
      %191 = tpu.memref_slice %arg7[%c6_i32_205] : memref<8x!tpu.dma_semaphore, #tpu.memory_space<semaphore_mem>> -> memref<1x!tpu.dma_semaphore, #tpu.memory_space<semaphore_mem>>
      %192 = tpu.memref_squeeze %191 : memref<1x!tpu.dma_semaphore, #tpu.memory_space<semaphore_mem>> -> memref<!tpu.dma_semaphore, #tpu.memory_space<semaphore_mem>>
      tpu.enqueue_dma source(%188 : memref<1x128xf32, #tpu.memory_space<any>>) target(%190 : memref<1x128xf32, #tpu.memory_space<vmem>>) target_semaphore(%192 : memref<!tpu.dma_semaphore, #tpu.memory_space<semaphore_mem>>)
      %c3_209 = arith.constant 3 : index
      %c7_210 = arith.constant 7 : index
      %193 = memref.load %arg1[%c3_209, %c7_210] : memref<8x8xi32, #tpu.memory_space<smem>>
      %c7_i32_211 = arith.constant 7 : i32
      %c7_i32_212 = arith.constant 7 : i32
      %c0_i32_213 = arith.constant 0 : i32
      %194 = tpu.memref_slice %arg2[%193, %c0_i32_213] : memref<1024x128xf32, #tpu.memory_space<any>> -> memref<1x128xf32, #tpu.memory_space<any>>
      %c3_i32_214 = arith.constant 3 : i32
      %c0_i32_215 = arith.constant 0 : i32
      %195 = tpu.memref_slice %arg6[%c7_i32_211, %c3_i32_214, %c0_i32_215] : memref<8x8x128xf32, #tpu.memory_space<vmem>> -> memref<1x1x128xf32, #tpu.memory_space<vmem>>
      %196 = tpu.memref_squeeze %195 : memref<1x1x128xf32, #tpu.memory_space<vmem>> -> memref<1x128xf32, #tpu.memory_space<vmem>>
      %197 = tpu.memref_slice %arg7[%c7_i32_212] : memref<8x!tpu.dma_semaphore, #tpu.memory_space<semaphore_mem>> -> memref<1x!tpu.dma_semaphore, #tpu.memory_space<semaphore_mem>>
      %198 = tpu.memref_squeeze %197 : memref<1x!tpu.dma_semaphore, #tpu.memory_space<semaphore_mem>> -> memref<!tpu.dma_semaphore, #tpu.memory_space<semaphore_mem>>
      tpu.enqueue_dma source(%194 : memref<1x128xf32, #tpu.memory_space<any>>) target(%196 : memref<1x128xf32, #tpu.memory_space<vmem>>) target_semaphore(%198 : memref<!tpu.dma_semaphore, #tpu.memory_space<semaphore_mem>>)
      %c4_216 = arith.constant 4 : index
      %c0_217 = arith.constant 0 : index
      %199 = memref.load %arg1[%c4_216, %c0_217] : memref<8x8xi32, #tpu.memory_space<smem>>
      %c0_i32_218 = arith.constant 0 : i32
      %c0_i32_219 = arith.constant 0 : i32
      %c0_i32_220 = arith.constant 0 : i32
      %200 = tpu.memref_slice %arg2[%199, %c0_i32_220] : memref<1024x128xf32, #tpu.memory_space<any>> -> memref<1x128xf32, #tpu.memory_space<any>>
      %c4_i32_221 = arith.constant 4 : i32
      %c0_i32_222 = arith.constant 0 : i32
      %201 = tpu.memref_slice %arg6[%c0_i32_218, %c4_i32_221, %c0_i32_222] : memref<8x8x128xf32, #tpu.memory_space<vmem>> -> memref<1x1x128xf32, #tpu.memory_space<vmem>>
      %202 = tpu.memref_squeeze %201 : memref<1x1x128xf32, #tpu.memory_space<vmem>> -> memref<1x128xf32, #tpu.memory_space<vmem>>
      %203 = tpu.memref_slice %arg7[%c0_i32_219] : memref<8x!tpu.dma_semaphore, #tpu.memory_space<semaphore_mem>> -> memref<1x!tpu.dma_semaphore, #tpu.memory_space<semaphore_mem>>
      %204 = tpu.memref_squeeze %203 : memref<1x!tpu.dma_semaphore, #tpu.memory_space<semaphore_mem>> -> memref<!tpu.dma_semaphore, #tpu.memory_space<semaphore_mem>>
      tpu.enqueue_dma source(%200 : memref<1x128xf32, #tpu.memory_space<any>>) target(%202 : memref<1x128xf32, #tpu.memory_space<vmem>>) target_semaphore(%204 : memref<!tpu.dma_semaphore, #tpu.memory_space<semaphore_mem>>)
      %c4_223 = arith.constant 4 : index
      %c1_224 = arith.constant 1 : index
      %205 = memref.load %arg1[%c4_223, %c1_224] : memref<8x8xi32, #tpu.memory_space<smem>>
      %c1_i32_225 = arith.constant 1 : i32
      %c1_i32_226 = arith.constant 1 : i32
      %c0_i32_227 = arith.constant 0 : i32
      %206 = tpu.memref_slice %arg2[%205, %c0_i32_227] : memref<1024x128xf32, #tpu.memory_space<any>> -> memref<1x128xf32, #tpu.memory_space<any>>
      %c4_i32_228 = arith.constant 4 : i32
      %c0_i32_229 = arith.constant 0 : i32
      %207 = tpu.memref_slice %arg6[%c1_i32_225, %c4_i32_228, %c0_i32_229] : memref<8x8x128xf32, #tpu.memory_space<vmem>> -> memref<1x1x128xf32, #tpu.memory_space<vmem>>
      %208 = tpu.memref_squeeze %207 : memref<1x1x128xf32, #tpu.memory_space<vmem>> -> memref<1x128xf32, #tpu.memory_space<vmem>>
      %209 = tpu.memref_slice %arg7[%c1_i32_226] : memref<8x!tpu.dma_semaphore, #tpu.memory_space<semaphore_mem>> -> memref<1x!tpu.dma_semaphore, #tpu.memory_space<semaphore_mem>>
      %210 = tpu.memref_squeeze %209 : memref<1x!tpu.dma_semaphore, #tpu.memory_space<semaphore_mem>> -> memref<!tpu.dma_semaphore, #tpu.memory_space<semaphore_mem>>
      tpu.enqueue_dma source(%206 : memref<1x128xf32, #tpu.memory_space<any>>) target(%208 : memref<1x128xf32, #tpu.memory_space<vmem>>) target_semaphore(%210 : memref<!tpu.dma_semaphore, #tpu.memory_space<semaphore_mem>>)
      %c4_230 = arith.constant 4 : index
      %c2_231 = arith.constant 2 : index
      %211 = memref.load %arg1[%c4_230, %c2_231] : memref<8x8xi32, #tpu.memory_space<smem>>
      %c2_i32_232 = arith.constant 2 : i32
      %c2_i32_233 = arith.constant 2 : i32
      %c0_i32_234 = arith.constant 0 : i32
      %212 = tpu.memref_slice %arg2[%211, %c0_i32_234] : memref<1024x128xf32, #tpu.memory_space<any>> -> memref<1x128xf32, #tpu.memory_space<any>>
      %c4_i32_235 = arith.constant 4 : i32
      %c0_i32_236 = arith.constant 0 : i32
      %213 = tpu.memref_slice %arg6[%c2_i32_232, %c4_i32_235, %c0_i32_236] : memref<8x8x128xf32, #tpu.memory_space<vmem>> -> memref<1x1x128xf32, #tpu.memory_space<vmem>>
      %214 = tpu.memref_squeeze %213 : memref<1x1x128xf32, #tpu.memory_space<vmem>> -> memref<1x128xf32, #tpu.memory_space<vmem>>
      %215 = tpu.memref_slice %arg7[%c2_i32_233] : memref<8x!tpu.dma_semaphore, #tpu.memory_space<semaphore_mem>> -> memref<1x!tpu.dma_semaphore, #tpu.memory_space<semaphore_mem>>
      %216 = tpu.memref_squeeze %215 : memref<1x!tpu.dma_semaphore, #tpu.memory_space<semaphore_mem>> -> memref<!tpu.dma_semaphore, #tpu.memory_space<semaphore_mem>>
      tpu.enqueue_dma source(%212 : memref<1x128xf32, #tpu.memory_space<any>>) target(%214 : memref<1x128xf32, #tpu.memory_space<vmem>>) target_semaphore(%216 : memref<!tpu.dma_semaphore, #tpu.memory_space<semaphore_mem>>)
      %c4_237 = arith.constant 4 : index
      %c3_238 = arith.constant 3 : index
      %217 = memref.load %arg1[%c4_237, %c3_238] : memref<8x8xi32, #tpu.memory_space<smem>>
      %c3_i32_239 = arith.constant 3 : i32
      %c3_i32_240 = arith.constant 3 : i32
      %c0_i32_241 = arith.constant 0 : i32
      %218 = tpu.memref_slice %arg2[%217, %c0_i32_241] : memref<1024x128xf32, #tpu.memory_space<any>> -> memref<1x128xf32, #tpu.memory_space<any>>
      %c4_i32_242 = arith.constant 4 : i32
      %c0_i32_243 = arith.constant 0 : i32
      %219 = tpu.memref_slice %arg6[%c3_i32_239, %c4_i32_242, %c0_i32_243] : memref<8x8x128xf32, #tpu.memory_space<vmem>> -> memref<1x1x128xf32, #tpu.memory_space<vmem>>
      %220 = tpu.memref_squeeze %219 : memref<1x1x128xf32, #tpu.memory_space<vmem>> -> memref<1x128xf32, #tpu.memory_space<vmem>>
      %221 = tpu.memref_slice %arg7[%c3_i32_240] : memref<8x!tpu.dma_semaphore, #tpu.memory_space<semaphore_mem>> -> memref<1x!tpu.dma_semaphore, #tpu.memory_space<semaphore_mem>>
      %222 = tpu.memref_squeeze %221 : memref<1x!tpu.dma_semaphore, #tpu.memory_space<semaphore_mem>> -> memref<!tpu.dma_semaphore, #tpu.memory_space<semaphore_mem>>
      tpu.enqueue_dma source(%218 : memref<1x128xf32, #tpu.memory_space<any>>) target(%220 : memref<1x128xf32, #tpu.memory_space<vmem>>) target_semaphore(%222 : memref<!tpu.dma_semaphore, #tpu.memory_space<semaphore_mem>>)
      %c4_244 = arith.constant 4 : index
      %c4_245 = arith.constant 4 : index
      %223 = memref.load %arg1[%c4_244, %c4_245] : memref<8x8xi32, #tpu.memory_space<smem>>
      %c4_i32_246 = arith.constant 4 : i32
      %c4_i32_247 = arith.constant 4 : i32
      %c0_i32_248 = arith.constant 0 : i32
      %224 = tpu.memref_slice %arg2[%223, %c0_i32_248] : memref<1024x128xf32, #tpu.memory_space<any>> -> memref<1x128xf32, #tpu.memory_space<any>>
      %c4_i32_249 = arith.constant 4 : i32
      %c0_i32_250 = arith.constant 0 : i32
      %225 = tpu.memref_slice %arg6[%c4_i32_246, %c4_i32_249, %c0_i32_250] : memref<8x8x128xf32, #tpu.memory_space<vmem>> -> memref<1x1x128xf32, #tpu.memory_space<vmem>>
      %226 = tpu.memref_squeeze %225 : memref<1x1x128xf32, #tpu.memory_space<vmem>> -> memref<1x128xf32, #tpu.memory_space<vmem>>
      %227 = tpu.memref_slice %arg7[%c4_i32_247] : memref<8x!tpu.dma_semaphore, #tpu.memory_space<semaphore_mem>> -> memref<1x!tpu.dma_semaphore, #tpu.memory_space<semaphore_mem>>
      %228 = tpu.memref_squeeze %227 : memref<1x!tpu.dma_semaphore, #tpu.memory_space<semaphore_mem>> -> memref<!tpu.dma_semaphore, #tpu.memory_space<semaphore_mem>>
      tpu.enqueue_dma source(%224 : memref<1x128xf32, #tpu.memory_space<any>>) target(%226 : memref<1x128xf32, #tpu.memory_space<vmem>>) target_semaphore(%228 : memref<!tpu.dma_semaphore, #tpu.memory_space<semaphore_mem>>)
      %c4_251 = arith.constant 4 : index
      %c5_252 = arith.constant 5 : index
      %229 = memref.load %arg1[%c4_251, %c5_252] : memref<8x8xi32, #tpu.memory_space<smem>>
      %c5_i32_253 = arith.constant 5 : i32
      %c5_i32_254 = arith.constant 5 : i32
      %c0_i32_255 = arith.constant 0 : i32
      %230 = tpu.memref_slice %arg2[%229, %c0_i32_255] : memref<1024x128xf32, #tpu.memory_space<any>> -> memref<1x128xf32, #tpu.memory_space<any>>
      %c4_i32_256 = arith.constant 4 : i32
      %c0_i32_257 = arith.constant 0 : i32
      %231 = tpu.memref_slice %arg6[%c5_i32_253, %c4_i32_256, %c0_i32_257] : memref<8x8x128xf32, #tpu.memory_space<vmem>> -> memref<1x1x128xf32, #tpu.memory_space<vmem>>
      %232 = tpu.memref_squeeze %231 : memref<1x1x128xf32, #tpu.memory_space<vmem>> -> memref<1x128xf32, #tpu.memory_space<vmem>>
      %233 = tpu.memref_slice %arg7[%c5_i32_254] : memref<8x!tpu.dma_semaphore, #tpu.memory_space<semaphore_mem>> -> memref<1x!tpu.dma_semaphore, #tpu.memory_space<semaphore_mem>>
      %234 = tpu.memref_squeeze %233 : memref<1x!tpu.dma_semaphore, #tpu.memory_space<semaphore_mem>> -> memref<!tpu.dma_semaphore, #tpu.memory_space<semaphore_mem>>
      tpu.enqueue_dma source(%230 : memref<1x128xf32, #tpu.memory_space<any>>) target(%232 : memref<1x128xf32, #tpu.memory_space<vmem>>) target_semaphore(%234 : memref<!tpu.dma_semaphore, #tpu.memory_space<semaphore_mem>>)
      %c4_258 = arith.constant 4 : index
      %c6_259 = arith.constant 6 : index
      %235 = memref.load %arg1[%c4_258, %c6_259] : memref<8x8xi32, #tpu.memory_space<smem>>
      %c6_i32_260 = arith.constant 6 : i32
      %c6_i32_261 = arith.constant 6 : i32
      %c0_i32_262 = arith.constant 0 : i32
      %236 = tpu.memref_slice %arg2[%235, %c0_i32_262] : memref<1024x128xf32, #tpu.memory_space<any>> -> memref<1x128xf32, #tpu.memory_space<any>>
      %c4_i32_263 = arith.constant 4 : i32
      %c0_i32_264 = arith.constant 0 : i32
      %237 = tpu.memref_slice %arg6[%c6_i32_260, %c4_i32_263, %c0_i32_264] : memref<8x8x128xf32, #tpu.memory_space<vmem>> -> memref<1x1x128xf32, #tpu.memory_space<vmem>>
      %238 = tpu.memref_squeeze %237 : memref<1x1x128xf32, #tpu.memory_space<vmem>> -> memref<1x128xf32, #tpu.memory_space<vmem>>
      %239 = tpu.memref_slice %arg7[%c6_i32_261] : memref<8x!tpu.dma_semaphore, #tpu.memory_space<semaphore_mem>> -> memref<1x!tpu.dma_semaphore, #tpu.memory_space<semaphore_mem>>
      %240 = tpu.memref_squeeze %239 : memref<1x!tpu.dma_semaphore, #tpu.memory_space<semaphore_mem>> -> memref<!tpu.dma_semaphore, #tpu.memory_space<semaphore_mem>>
      tpu.enqueue_dma source(%236 : memref<1x128xf32, #tpu.memory_space<any>>) target(%238 : memref<1x128xf32, #tpu.memory_space<vmem>>) target_semaphore(%240 : memref<!tpu.dma_semaphore, #tpu.memory_space<semaphore_mem>>)
      %c4_265 = arith.constant 4 : index
      %c7_266 = arith.constant 7 : index
      %241 = memref.load %arg1[%c4_265, %c7_266] : memref<8x8xi32, #tpu.memory_space<smem>>
      %c7_i32_267 = arith.constant 7 : i32
      %c7_i32_268 = arith.constant 7 : i32
      %c0_i32_269 = arith.constant 0 : i32
      %242 = tpu.memref_slice %arg2[%241, %c0_i32_269] : memref<1024x128xf32, #tpu.memory_space<any>> -> memref<1x128xf32, #tpu.memory_space<any>>
      %c4_i32_270 = arith.constant 4 : i32
      %c0_i32_271 = arith.constant 0 : i32
      %243 = tpu.memref_slice %arg6[%c7_i32_267, %c4_i32_270, %c0_i32_271] : memref<8x8x128xf32, #tpu.memory_space<vmem>> -> memref<1x1x128xf32, #tpu.memory_space<vmem>>
      %244 = tpu.memref_squeeze %243 : memref<1x1x128xf32, #tpu.memory_space<vmem>> -> memref<1x128xf32, #tpu.memory_space<vmem>>
      %245 = tpu.memref_slice %arg7[%c7_i32_268] : memref<8x!tpu.dma_semaphore, #tpu.memory_space<semaphore_mem>> -> memref<1x!tpu.dma_semaphore, #tpu.memory_space<semaphore_mem>>
      %246 = tpu.memref_squeeze %245 : memref<1x!tpu.dma_semaphore, #tpu.memory_space<semaphore_mem>> -> memref<!tpu.dma_semaphore, #tpu.memory_space<semaphore_mem>>
      tpu.enqueue_dma source(%242 : memref<1x128xf32, #tpu.memory_space<any>>) target(%244 : memref<1x128xf32, #tpu.memory_space<vmem>>) target_semaphore(%246 : memref<!tpu.dma_semaphore, #tpu.memory_space<semaphore_mem>>)
      %c5_272 = arith.constant 5 : index
      %c0_273 = arith.constant 0 : index
      %247 = memref.load %arg1[%c5_272, %c0_273] : memref<8x8xi32, #tpu.memory_space<smem>>
      %c0_i32_274 = arith.constant 0 : i32
      %c0_i32_275 = arith.constant 0 : i32
      %c0_i32_276 = arith.constant 0 : i32
      %248 = tpu.memref_slice %arg2[%247, %c0_i32_276] : memref<1024x128xf32, #tpu.memory_space<any>> -> memref<1x128xf32, #tpu.memory_space<any>>
      %c5_i32_277 = arith.constant 5 : i32
      %c0_i32_278 = arith.constant 0 : i32
      %249 = tpu.memref_slice %arg6[%c0_i32_274, %c5_i32_277, %c0_i32_278] : memref<8x8x128xf32, #tpu.memory_space<vmem>> -> memref<1x1x128xf32, #tpu.memory_space<vmem>>
      %250 = tpu.memref_squeeze %249 : memref<1x1x128xf32, #tpu.memory_space<vmem>> -> memref<1x128xf32, #tpu.memory_space<vmem>>
      %251 = tpu.memref_slice %arg7[%c0_i32_275] : memref<8x!tpu.dma_semaphore, #tpu.memory_space<semaphore_mem>> -> memref<1x!tpu.dma_semaphore, #tpu.memory_space<semaphore_mem>>
      %252 = tpu.memref_squeeze %251 : memref<1x!tpu.dma_semaphore, #tpu.memory_space<semaphore_mem>> -> memref<!tpu.dma_semaphore, #tpu.memory_space<semaphore_mem>>
      tpu.enqueue_dma source(%248 : memref<1x128xf32, #tpu.memory_space<any>>) target(%250 : memref<1x128xf32, #tpu.memory_space<vmem>>) target_semaphore(%252 : memref<!tpu.dma_semaphore, #tpu.memory_space<semaphore_mem>>)
      %c5_279 = arith.constant 5 : index
      %c1_280 = arith.constant 1 : index
      %253 = memref.load %arg1[%c5_279, %c1_280] : memref<8x8xi32, #tpu.memory_space<smem>>
      %c1_i32_281 = arith.constant 1 : i32
      %c1_i32_282 = arith.constant 1 : i32
      %c0_i32_283 = arith.constant 0 : i32
      %254 = tpu.memref_slice %arg2[%253, %c0_i32_283] : memref<1024x128xf32, #tpu.memory_space<any>> -> memref<1x128xf32, #tpu.memory_space<any>>
      %c5_i32_284 = arith.constant 5 : i32
      %c0_i32_285 = arith.constant 0 : i32
      %255 = tpu.memref_slice %arg6[%c1_i32_281, %c5_i32_284, %c0_i32_285] : memref<8x8x128xf32, #tpu.memory_space<vmem>> -> memref<1x1x128xf32, #tpu.memory_space<vmem>>
      %256 = tpu.memref_squeeze %255 : memref<1x1x128xf32, #tpu.memory_space<vmem>> -> memref<1x128xf32, #tpu.memory_space<vmem>>
      %257 = tpu.memref_slice %arg7[%c1_i32_282] : memref<8x!tpu.dma_semaphore, #tpu.memory_space<semaphore_mem>> -> memref<1x!tpu.dma_semaphore, #tpu.memory_space<semaphore_mem>>
      %258 = tpu.memref_squeeze %257 : memref<1x!tpu.dma_semaphore, #tpu.memory_space<semaphore_mem>> -> memref<!tpu.dma_semaphore, #tpu.memory_space<semaphore_mem>>
      tpu.enqueue_dma source(%254 : memref<1x128xf32, #tpu.memory_space<any>>) target(%256 : memref<1x128xf32, #tpu.memory_space<vmem>>) target_semaphore(%258 : memref<!tpu.dma_semaphore, #tpu.memory_space<semaphore_mem>>)
      %c5_286 = arith.constant 5 : index
      %c2_287 = arith.constant 2 : index
      %259 = memref.load %arg1[%c5_286, %c2_287] : memref<8x8xi32, #tpu.memory_space<smem>>
      %c2_i32_288 = arith.constant 2 : i32
      %c2_i32_289 = arith.constant 2 : i32
      %c0_i32_290 = arith.constant 0 : i32
      %260 = tpu.memref_slice %arg2[%259, %c0_i32_290] : memref<1024x128xf32, #tpu.memory_space<any>> -> memref<1x128xf32, #tpu.memory_space<any>>
      %c5_i32_291 = arith.constant 5 : i32
      %c0_i32_292 = arith.constant 0 : i32
      %261 = tpu.memref_slice %arg6[%c2_i32_288, %c5_i32_291, %c0_i32_292] : memref<8x8x128xf32, #tpu.memory_space<vmem>> -> memref<1x1x128xf32, #tpu.memory_space<vmem>>
      %262 = tpu.memref_squeeze %261 : memref<1x1x128xf32, #tpu.memory_space<vmem>> -> memref<1x128xf32, #tpu.memory_space<vmem>>
      %263 = tpu.memref_slice %arg7[%c2_i32_289] : memref<8x!tpu.dma_semaphore, #tpu.memory_space<semaphore_mem>> -> memref<1x!tpu.dma_semaphore, #tpu.memory_space<semaphore_mem>>
      %264 = tpu.memref_squeeze %263 : memref<1x!tpu.dma_semaphore, #tpu.memory_space<semaphore_mem>> -> memref<!tpu.dma_semaphore, #tpu.memory_space<semaphore_mem>>
      tpu.enqueue_dma source(%260 : memref<1x128xf32, #tpu.memory_space<any>>) target(%262 : memref<1x128xf32, #tpu.memory_space<vmem>>) target_semaphore(%264 : memref<!tpu.dma_semaphore, #tpu.memory_space<semaphore_mem>>)
      %c5_293 = arith.constant 5 : index
      %c3_294 = arith.constant 3 : index
      %265 = memref.load %arg1[%c5_293, %c3_294] : memref<8x8xi32, #tpu.memory_space<smem>>
      %c3_i32_295 = arith.constant 3 : i32
      %c3_i32_296 = arith.constant 3 : i32
      %c0_i32_297 = arith.constant 0 : i32
      %266 = tpu.memref_slice %arg2[%265, %c0_i32_297] : memref<1024x128xf32, #tpu.memory_space<any>> -> memref<1x128xf32, #tpu.memory_space<any>>
      %c5_i32_298 = arith.constant 5 : i32
      %c0_i32_299 = arith.constant 0 : i32
      %267 = tpu.memref_slice %arg6[%c3_i32_295, %c5_i32_298, %c0_i32_299] : memref<8x8x128xf32, #tpu.memory_space<vmem>> -> memref<1x1x128xf32, #tpu.memory_space<vmem>>
      %268 = tpu.memref_squeeze %267 : memref<1x1x128xf32, #tpu.memory_space<vmem>> -> memref<1x128xf32, #tpu.memory_space<vmem>>
      %269 = tpu.memref_slice %arg7[%c3_i32_296] : memref<8x!tpu.dma_semaphore, #tpu.memory_space<semaphore_mem>> -> memref<1x!tpu.dma_semaphore, #tpu.memory_space<semaphore_mem>>
      %270 = tpu.memref_squeeze %269 : memref<1x!tpu.dma_semaphore, #tpu.memory_space<semaphore_mem>> -> memref<!tpu.dma_semaphore, #tpu.memory_space<semaphore_mem>>
      tpu.enqueue_dma source(%266 : memref<1x128xf32, #tpu.memory_space<any>>) target(%268 : memref<1x128xf32, #tpu.memory_space<vmem>>) target_semaphore(%270 : memref<!tpu.dma_semaphore, #tpu.memory_space<semaphore_mem>>)
      %c5_300 = arith.constant 5 : index
      %c4_301 = arith.constant 4 : index
      %271 = memref.load %arg1[%c5_300, %c4_301] : memref<8x8xi32, #tpu.memory_space<smem>>
      %c4_i32_302 = arith.constant 4 : i32
      %c4_i32_303 = arith.constant 4 : i32
      %c0_i32_304 = arith.constant 0 : i32
      %272 = tpu.memref_slice %arg2[%271, %c0_i32_304] : memref<1024x128xf32, #tpu.memory_space<any>> -> memref<1x128xf32, #tpu.memory_space<any>>
      %c5_i32_305 = arith.constant 5 : i32
      %c0_i32_306 = arith.constant 0 : i32
      %273 = tpu.memref_slice %arg6[%c4_i32_302, %c5_i32_305, %c0_i32_306] : memref<8x8x128xf32, #tpu.memory_space<vmem>> -> memref<1x1x128xf32, #tpu.memory_space<vmem>>
      %274 = tpu.memref_squeeze %273 : memref<1x1x128xf32, #tpu.memory_space<vmem>> -> memref<1x128xf32, #tpu.memory_space<vmem>>
      %275 = tpu.memref_slice %arg7[%c4_i32_303] : memref<8x!tpu.dma_semaphore, #tpu.memory_space<semaphore_mem>> -> memref<1x!tpu.dma_semaphore, #tpu.memory_space<semaphore_mem>>
      %276 = tpu.memref_squeeze %275 : memref<1x!tpu.dma_semaphore, #tpu.memory_space<semaphore_mem>> -> memref<!tpu.dma_semaphore, #tpu.memory_space<semaphore_mem>>
      tpu.enqueue_dma source(%272 : memref<1x128xf32, #tpu.memory_space<any>>) target(%274 : memref<1x128xf32, #tpu.memory_space<vmem>>) target_semaphore(%276 : memref<!tpu.dma_semaphore, #tpu.memory_space<semaphore_mem>>)
      %c5_307 = arith.constant 5 : index
      %c5_308 = arith.constant 5 : index
      %277 = memref.load %arg1[%c5_307, %c5_308] : memref<8x8xi32, #tpu.memory_space<smem>>
      %c5_i32_309 = arith.constant 5 : i32
      %c5_i32_310 = arith.constant 5 : i32
      %c0_i32_311 = arith.constant 0 : i32
      %278 = tpu.memref_slice %arg2[%277, %c0_i32_311] : memref<1024x128xf32, #tpu.memory_space<any>> -> memref<1x128xf32, #tpu.memory_space<any>>
      %c5_i32_312 = arith.constant 5 : i32
      %c0_i32_313 = arith.constant 0 : i32
      %279 = tpu.memref_slice %arg6[%c5_i32_309, %c5_i32_312, %c0_i32_313] : memref<8x8x128xf32, #tpu.memory_space<vmem>> -> memref<1x1x128xf32, #tpu.memory_space<vmem>>
      %280 = tpu.memref_squeeze %279 : memref<1x1x128xf32, #tpu.memory_space<vmem>> -> memref<1x128xf32, #tpu.memory_space<vmem>>
      %281 = tpu.memref_slice %arg7[%c5_i32_310] : memref<8x!tpu.dma_semaphore, #tpu.memory_space<semaphore_mem>> -> memref<1x!tpu.dma_semaphore, #tpu.memory_space<semaphore_mem>>
      %282 = tpu.memref_squeeze %281 : memref<1x!tpu.dma_semaphore, #tpu.memory_space<semaphore_mem>> -> memref<!tpu.dma_semaphore, #tpu.memory_space<semaphore_mem>>
      tpu.enqueue_dma source(%278 : memref<1x128xf32, #tpu.memory_space<any>>) target(%280 : memref<1x128xf32, #tpu.memory_space<vmem>>) target_semaphore(%282 : memref<!tpu.dma_semaphore, #tpu.memory_space<semaphore_mem>>)
      %c5_314 = arith.constant 5 : index
      %c6_315 = arith.constant 6 : index
      %283 = memref.load %arg1[%c5_314, %c6_315] : memref<8x8xi32, #tpu.memory_space<smem>>
      %c6_i32_316 = arith.constant 6 : i32
      %c6_i32_317 = arith.constant 6 : i32
      %c0_i32_318 = arith.constant 0 : i32
      %284 = tpu.memref_slice %arg2[%283, %c0_i32_318] : memref<1024x128xf32, #tpu.memory_space<any>> -> memref<1x128xf32, #tpu.memory_space<any>>
      %c5_i32_319 = arith.constant 5 : i32
      %c0_i32_320 = arith.constant 0 : i32
      %285 = tpu.memref_slice %arg6[%c6_i32_316, %c5_i32_319, %c0_i32_320] : memref<8x8x128xf32, #tpu.memory_space<vmem>> -> memref<1x1x128xf32, #tpu.memory_space<vmem>>
      %286 = tpu.memref_squeeze %285 : memref<1x1x128xf32, #tpu.memory_space<vmem>> -> memref<1x128xf32, #tpu.memory_space<vmem>>
      %287 = tpu.memref_slice %arg7[%c6_i32_317] : memref<8x!tpu.dma_semaphore, #tpu.memory_space<semaphore_mem>> -> memref<1x!tpu.dma_semaphore, #tpu.memory_space<semaphore_mem>>
      %288 = tpu.memref_squeeze %287 : memref<1x!tpu.dma_semaphore, #tpu.memory_space<semaphore_mem>> -> memref<!tpu.dma_semaphore, #tpu.memory_space<semaphore_mem>>
      tpu.enqueue_dma source(%284 : memref<1x128xf32, #tpu.memory_space<any>>) target(%286 : memref<1x128xf32, #tpu.memory_space<vmem>>) target_semaphore(%288 : memref<!tpu.dma_semaphore, #tpu.memory_space<semaphore_mem>>)
      %c5_321 = arith.constant 5 : index
      %c7_322 = arith.constant 7 : index
      %289 = memref.load %arg1[%c5_321, %c7_322] : memref<8x8xi32, #tpu.memory_space<smem>>
      %c7_i32_323 = arith.constant 7 : i32
      %c7_i32_324 = arith.constant 7 : i32
      %c0_i32_325 = arith.constant 0 : i32
      %290 = tpu.memref_slice %arg2[%289, %c0_i32_325] : memref<1024x128xf32, #tpu.memory_space<any>> -> memref<1x128xf32, #tpu.memory_space<any>>
      %c5_i32_326 = arith.constant 5 : i32
      %c0_i32_327 = arith.constant 0 : i32
      %291 = tpu.memref_slice %arg6[%c7_i32_323, %c5_i32_326, %c0_i32_327] : memref<8x8x128xf32, #tpu.memory_space<vmem>> -> memref<1x1x128xf32, #tpu.memory_space<vmem>>
      %292 = tpu.memref_squeeze %291 : memref<1x1x128xf32, #tpu.memory_space<vmem>> -> memref<1x128xf32, #tpu.memory_space<vmem>>
      %293 = tpu.memref_slice %arg7[%c7_i32_324] : memref<8x!tpu.dma_semaphore, #tpu.memory_space<semaphore_mem>> -> memref<1x!tpu.dma_semaphore, #tpu.memory_space<semaphore_mem>>
      %294 = tpu.memref_squeeze %293 : memref<1x!tpu.dma_semaphore, #tpu.memory_space<semaphore_mem>> -> memref<!tpu.dma_semaphore, #tpu.memory_space<semaphore_mem>>
      tpu.enqueue_dma source(%290 : memref<1x128xf32, #tpu.memory_space<any>>) target(%292 : memref<1x128xf32, #tpu.memory_space<vmem>>) target_semaphore(%294 : memref<!tpu.dma_semaphore, #tpu.memory_space<semaphore_mem>>)
      %c6_328 = arith.constant 6 : index
      %c0_329 = arith.constant 0 : index
      %295 = memref.load %arg1[%c6_328, %c0_329] : memref<8x8xi32, #tpu.memory_space<smem>>
      %c0_i32_330 = arith.constant 0 : i32
      %c0_i32_331 = arith.constant 0 : i32
      %c0_i32_332 = arith.constant 0 : i32
      %296 = tpu.memref_slice %arg2[%295, %c0_i32_332] : memref<1024x128xf32, #tpu.memory_space<any>> -> memref<1x128xf32, #tpu.memory_space<any>>
      %c6_i32_333 = arith.constant 6 : i32
      %c0_i32_334 = arith.constant 0 : i32
      %297 = tpu.memref_slice %arg6[%c0_i32_330, %c6_i32_333, %c0_i32_334] : memref<8x8x128xf32, #tpu.memory_space<vmem>> -> memref<1x1x128xf32, #tpu.memory_space<vmem>>
      %298 = tpu.memref_squeeze %297 : memref<1x1x128xf32, #tpu.memory_space<vmem>> -> memref<1x128xf32, #tpu.memory_space<vmem>>
      %299 = tpu.memref_slice %arg7[%c0_i32_331] : memref<8x!tpu.dma_semaphore, #tpu.memory_space<semaphore_mem>> -> memref<1x!tpu.dma_semaphore, #tpu.memory_space<semaphore_mem>>
      %300 = tpu.memref_squeeze %299 : memref<1x!tpu.dma_semaphore, #tpu.memory_space<semaphore_mem>> -> memref<!tpu.dma_semaphore, #tpu.memory_space<semaphore_mem>>
      tpu.enqueue_dma source(%296 : memref<1x128xf32, #tpu.memory_space<any>>) target(%298 : memref<1x128xf32, #tpu.memory_space<vmem>>) target_semaphore(%300 : memref<!tpu.dma_semaphore, #tpu.memory_space<semaphore_mem>>)
      %c6_335 = arith.constant 6 : index
      %c1_336 = arith.constant 1 : index
      %301 = memref.load %arg1[%c6_335, %c1_336] : memref<8x8xi32, #tpu.memory_space<smem>>
      %c1_i32_337 = arith.constant 1 : i32
      %c1_i32_338 = arith.constant 1 : i32
      %c0_i32_339 = arith.constant 0 : i32
      %302 = tpu.memref_slice %arg2[%301, %c0_i32_339] : memref<1024x128xf32, #tpu.memory_space<any>> -> memref<1x128xf32, #tpu.memory_space<any>>
      %c6_i32_340 = arith.constant 6 : i32
      %c0_i32_341 = arith.constant 0 : i32
      %303 = tpu.memref_slice %arg6[%c1_i32_337, %c6_i32_340, %c0_i32_341] : memref<8x8x128xf32, #tpu.memory_space<vmem>> -> memref<1x1x128xf32, #tpu.memory_space<vmem>>
      %304 = tpu.memref_squeeze %303 : memref<1x1x128xf32, #tpu.memory_space<vmem>> -> memref<1x128xf32, #tpu.memory_space<vmem>>
      %305 = tpu.memref_slice %arg7[%c1_i32_338] : memref<8x!tpu.dma_semaphore, #tpu.memory_space<semaphore_mem>> -> memref<1x!tpu.dma_semaphore, #tpu.memory_space<semaphore_mem>>
      %306 = tpu.memref_squeeze %305 : memref<1x!tpu.dma_semaphore, #tpu.memory_space<semaphore_mem>> -> memref<!tpu.dma_semaphore, #tpu.memory_space<semaphore_mem>>
      tpu.enqueue_dma source(%302 : memref<1x128xf32, #tpu.memory_space<any>>) target(%304 : memref<1x128xf32, #tpu.memory_space<vmem>>) target_semaphore(%306 : memref<!tpu.dma_semaphore, #tpu.memory_space<semaphore_mem>>)
      %c6_342 = arith.constant 6 : index
      %c2_343 = arith.constant 2 : index
      %307 = memref.load %arg1[%c6_342, %c2_343] : memref<8x8xi32, #tpu.memory_space<smem>>
      %c2_i32_344 = arith.constant 2 : i32
      %c2_i32_345 = arith.constant 2 : i32
      %c0_i32_346 = arith.constant 0 : i32
      %308 = tpu.memref_slice %arg2[%307, %c0_i32_346] : memref<1024x128xf32, #tpu.memory_space<any>> -> memref<1x128xf32, #tpu.memory_space<any>>
      %c6_i32_347 = arith.constant 6 : i32
      %c0_i32_348 = arith.constant 0 : i32
      %309 = tpu.memref_slice %arg6[%c2_i32_344, %c6_i32_347, %c0_i32_348] : memref<8x8x128xf32, #tpu.memory_space<vmem>> -> memref<1x1x128xf32, #tpu.memory_space<vmem>>
      %310 = tpu.memref_squeeze %309 : memref<1x1x128xf32, #tpu.memory_space<vmem>> -> memref<1x128xf32, #tpu.memory_space<vmem>>
      %311 = tpu.memref_slice %arg7[%c2_i32_345] : memref<8x!tpu.dma_semaphore, #tpu.memory_space<semaphore_mem>> -> memref<1x!tpu.dma_semaphore, #tpu.memory_space<semaphore_mem>>
      %312 = tpu.memref_squeeze %311 : memref<1x!tpu.dma_semaphore, #tpu.memory_space<semaphore_mem>> -> memref<!tpu.dma_semaphore, #tpu.memory_space<semaphore_mem>>
      tpu.enqueue_dma source(%308 : memref<1x128xf32, #tpu.memory_space<any>>) target(%310 : memref<1x128xf32, #tpu.memory_space<vmem>>) target_semaphore(%312 : memref<!tpu.dma_semaphore, #tpu.memory_space<semaphore_mem>>)
      %c6_349 = arith.constant 6 : index
      %c3_350 = arith.constant 3 : index
      %313 = memref.load %arg1[%c6_349, %c3_350] : memref<8x8xi32, #tpu.memory_space<smem>>
      %c3_i32_351 = arith.constant 3 : i32
      %c3_i32_352 = arith.constant 3 : i32
      %c0_i32_353 = arith.constant 0 : i32
      %314 = tpu.memref_slice %arg2[%313, %c0_i32_353] : memref<1024x128xf32, #tpu.memory_space<any>> -> memref<1x128xf32, #tpu.memory_space<any>>
      %c6_i32_354 = arith.constant 6 : i32
      %c0_i32_355 = arith.constant 0 : i32
      %315 = tpu.memref_slice %arg6[%c3_i32_351, %c6_i32_354, %c0_i32_355] : memref<8x8x128xf32, #tpu.memory_space<vmem>> -> memref<1x1x128xf32, #tpu.memory_space<vmem>>
      %316 = tpu.memref_squeeze %315 : memref<1x1x128xf32, #tpu.memory_space<vmem>> -> memref<1x128xf32, #tpu.memory_space<vmem>>
      %317 = tpu.memref_slice %arg7[%c3_i32_352] : memref<8x!tpu.dma_semaphore, #tpu.memory_space<semaphore_mem>> -> memref<1x!tpu.dma_semaphore, #tpu.memory_space<semaphore_mem>>
      %318 = tpu.memref_squeeze %317 : memref<1x!tpu.dma_semaphore, #tpu.memory_space<semaphore_mem>> -> memref<!tpu.dma_semaphore, #tpu.memory_space<semaphore_mem>>
      tpu.enqueue_dma source(%314 : memref<1x128xf32, #tpu.memory_space<any>>) target(%316 : memref<1x128xf32, #tpu.memory_space<vmem>>) target_semaphore(%318 : memref<!tpu.dma_semaphore, #tpu.memory_space<semaphore_mem>>)
      %c6_356 = arith.constant 6 : index
      %c4_357 = arith.constant 4 : index
      %319 = memref.load %arg1[%c6_356, %c4_357] : memref<8x8xi32, #tpu.memory_space<smem>>
      %c4_i32_358 = arith.constant 4 : i32
      %c4_i32_359 = arith.constant 4 : i32
      %c0_i32_360 = arith.constant 0 : i32
      %320 = tpu.memref_slice %arg2[%319, %c0_i32_360] : memref<1024x128xf32, #tpu.memory_space<any>> -> memref<1x128xf32, #tpu.memory_space<any>>
      %c6_i32_361 = arith.constant 6 : i32
      %c0_i32_362 = arith.constant 0 : i32
      %321 = tpu.memref_slice %arg6[%c4_i32_358, %c6_i32_361, %c0_i32_362] : memref<8x8x128xf32, #tpu.memory_space<vmem>> -> memref<1x1x128xf32, #tpu.memory_space<vmem>>
      %322 = tpu.memref_squeeze %321 : memref<1x1x128xf32, #tpu.memory_space<vmem>> -> memref<1x128xf32, #tpu.memory_space<vmem>>
      %323 = tpu.memref_slice %arg7[%c4_i32_359] : memref<8x!tpu.dma_semaphore, #tpu.memory_space<semaphore_mem>> -> memref<1x!tpu.dma_semaphore, #tpu.memory_space<semaphore_mem>>
      %324 = tpu.memref_squeeze %323 : memref<1x!tpu.dma_semaphore, #tpu.memory_space<semaphore_mem>> -> memref<!tpu.dma_semaphore, #tpu.memory_space<semaphore_mem>>
      tpu.enqueue_dma source(%320 : memref<1x128xf32, #tpu.memory_space<any>>) target(%322 : memref<1x128xf32, #tpu.memory_space<vmem>>) target_semaphore(%324 : memref<!tpu.dma_semaphore, #tpu.memory_space<semaphore_mem>>)
      %c6_363 = arith.constant 6 : index
      %c5_364 = arith.constant 5 : index
      %325 = memref.load %arg1[%c6_363, %c5_364] : memref<8x8xi32, #tpu.memory_space<smem>>
      %c5_i32_365 = arith.constant 5 : i32
      %c5_i32_366 = arith.constant 5 : i32
      %c0_i32_367 = arith.constant 0 : i32
      %326 = tpu.memref_slice %arg2[%325, %c0_i32_367] : memref<1024x128xf32, #tpu.memory_space<any>> -> memref<1x128xf32, #tpu.memory_space<any>>
      %c6_i32_368 = arith.constant 6 : i32
      %c0_i32_369 = arith.constant 0 : i32
      %327 = tpu.memref_slice %arg6[%c5_i32_365, %c6_i32_368, %c0_i32_369] : memref<8x8x128xf32, #tpu.memory_space<vmem>> -> memref<1x1x128xf32, #tpu.memory_space<vmem>>
      %328 = tpu.memref_squeeze %327 : memref<1x1x128xf32, #tpu.memory_space<vmem>> -> memref<1x128xf32, #tpu.memory_space<vmem>>
      %329 = tpu.memref_slice %arg7[%c5_i32_366] : memref<8x!tpu.dma_semaphore, #tpu.memory_space<semaphore_mem>> -> memref<1x!tpu.dma_semaphore, #tpu.memory_space<semaphore_mem>>
      %330 = tpu.memref_squeeze %329 : memref<1x!tpu.dma_semaphore, #tpu.memory_space<semaphore_mem>> -> memref<!tpu.dma_semaphore, #tpu.memory_space<semaphore_mem>>
      tpu.enqueue_dma source(%326 : memref<1x128xf32, #tpu.memory_space<any>>) target(%328 : memref<1x128xf32, #tpu.memory_space<vmem>>) target_semaphore(%330 : memref<!tpu.dma_semaphore, #tpu.memory_space<semaphore_mem>>)
      %c6_370 = arith.constant 6 : index
      %c6_371 = arith.constant 6 : index
      %331 = memref.load %arg1[%c6_370, %c6_371] : memref<8x8xi32, #tpu.memory_space<smem>>
      %c6_i32_372 = arith.constant 6 : i32
      %c6_i32_373 = arith.constant 6 : i32
      %c0_i32_374 = arith.constant 0 : i32
      %332 = tpu.memref_slice %arg2[%331, %c0_i32_374] : memref<1024x128xf32, #tpu.memory_space<any>> -> memref<1x128xf32, #tpu.memory_space<any>>
      %c6_i32_375 = arith.constant 6 : i32
      %c0_i32_376 = arith.constant 0 : i32
      %333 = tpu.memref_slice %arg6[%c6_i32_372, %c6_i32_375, %c0_i32_376] : memref<8x8x128xf32, #tpu.memory_space<vmem>> -> memref<1x1x128xf32, #tpu.memory_space<vmem>>
      %334 = tpu.memref_squeeze %333 : memref<1x1x128xf32, #tpu.memory_space<vmem>> -> memref<1x128xf32, #tpu.memory_space<vmem>>
      %335 = tpu.memref_slice %arg7[%c6_i32_373] : memref<8x!tpu.dma_semaphore, #tpu.memory_space<semaphore_mem>> -> memref<1x!tpu.dma_semaphore, #tpu.memory_space<semaphore_mem>>
      %336 = tpu.memref_squeeze %335 : memref<1x!tpu.dma_semaphore, #tpu.memory_space<semaphore_mem>> -> memref<!tpu.dma_semaphore, #tpu.memory_space<semaphore_mem>>
      tpu.enqueue_dma source(%332 : memref<1x128xf32, #tpu.memory_space<any>>) target(%334 : memref<1x128xf32, #tpu.memory_space<vmem>>) target_semaphore(%336 : memref<!tpu.dma_semaphore, #tpu.memory_space<semaphore_mem>>)
      %c6_377 = arith.constant 6 : index
      %c7_378 = arith.constant 7 : index
      %337 = memref.load %arg1[%c6_377, %c7_378] : memref<8x8xi32, #tpu.memory_space<smem>>
      %c7_i32_379 = arith.constant 7 : i32
      %c7_i32_380 = arith.constant 7 : i32
      %c0_i32_381 = arith.constant 0 : i32
      %338 = tpu.memref_slice %arg2[%337, %c0_i32_381] : memref<1024x128xf32, #tpu.memory_space<any>> -> memref<1x128xf32, #tpu.memory_space<any>>
      %c6_i32_382 = arith.constant 6 : i32
      %c0_i32_383 = arith.constant 0 : i32
      %339 = tpu.memref_slice %arg6[%c7_i32_379, %c6_i32_382, %c0_i32_383] : memref<8x8x128xf32, #tpu.memory_space<vmem>> -> memref<1x1x128xf32, #tpu.memory_space<vmem>>
      %340 = tpu.memref_squeeze %339 : memref<1x1x128xf32, #tpu.memory_space<vmem>> -> memref<1x128xf32, #tpu.memory_space<vmem>>
      %341 = tpu.memref_slice %arg7[%c7_i32_380] : memref<8x!tpu.dma_semaphore, #tpu.memory_space<semaphore_mem>> -> memref<1x!tpu.dma_semaphore, #tpu.memory_space<semaphore_mem>>
      %342 = tpu.memref_squeeze %341 : memref<1x!tpu.dma_semaphore, #tpu.memory_space<semaphore_mem>> -> memref<!tpu.dma_semaphore, #tpu.memory_space<semaphore_mem>>
      tpu.enqueue_dma source(%338 : memref<1x128xf32, #tpu.memory_space<any>>) target(%340 : memref<1x128xf32, #tpu.memory_space<vmem>>) target_semaphore(%342 : memref<!tpu.dma_semaphore, #tpu.memory_space<semaphore_mem>>)
      %c7_384 = arith.constant 7 : index
      %c0_385 = arith.constant 0 : index
      %343 = memref.load %arg1[%c7_384, %c0_385] : memref<8x8xi32, #tpu.memory_space<smem>>
      %c0_i32_386 = arith.constant 0 : i32
      %c0_i32_387 = arith.constant 0 : i32
      %c0_i32_388 = arith.constant 0 : i32
      %344 = tpu.memref_slice %arg2[%343, %c0_i32_388] : memref<1024x128xf32, #tpu.memory_space<any>> -> memref<1x128xf32, #tpu.memory_space<any>>
      %c7_i32_389 = arith.constant 7 : i32
      %c0_i32_390 = arith.constant 0 : i32
      %345 = tpu.memref_slice %arg6[%c0_i32_386, %c7_i32_389, %c0_i32_390] : memref<8x8x128xf32, #tpu.memory_space<vmem>> -> memref<1x1x128xf32, #tpu.memory_space<vmem>>
      %346 = tpu.memref_squeeze %345 : memref<1x1x128xf32, #tpu.memory_space<vmem>> -> memref<1x128xf32, #tpu.memory_space<vmem>>
      %347 = tpu.memref_slice %arg7[%c0_i32_387] : memref<8x!tpu.dma_semaphore, #tpu.memory_space<semaphore_mem>> -> memref<1x!tpu.dma_semaphore, #tpu.memory_space<semaphore_mem>>
      %348 = tpu.memref_squeeze %347 : memref<1x!tpu.dma_semaphore, #tpu.memory_space<semaphore_mem>> -> memref<!tpu.dma_semaphore, #tpu.memory_space<semaphore_mem>>
      tpu.enqueue_dma source(%344 : memref<1x128xf32, #tpu.memory_space<any>>) target(%346 : memref<1x128xf32, #tpu.memory_space<vmem>>) target_semaphore(%348 : memref<!tpu.dma_semaphore, #tpu.memory_space<semaphore_mem>>)
      %c7_391 = arith.constant 7 : index
      %c1_392 = arith.constant 1 : index
      %349 = memref.load %arg1[%c7_391, %c1_392] : memref<8x8xi32, #tpu.memory_space<smem>>
      %c1_i32_393 = arith.constant 1 : i32
      %c1_i32_394 = arith.constant 1 : i32
      %c0_i32_395 = arith.constant 0 : i32
      %350 = tpu.memref_slice %arg2[%349, %c0_i32_395] : memref<1024x128xf32, #tpu.memory_space<any>> -> memref<1x128xf32, #tpu.memory_space<any>>
      %c7_i32_396 = arith.constant 7 : i32
      %c0_i32_397 = arith.constant 0 : i32
      %351 = tpu.memref_slice %arg6[%c1_i32_393, %c7_i32_396, %c0_i32_397] : memref<8x8x128xf32, #tpu.memory_space<vmem>> -> memref<1x1x128xf32, #tpu.memory_space<vmem>>
      %352 = tpu.memref_squeeze %351 : memref<1x1x128xf32, #tpu.memory_space<vmem>> -> memref<1x128xf32, #tpu.memory_space<vmem>>
      %353 = tpu.memref_slice %arg7[%c1_i32_394] : memref<8x!tpu.dma_semaphore, #tpu.memory_space<semaphore_mem>> -> memref<1x!tpu.dma_semaphore, #tpu.memory_space<semaphore_mem>>
      %354 = tpu.memref_squeeze %353 : memref<1x!tpu.dma_semaphore, #tpu.memory_space<semaphore_mem>> -> memref<!tpu.dma_semaphore, #tpu.memory_space<semaphore_mem>>
      tpu.enqueue_dma source(%350 : memref<1x128xf32, #tpu.memory_space<any>>) target(%352 : memref<1x128xf32, #tpu.memory_space<vmem>>) target_semaphore(%354 : memref<!tpu.dma_semaphore, #tpu.memory_space<semaphore_mem>>)
      %c7_398 = arith.constant 7 : index
      %c2_399 = arith.constant 2 : index
      %355 = memref.load %arg1[%c7_398, %c2_399] : memref<8x8xi32, #tpu.memory_space<smem>>
      %c2_i32_400 = arith.constant 2 : i32
      %c2_i32_401 = arith.constant 2 : i32
      %c0_i32_402 = arith.constant 0 : i32
      %356 = tpu.memref_slice %arg2[%355, %c0_i32_402] : memref<1024x128xf32, #tpu.memory_space<any>> -> memref<1x128xf32, #tpu.memory_space<any>>
      %c7_i32_403 = arith.constant 7 : i32
      %c0_i32_404 = arith.constant 0 : i32
      %357 = tpu.memref_slice %arg6[%c2_i32_400, %c7_i32_403, %c0_i32_404] : memref<8x8x128xf32, #tpu.memory_space<vmem>> -> memref<1x1x128xf32, #tpu.memory_space<vmem>>
      %358 = tpu.memref_squeeze %357 : memref<1x1x128xf32, #tpu.memory_space<vmem>> -> memref<1x128xf32, #tpu.memory_space<vmem>>
      %359 = tpu.memref_slice %arg7[%c2_i32_401] : memref<8x!tpu.dma_semaphore, #tpu.memory_space<semaphore_mem>> -> memref<1x!tpu.dma_semaphore, #tpu.memory_space<semaphore_mem>>
      %360 = tpu.memref_squeeze %359 : memref<1x!tpu.dma_semaphore, #tpu.memory_space<semaphore_mem>> -> memref<!tpu.dma_semaphore, #tpu.memory_space<semaphore_mem>>
      tpu.enqueue_dma source(%356 : memref<1x128xf32, #tpu.memory_space<any>>) target(%358 : memref<1x128xf32, #tpu.memory_space<vmem>>) target_semaphore(%360 : memref<!tpu.dma_semaphore, #tpu.memory_space<semaphore_mem>>)
      %c7_405 = arith.constant 7 : index
      %c3_406 = arith.constant 3 : index
      %361 = memref.load %arg1[%c7_405, %c3_406] : memref<8x8xi32, #tpu.memory_space<smem>>
      %c3_i32_407 = arith.constant 3 : i32
      %c3_i32_408 = arith.constant 3 : i32
      %c0_i32_409 = arith.constant 0 : i32
      %362 = tpu.memref_slice %arg2[%361, %c0_i32_409] : memref<1024x128xf32, #tpu.memory_space<any>> -> memref<1x128xf32, #tpu.memory_space<any>>
      %c7_i32_410 = arith.constant 7 : i32
      %c0_i32_411 = arith.constant 0 : i32
      %363 = tpu.memref_slice %arg6[%c3_i32_407, %c7_i32_410, %c0_i32_411] : memref<8x8x128xf32, #tpu.memory_space<vmem>> -> memref<1x1x128xf32, #tpu.memory_space<vmem>>
      %364 = tpu.memref_squeeze %363 : memref<1x1x128xf32, #tpu.memory_space<vmem>> -> memref<1x128xf32, #tpu.memory_space<vmem>>
      %365 = tpu.memref_slice %arg7[%c3_i32_408] : memref<8x!tpu.dma_semaphore, #tpu.memory_space<semaphore_mem>> -> memref<1x!tpu.dma_semaphore, #tpu.memory_space<semaphore_mem>>
      %366 = tpu.memref_squeeze %365 : memref<1x!tpu.dma_semaphore, #tpu.memory_space<semaphore_mem>> -> memref<!tpu.dma_semaphore, #tpu.memory_space<semaphore_mem>>
      tpu.enqueue_dma source(%362 : memref<1x128xf32, #tpu.memory_space<any>>) target(%364 : memref<1x128xf32, #tpu.memory_space<vmem>>) target_semaphore(%366 : memref<!tpu.dma_semaphore, #tpu.memory_space<semaphore_mem>>)
      %c7_412 = arith.constant 7 : index
      %c4_413 = arith.constant 4 : index
      %367 = memref.load %arg1[%c7_412, %c4_413] : memref<8x8xi32, #tpu.memory_space<smem>>
      %c4_i32_414 = arith.constant 4 : i32
      %c4_i32_415 = arith.constant 4 : i32
      %c0_i32_416 = arith.constant 0 : i32
      %368 = tpu.memref_slice %arg2[%367, %c0_i32_416] : memref<1024x128xf32, #tpu.memory_space<any>> -> memref<1x128xf32, #tpu.memory_space<any>>
      %c7_i32_417 = arith.constant 7 : i32
      %c0_i32_418 = arith.constant 0 : i32
      %369 = tpu.memref_slice %arg6[%c4_i32_414, %c7_i32_417, %c0_i32_418] : memref<8x8x128xf32, #tpu.memory_space<vmem>> -> memref<1x1x128xf32, #tpu.memory_space<vmem>>
      %370 = tpu.memref_squeeze %369 : memref<1x1x128xf32, #tpu.memory_space<vmem>> -> memref<1x128xf32, #tpu.memory_space<vmem>>
      %371 = tpu.memref_slice %arg7[%c4_i32_415] : memref<8x!tpu.dma_semaphore, #tpu.memory_space<semaphore_mem>> -> memref<1x!tpu.dma_semaphore, #tpu.memory_space<semaphore_mem>>
      %372 = tpu.memref_squeeze %371 : memref<1x!tpu.dma_semaphore, #tpu.memory_space<semaphore_mem>> -> memref<!tpu.dma_semaphore, #tpu.memory_space<semaphore_mem>>
      tpu.enqueue_dma source(%368 : memref<1x128xf32, #tpu.memory_space<any>>) target(%370 : memref<1x128xf32, #tpu.memory_space<vmem>>) target_semaphore(%372 : memref<!tpu.dma_semaphore, #tpu.memory_space<semaphore_mem>>)
      %c7_419 = arith.constant 7 : index
      %c5_420 = arith.constant 5 : index
      %373 = memref.load %arg1[%c7_419, %c5_420] : memref<8x8xi32, #tpu.memory_space<smem>>
      %c5_i32_421 = arith.constant 5 : i32
      %c5_i32_422 = arith.constant 5 : i32
      %c0_i32_423 = arith.constant 0 : i32
      %374 = tpu.memref_slice %arg2[%373, %c0_i32_423] : memref<1024x128xf32, #tpu.memory_space<any>> -> memref<1x128xf32, #tpu.memory_space<any>>
      %c7_i32_424 = arith.constant 7 : i32
      %c0_i32_425 = arith.constant 0 : i32
      %375 = tpu.memref_slice %arg6[%c5_i32_421, %c7_i32_424, %c0_i32_425] : memref<8x8x128xf32, #tpu.memory_space<vmem>> -> memref<1x1x128xf32, #tpu.memory_space<vmem>>
      %376 = tpu.memref_squeeze %375 : memref<1x1x128xf32, #tpu.memory_space<vmem>> -> memref<1x128xf32, #tpu.memory_space<vmem>>
      %377 = tpu.memref_slice %arg7[%c5_i32_422] : memref<8x!tpu.dma_semaphore, #tpu.memory_space<semaphore_mem>> -> memref<1x!tpu.dma_semaphore, #tpu.memory_space<semaphore_mem>>
      %378 = tpu.memref_squeeze %377 : memref<1x!tpu.dma_semaphore, #tpu.memory_space<semaphore_mem>> -> memref<!tpu.dma_semaphore, #tpu.memory_space<semaphore_mem>>
      tpu.enqueue_dma source(%374 : memref<1x128xf32, #tpu.memory_space<any>>) target(%376 : memref<1x128xf32, #tpu.memory_space<vmem>>) target_semaphore(%378 : memref<!tpu.dma_semaphore, #tpu.memory_space<semaphore_mem>>)
      %c7_426 = arith.constant 7 : index
      %c6_427 = arith.constant 6 : index
      %379 = memref.load %arg1[%c7_426, %c6_427] : memref<8x8xi32, #tpu.memory_space<smem>>
      %c6_i32_428 = arith.constant 6 : i32
      %c6_i32_429 = arith.constant 6 : i32
      %c0_i32_430 = arith.constant 0 : i32
      %380 = tpu.memref_slice %arg2[%379, %c0_i32_430] : memref<1024x128xf32, #tpu.memory_space<any>> -> memref<1x128xf32, #tpu.memory_space<any>>
      %c7_i32_431 = arith.constant 7 : i32
      %c0_i32_432 = arith.constant 0 : i32
      %381 = tpu.memref_slice %arg6[%c6_i32_428, %c7_i32_431, %c0_i32_432] : memref<8x8x128xf32, #tpu.memory_space<vmem>> -> memref<1x1x128xf32, #tpu.memory_space<vmem>>
      %382 = tpu.memref_squeeze %381 : memref<1x1x128xf32, #tpu.memory_space<vmem>> -> memref<1x128xf32, #tpu.memory_space<vmem>>
      %383 = tpu.memref_slice %arg7[%c6_i32_429] : memref<8x!tpu.dma_semaphore, #tpu.memory_space<semaphore_mem>> -> memref<1x!tpu.dma_semaphore, #tpu.memory_space<semaphore_mem>>
      %384 = tpu.memref_squeeze %383 : memref<1x!tpu.dma_semaphore, #tpu.memory_space<semaphore_mem>> -> memref<!tpu.dma_semaphore, #tpu.memory_space<semaphore_mem>>
      tpu.enqueue_dma source(%380 : memref<1x128xf32, #tpu.memory_space<any>>) target(%382 : memref<1x128xf32, #tpu.memory_space<vmem>>) target_semaphore(%384 : memref<!tpu.dma_semaphore, #tpu.memory_space<semaphore_mem>>)
      %c7_433 = arith.constant 7 : index
      %c7_434 = arith.constant 7 : index
      %385 = memref.load %arg1[%c7_433, %c7_434] : memref<8x8xi32, #tpu.memory_space<smem>>
      %c7_i32_435 = arith.constant 7 : i32
      %c7_i32_436 = arith.constant 7 : i32
      %c0_i32_437 = arith.constant 0 : i32
      %386 = tpu.memref_slice %arg2[%385, %c0_i32_437] : memref<1024x128xf32, #tpu.memory_space<any>> -> memref<1x128xf32, #tpu.memory_space<any>>
      %c7_i32_438 = arith.constant 7 : i32
      %c0_i32_439 = arith.constant 0 : i32
      %387 = tpu.memref_slice %arg6[%c7_i32_435, %c7_i32_438, %c0_i32_439] : memref<8x8x128xf32, #tpu.memory_space<vmem>> -> memref<1x1x128xf32, #tpu.memory_space<vmem>>
      %388 = tpu.memref_squeeze %387 : memref<1x1x128xf32, #tpu.memory_space<vmem>> -> memref<1x128xf32, #tpu.memory_space<vmem>>
      %389 = tpu.memref_slice %arg7[%c7_i32_436] : memref<8x!tpu.dma_semaphore, #tpu.memory_space<semaphore_mem>> -> memref<1x!tpu.dma_semaphore, #tpu.memory_space<semaphore_mem>>
      %390 = tpu.memref_squeeze %389 : memref<1x!tpu.dma_semaphore, #tpu.memory_space<semaphore_mem>> -> memref<!tpu.dma_semaphore, #tpu.memory_space<semaphore_mem>>
      tpu.enqueue_dma source(%386 : memref<1x128xf32, #tpu.memory_space<any>>) target(%388 : memref<1x128xf32, #tpu.memory_space<vmem>>) target_semaphore(%390 : memref<!tpu.dma_semaphore, #tpu.memory_space<semaphore_mem>>)
      %c0_i32_440 = arith.constant 0 : i32
      %c0_i32_441 = arith.constant 0 : i32
      %c0_i32_442 = arith.constant 0 : i32
      %c0_i32_443 = arith.constant 0 : i32
      %391 = tpu.memref_slice %arg2[%c0_i32_442, %c0_i32_443] : memref<1024x128xf32, #tpu.memory_space<any>> -> memref<8x128xf32, #tpu.memory_space<any>>
      %c0_i32_444 = arith.constant 0 : i32
      %c0_i32_445 = arith.constant 0 : i32
      %392 = tpu.memref_slice %arg6[%c0_i32_440, %c0_i32_444, %c0_i32_445] : memref<8x8x128xf32, #tpu.memory_space<vmem>> -> memref<1x8x128xf32, #tpu.memory_space<vmem>>
      %393 = tpu.memref_squeeze %392 : memref<1x8x128xf32, #tpu.memory_space<vmem>> -> memref<8x128xf32, #tpu.memory_space<vmem>>
      %394 = tpu.memref_slice %arg7[%c0_i32_441] : memref<8x!tpu.dma_semaphore, #tpu.memory_space<semaphore_mem>> -> memref<1x!tpu.dma_semaphore, #tpu.memory_space<semaphore_mem>>
      %395 = tpu.memref_squeeze %394 : memref<1x!tpu.dma_semaphore, #tpu.memory_space<semaphore_mem>> -> memref<!tpu.dma_semaphore, #tpu.memory_space<semaphore_mem>>
      tpu.wait_dma2 semaphore(%395 : memref<!tpu.dma_semaphore, #tpu.memory_space<semaphore_mem>>) src(%391 : memref<8x128xf32, #tpu.memory_space<any>>) dst(%393 : memref<8x128xf32, #tpu.memory_space<vmem>>)
      %c1_i32_446 = arith.constant 1 : i32
      %c1_i32_447 = arith.constant 1 : i32
      %c0_i32_448 = arith.constant 0 : i32
      %c0_i32_449 = arith.constant 0 : i32
      %396 = tpu.memref_slice %arg2[%c0_i32_448, %c0_i32_449] : memref<1024x128xf32, #tpu.memory_space<any>> -> memref<8x128xf32, #tpu.memory_space<any>>
      %c0_i32_450 = arith.constant 0 : i32
      %c0_i32_451 = arith.constant 0 : i32
      %397 = tpu.memref_slice %arg6[%c1_i32_446, %c0_i32_450, %c0_i32_451] : memref<8x8x128xf32, #tpu.memory_space<vmem>> -> memref<1x8x128xf32, #tpu.memory_space<vmem>>
      %398 = tpu.memref_squeeze %397 : memref<1x8x128xf32, #tpu.memory_space<vmem>> -> memref<8x128xf32, #tpu.memory_space<vmem>>
      %399 = tpu.memref_slice %arg7[%c1_i32_447] : memref<8x!tpu.dma_semaphore, #tpu.memory_space<semaphore_mem>> -> memref<1x!tpu.dma_semaphore, #tpu.memory_space<semaphore_mem>>
      %400 = tpu.memref_squeeze %399 : memref<1x!tpu.dma_semaphore, #tpu.memory_space<semaphore_mem>> -> memref<!tpu.dma_semaphore, #tpu.memory_space<semaphore_mem>>
      tpu.wait_dma2 semaphore(%400 : memref<!tpu.dma_semaphore, #tpu.memory_space<semaphore_mem>>) src(%396 : memref<8x128xf32, #tpu.memory_space<any>>) dst(%398 : memref<8x128xf32, #tpu.memory_space<vmem>>)
      %c2_i32_452 = arith.constant 2 : i32
      %c2_i32_453 = arith.constant 2 : i32
      %c0_i32_454 = arith.constant 0 : i32
      %c0_i32_455 = arith.constant 0 : i32
      %401 = tpu.memref_slice %arg2[%c0_i32_454, %c0_i32_455] : memref<1024x128xf32, #tpu.memory_space<any>> -> memref<8x128xf32, #tpu.memory_space<any>>
      %c0_i32_456 = arith.constant 0 : i32
      %c0_i32_457 = arith.constant 0 : i32
      %402 = tpu.memref_slice %arg6[%c2_i32_452, %c0_i32_456, %c0_i32_457] : memref<8x8x128xf32, #tpu.memory_space<vmem>> -> memref<1x8x128xf32, #tpu.memory_space<vmem>>
      %403 = tpu.memref_squeeze %402 : memref<1x8x128xf32, #tpu.memory_space<vmem>> -> memref<8x128xf32, #tpu.memory_space<vmem>>
      %404 = tpu.memref_slice %arg7[%c2_i32_453] : memref<8x!tpu.dma_semaphore, #tpu.memory_space<semaphore_mem>> -> memref<1x!tpu.dma_semaphore, #tpu.memory_space<semaphore_mem>>
      %405 = tpu.memref_squeeze %404 : memref<1x!tpu.dma_semaphore, #tpu.memory_space<semaphore_mem>> -> memref<!tpu.dma_semaphore, #tpu.memory_space<semaphore_mem>>
      tpu.wait_dma2 semaphore(%405 : memref<!tpu.dma_semaphore, #tpu.memory_space<semaphore_mem>>) src(%401 : memref<8x128xf32, #tpu.memory_space<any>>) dst(%403 : memref<8x128xf32, #tpu.memory_space<vmem>>)
      %c3_i32_458 = arith.constant 3 : i32
      %c3_i32_459 = arith.constant 3 : i32
      %c0_i32_460 = arith.constant 0 : i32
      %c0_i32_461 = arith.constant 0 : i32
      %406 = tpu.memref_slice %arg2[%c0_i32_460, %c0_i32_461] : memref<1024x128xf32, #tpu.memory_space<any>> -> memref<8x128xf32, #tpu.memory_space<any>>
      %c0_i32_462 = arith.constant 0 : i32
      %c0_i32_463 = arith.constant 0 : i32
      %407 = tpu.memref_slice %arg6[%c3_i32_458, %c0_i32_462, %c0_i32_463] : memref<8x8x128xf32, #tpu.memory_space<vmem>> -> memref<1x8x128xf32, #tpu.memory_space<vmem>>
      %408 = tpu.memref_squeeze %407 : memref<1x8x128xf32, #tpu.memory_space<vmem>> -> memref<8x128xf32, #tpu.memory_space<vmem>>
      %409 = tpu.memref_slice %arg7[%c3_i32_459] : memref<8x!tpu.dma_semaphore, #tpu.memory_space<semaphore_mem>> -> memref<1x!tpu.dma_semaphore, #tpu.memory_space<semaphore_mem>>
      %410 = tpu.memref_squeeze %409 : memref<1x!tpu.dma_semaphore, #tpu.memory_space<semaphore_mem>> -> memref<!tpu.dma_semaphore, #tpu.memory_space<semaphore_mem>>
      tpu.wait_dma2 semaphore(%410 : memref<!tpu.dma_semaphore, #tpu.memory_space<semaphore_mem>>) src(%406 : memref<8x128xf32, #tpu.memory_space<any>>) dst(%408 : memref<8x128xf32, #tpu.memory_space<vmem>>)
      %c4_i32_464 = arith.constant 4 : i32
      %c4_i32_465 = arith.constant 4 : i32
      %c0_i32_466 = arith.constant 0 : i32
      %c0_i32_467 = arith.constant 0 : i32
      %411 = tpu.memref_slice %arg2[%c0_i32_466, %c0_i32_467] : memref<1024x128xf32, #tpu.memory_space<any>> -> memref<8x128xf32, #tpu.memory_space<any>>
      %c0_i32_468 = arith.constant 0 : i32
      %c0_i32_469 = arith.constant 0 : i32
      %412 = tpu.memref_slice %arg6[%c4_i32_464, %c0_i32_468, %c0_i32_469] : memref<8x8x128xf32, #tpu.memory_space<vmem>> -> memref<1x8x128xf32, #tpu.memory_space<vmem>>
      %413 = tpu.memref_squeeze %412 : memref<1x8x128xf32, #tpu.memory_space<vmem>> -> memref<8x128xf32, #tpu.memory_space<vmem>>
      %414 = tpu.memref_slice %arg7[%c4_i32_465] : memref<8x!tpu.dma_semaphore, #tpu.memory_space<semaphore_mem>> -> memref<1x!tpu.dma_semaphore, #tpu.memory_space<semaphore_mem>>
      %415 = tpu.memref_squeeze %414 : memref<1x!tpu.dma_semaphore, #tpu.memory_space<semaphore_mem>> -> memref<!tpu.dma_semaphore, #tpu.memory_space<semaphore_mem>>
      tpu.wait_dma2 semaphore(%415 : memref<!tpu.dma_semaphore, #tpu.memory_space<semaphore_mem>>) src(%411 : memref<8x128xf32, #tpu.memory_space<any>>) dst(%413 : memref<8x128xf32, #tpu.memory_space<vmem>>)
      %c5_i32_470 = arith.constant 5 : i32
      %c5_i32_471 = arith.constant 5 : i32
      %c0_i32_472 = arith.constant 0 : i32
      %c0_i32_473 = arith.constant 0 : i32
      %416 = tpu.memref_slice %arg2[%c0_i32_472, %c0_i32_473] : memref<1024x128xf32, #tpu.memory_space<any>> -> memref<8x128xf32, #tpu.memory_space<any>>
      %c0_i32_474 = arith.constant 0 : i32
      %c0_i32_475 = arith.constant 0 : i32
      %417 = tpu.memref_slice %arg6[%c5_i32_470, %c0_i32_474, %c0_i32_475] : memref<8x8x128xf32, #tpu.memory_space<vmem>> -> memref<1x8x128xf32, #tpu.memory_space<vmem>>
      %418 = tpu.memref_squeeze %417 : memref<1x8x128xf32, #tpu.memory_space<vmem>> -> memref<8x128xf32, #tpu.memory_space<vmem>>
      %419 = tpu.memref_slice %arg7[%c5_i32_471] : memref<8x!tpu.dma_semaphore, #tpu.memory_space<semaphore_mem>> -> memref<1x!tpu.dma_semaphore, #tpu.memory_space<semaphore_mem>>
      %420 = tpu.memref_squeeze %419 : memref<1x!tpu.dma_semaphore, #tpu.memory_space<semaphore_mem>> -> memref<!tpu.dma_semaphore, #tpu.memory_space<semaphore_mem>>
      tpu.wait_dma2 semaphore(%420 : memref<!tpu.dma_semaphore, #tpu.memory_space<semaphore_mem>>) src(%416 : memref<8x128xf32, #tpu.memory_space<any>>) dst(%418 : memref<8x128xf32, #tpu.memory_space<vmem>>)
      %c6_i32_476 = arith.constant 6 : i32
      %c6_i32_477 = arith.constant 6 : i32
      %c0_i32_478 = arith.constant 0 : i32
      %c0_i32_479 = arith.constant 0 : i32
      %421 = tpu.memref_slice %arg2[%c0_i32_478, %c0_i32_479] : memref<1024x128xf32, #tpu.memory_space<any>> -> memref<8x128xf32, #tpu.memory_space<any>>
      %c0_i32_480 = arith.constant 0 : i32
      %c0_i32_481 = arith.constant 0 : i32
      %422 = tpu.memref_slice %arg6[%c6_i32_476, %c0_i32_480, %c0_i32_481] : memref<8x8x128xf32, #tpu.memory_space<vmem>> -> memref<1x8x128xf32, #tpu.memory_space<vmem>>
      %423 = tpu.memref_squeeze %422 : memref<1x8x128xf32, #tpu.memory_space<vmem>> -> memref<8x128xf32, #tpu.memory_space<vmem>>
      %424 = tpu.memref_slice %arg7[%c6_i32_477] : memref<8x!tpu.dma_semaphore, #tpu.memory_space<semaphore_mem>> -> memref<1x!tpu.dma_semaphore, #tpu.memory_space<semaphore_mem>>
      %425 = tpu.memref_squeeze %424 : memref<1x!tpu.dma_semaphore, #tpu.memory_space<semaphore_mem>> -> memref<!tpu.dma_semaphore, #tpu.memory_space<semaphore_mem>>
      tpu.wait_dma2 semaphore(%425 : memref<!tpu.dma_semaphore, #tpu.memory_space<semaphore_mem>>) src(%421 : memref<8x128xf32, #tpu.memory_space<any>>) dst(%423 : memref<8x128xf32, #tpu.memory_space<vmem>>)
      %c7_i32_482 = arith.constant 7 : i32
      %c7_i32_483 = arith.constant 7 : i32
      %c0_i32_484 = arith.constant 0 : i32
      %c0_i32_485 = arith.constant 0 : i32
      %426 = tpu.memref_slice %arg2[%c0_i32_484, %c0_i32_485] : memref<1024x128xf32, #tpu.memory_space<any>> -> memref<8x128xf32, #tpu.memory_space<any>>
      %c0_i32_486 = arith.constant 0 : i32
      %c0_i32_487 = arith.constant 0 : i32
      %427 = tpu.memref_slice %arg6[%c7_i32_482, %c0_i32_486, %c0_i32_487] : memref<8x8x128xf32, #tpu.memory_space<vmem>> -> memref<1x8x128xf32, #tpu.memory_space<vmem>>
      %428 = tpu.memref_squeeze %427 : memref<1x8x128xf32, #tpu.memory_space<vmem>> -> memref<8x128xf32, #tpu.memory_space<vmem>>
      %429 = tpu.memref_slice %arg7[%c7_i32_483] : memref<8x!tpu.dma_semaphore, #tpu.memory_space<semaphore_mem>> -> memref<1x!tpu.dma_semaphore, #tpu.memory_space<semaphore_mem>>
      %430 = tpu.memref_squeeze %429 : memref<1x!tpu.dma_semaphore, #tpu.memory_space<semaphore_mem>> -> memref<!tpu.dma_semaphore, #tpu.memory_space<semaphore_mem>>
      tpu.wait_dma2 semaphore(%430 : memref<!tpu.dma_semaphore, #tpu.memory_space<semaphore_mem>>) src(%426 : memref<8x128xf32, #tpu.memory_space<any>>) dst(%428 : memref<8x128xf32, #tpu.memory_space<vmem>>)
      %c0_488 = arith.constant 0 : index
      %c0_489 = arith.constant 0 : index
      %c0_490 = arith.constant 0 : index
      %431 = vector.load %arg6[%c0_488, %c0_489, %c0_490] : memref<8x8x128xf32, #tpu.memory_space<vmem>>, vector<8x8x128xf32>
      %432 = arith.mulf %431, %431 : vector<8x8x128xf32>
      %cst_491 = arith.constant dense<0.000000e+00> : vector<8x8xf32>
      %433 = vector.multi_reduction <add>, %432, %cst_491 [2] : vector<8x8x128xf32> to vector<8x8xf32>
      %434 = vector.shape_cast %433 : vector<8x8xf32> to vector<8x8x1xf32>
      %cst_492 = arith.constant 1.000000e-30 : f32
      %435 = vector.broadcast %cst_492 : f32 to vector<8x8x1xf32>
      %436 = arith.maximumf %434, %435 : vector<8x8x1xf32>
      %437 = math.rsqrt %436 : vector<8x8x1xf32>
      %cst_493 = arith.constant 1.000000e+00 : f32
      %438 = vector.broadcast %cst_493 : f32 to vector<8x8x1xf32>
      %439 = arith.cmpf ogt, %434, %438 : vector<8x8x1xf32>
      %cst_494 = arith.constant 1.000000e+00 : f32
      %440 = vector.broadcast %cst_494 : f32 to vector<8x8x1xf32>
      %441 = arith.mulf %440, %437 : vector<8x8x1xf32>
      %cst_495 = arith.constant 1.000000e+00 : f32
      %442 = vector.broadcast %cst_495 : f32 to vector<8x8x1xf32>
      %443 = arith.select %439, %441, %442 : vector<8x8x1xi1>, vector<8x8x1xf32>
      %444 = vector.broadcast %443 : vector<8x8x1xf32> to vector<8x8x128xf32>
      %445 = arith.mulf %431, %444 : vector<8x8x128xf32>
      %cst_496 = arith.constant dense<0.000000e+00> : vector<8x128xf32>
      %446 = vector.multi_reduction <add>, %445, %cst_496 [0] : vector<8x8x128xf32> to vector<8x128xf32>
      %cst_497 = arith.constant 1.250000e-01 : f32
      %447 = vector.broadcast %cst_497 : f32 to vector<8x128xf32>
      %448 = arith.mulf %446, %447 : vector<8x128xf32>
      %c0_498 = arith.constant 0 : index
      %c0_499 = arith.constant 0 : index
      %449 = vector.load %arg5[%c0_498, %c0_499] : memref<8x128xf32, #tpu.memory_space<vmem>>, vector<8x128xf32>
      tpu.vector_store %arg5[%c0_498, %c0_499], %448 {strides = array<i32>} : memref<8x128xf32, #tpu.memory_space<vmem>>, vector<8x128xf32>,
    } else {
    }
    %c0 = arith.constant 0 : index
    %c0_1 = arith.constant 0 : index
    %3 = vector.load %arg5[%c0, %c0_1] : memref<8x128xf32, #tpu.memory_space<vmem>>, vector<8x128xf32>
    %c0_2 = arith.constant 0 : index
    %c0_3 = arith.constant 0 : index
    %4 = vector.load %arg3[%c0_2, %c0_3] : memref<512x128xf32, #tpu.memory_space<vmem>>, vector<512x128xf32>
    %cst = arith.constant dense<0.000000e+00> : vector<8x512xf32>
    %5 = tpu.matmul %3, %4, %cst {dimension_numbers = #tpu.dot_dimension_numbers<[1], [1], [0], [0], [0, 0, 1, 0], [], []>} : vector<8x128xf32>, vector<512x128xf32>, vector<8x512xf32> -> vector<8x512xf32>
    %c0_4 = arith.constant 0 : index
    %c0_5 = arith.constant 0 : index
    %6 = vector.load %arg4[%c0_4, %c0_5] : memref<8x512xf32, #tpu.memory_space<vmem>>, vector<8x512xf32>
    tpu.vector_store %arg4[%c0_4, %c0_5], %5 {strides = array<i32>} : memref<8x512xf32, #tpu.memory_space<vmem>>, vector<8x512xf32>,
    return
  }
  func.func @transform_1(%arg0: i32, %arg1: memref<8x8xi32, #tpu.memory_space<smem>>) -> (i32, i32) {
    %c0_i32 = arith.constant 0 : i32
    %c0_i32_0 = arith.constant 0 : i32
    return %arg0, %c0_i32 : i32, i32
  }
  func.func @transform_2(%arg0: i32, %arg1: memref<8x8xi32, #tpu.memory_space<smem>>) -> (i32, i32) {
    %c0_i32 = arith.constant 0 : i32
    %c0_i32_0 = arith.constant 0 : i32
    return %c0_i32, %arg0 : i32, i32
  }
}

</mosaic_0001>

<llo_original>
// kernel: tpu_custom_call.1
$region0: #{tpu_custom_call.1}
  #allocation0 [shape = 'u32[]', space=smem, size = 0x4, offset = 0x4, fixed_abs, tag = 'smem constant byte address 0x4 - core index']
  #allocation1 [shape = 'u32[144,128]{1,0:T(1,128)}', space=vmem, size = 0x12000, scoped, tag = 'internal scratch']
  #allocation2 [shape = 'f32[8,128]{1,0:T(8,128)}', space=vmem, size = 0x1000, scoped, tag = 'scratch operand']
  #allocation3 [shape = 'f32[8,8,128]{2,1,0:T(8,128)}', space=vmem, size = 0x8000, scoped, tag = 'scratch operand']
  #allocation4 [shape = 's32[8]{0}', space=sflag, size = 0x20, scoped, tag = 'scratch operand']
  #allocation5 [shape = 's32[1]{0}', space=sflag, size = 0x4, scoped, tag = 'scoped memory for tpu_custom_call.1']
  #allocation6 [shape = 'u8[4096]{0}', space=smem, size = 0x1000, scoped, tag = 'prefetched SMEM operand 0']
  #allocation11 [shape = 's32[]', space=sflag, size = 0x4, offset = 0, fixed_abs, tag = 'sflag constant byte address 0x0 - dummy sync flag']
  #allocation12 [shape = 's32[]', space=sflag, size = 0x4, offset = 0, fixed_abs, tag = 'sflag constant byte address 0x0 - dummy sync flag']
  #allocation13 [shape = 'u32[]', space=smem, size = 0x4, offset = 0x44, fixed_abs, tag = 'smem constant byte address 0x44 - assertion arg 0']
  #allocation14 [shape = 'u32[]', space=smem, size = 0x4, offset = 0x48, fixed_abs, tag = 'smem constant byte address 0x48 - assertion arg 1']
  #allocation15 [shape = 's32[]', space=sflag, size = 0x4, offset = 0, fixed_abs, tag = 'sflag constant byte address 0x0 - dummy sync flag']
  #allocation16 [shape = 's32[]', space=sflag, size = 0x4, offset = 0, fixed_abs, tag = 'sflag constant byte address 0x0 - dummy sync flag']
  #allocation17 [shape = 's32[]', space=sflag, size = 0x4, offset = 0, fixed_abs, tag = 'sflag constant byte address 0x0 - dummy sync flag']
  #allocation18 [shape = 's32[]', space=sflag, size = 0x4, offset = 0, fixed_abs, tag = 'sflag constant byte address 0x0 - dummy sync flag']
  #allocation19 [shape = 's32[]', space=sflag, size = 0x4, offset = 0, fixed_abs, tag = 'sflag constant byte address 0x0 - dummy sync flag']
  #allocation20 [shape = 's32[]', space=sflag, size = 0x4, offset = 0, fixed_abs, tag = 'sflag constant byte address 0x0 - dummy sync flag']
  #allocation21 [shape = 's32[]', space=sflag, size = 0x4, offset = 0, fixed_abs, tag = 'sflag constant byte address 0x0 - dummy sync flag']
  #allocation22 [shape = 's32[]', space=sflag, size = 0x4, offset = 0, fixed_abs, tag = 'sflag constant byte address 0x0 - dummy sync flag']
  #allocation23 [shape = 's32[]', space=sflag, size = 0x4, offset = 0, fixed_abs, tag = 'sflag constant byte address 0x0 - dummy sync flag']
  #allocation24 [shape = 's32[]', space=sflag, size = 0x4, offset = 0, fixed_abs, tag = 'sflag constant byte address 0x0 - dummy sync flag']
  #allocation25 [shape = 's32[]', space=sflag, size = 0x4, offset = 0, fixed_abs, tag = 'sflag constant byte address 0x0 - dummy sync flag']
  #allocation26 [shape = 's32[]', space=sflag, size = 0x4, offset = 0, fixed_abs, tag = 'sflag constant byte address 0x0 - dummy sync flag']
  #allocation27 [shape = 's32[]', space=sflag, size = 0x4, offset = 0, fixed_abs, tag = 'sflag constant byte address 0x0 - dummy sync flag']
  #allocation28 [shape = 's32[]', space=sflag, size = 0x4, offset = 0, fixed_abs, tag = 'sflag constant byte address 0x0 - dummy sync flag']
  #allocation29 [shape = 's32[]', space=sflag, size = 0x4, offset = 0, fixed_abs, tag = 'sflag constant byte address 0x0 - dummy sync flag']
  #allocation30 [shape = 's32[]', space=sflag, size = 0x4, offset = 0, fixed_abs, tag = 'sflag constant byte address 0x0 - dummy sync flag']
  #allocation31 [shape = 's32[]', space=sflag, size = 0x4, offset = 0, fixed_abs, tag = 'sflag constant byte address 0x0 - dummy sync flag']
  #allocation32 [shape = 's32[]', space=sflag, size = 0x4, offset = 0, fixed_abs, tag = 'sflag constant byte address 0x0 - dummy sync flag']
  #allocation33 [shape = 's32[]', space=sflag, size = 0x4, offset = 0, fixed_abs, tag = 'sflag constant byte address 0x0 - dummy sync flag']
  #allocation34 [shape = 's32[]', space=sflag, size = 0x4, offset = 0, fixed_abs, tag = 'sflag constant byte address 0x0 - dummy sync flag']
  #allocation35 [shape = 's32[]', space=sflag, size = 0x4, offset = 0, fixed_abs, tag = 'sflag constant byte address 0x0 - dummy sync flag']
  #allocation36 [shape = 's32[]', space=sflag, size = 0x4, offset = 0, fixed_abs, tag = 'sflag constant byte address 0x0 - dummy sync flag']
  #allocation37 [shape = 's32[]', space=sflag, size = 0x4, offset = 0, fixed_abs, tag = 'sflag constant byte address 0x0 - dummy sync flag']
  #allocation38 [shape = 's32[]', space=sflag, size = 0x4, offset = 0, fixed_abs, tag = 'sflag constant byte address 0x0 - dummy sync flag']
  #allocation39 [shape = 's32[]', space=sflag, size = 0x4, offset = 0, fixed_abs, tag = 'sflag constant byte address 0x0 - dummy sync flag']
  #allocation40 [shape = 's32[]', space=sflag, size = 0x4, offset = 0, fixed_abs, tag = 'sflag constant byte address 0x0 - dummy sync flag']
  #allocation41 [shape = 's32[]', space=sflag, size = 0x4, offset = 0, fixed_abs, tag = 'sflag constant byte address 0x0 - dummy sync flag']
  #allocation42 [shape = 's32[]', space=sflag, size = 0x4, offset = 0, fixed_abs, tag = 'sflag constant byte address 0x0 - dummy sync flag']
  #allocation43 [shape = 's32[]', space=sflag, size = 0x4, offset = 0, fixed_abs, tag = 'sflag constant byte address 0x0 - dummy sync flag']
  #allocation44 [shape = 's32[]', space=sflag, size = 0x4, offset = 0, fixed_abs, tag = 'sflag constant byte address 0x0 - dummy sync flag']
  #allocation45 [shape = 's32[]', space=sflag, size = 0x4, offset = 0, fixed_abs, tag = 'sflag constant byte address 0x0 - dummy sync flag']
  #allocation46 [shape = 's32[]', space=sflag, size = 0x4, offset = 0, fixed_abs, tag = 'sflag constant byte address 0x0 - dummy sync flag']
  #allocation47 [shape = 's32[]', space=sflag, size = 0x4, offset = 0, fixed_abs, tag = 'sflag constant byte address 0x0 - dummy sync flag']
  #allocation48 [shape = 's32[]', space=sflag, size = 0x4, offset = 0, fixed_abs, tag = 'sflag constant byte address 0x0 - dummy sync flag']
  #allocation49 [shape = 's32[]', space=sflag, size = 0x4, offset = 0, fixed_abs, tag = 'sflag constant byte address 0x0 - dummy sync flag']
  #allocation50 [shape = 's32[]', space=sflag, size = 0x4, offset = 0, fixed_abs, tag = 'sflag constant byte address 0x0 - dummy sync flag']
  #allocation51 [shape = 's32[]', space=sflag, size = 0x4, offset = 0, fixed_abs, tag = 'sflag constant byte address 0x0 - dummy sync flag']
  #allocation52 [shape = 's32[]', space=sflag, size = 0x4, offset = 0, fixed_abs, tag = 'sflag constant byte address 0x0 - dummy sync flag']
  #allocation53 [shape = 's32[]', space=sflag, size = 0x4, offset = 0, fixed_abs, tag = 'sflag constant byte address 0x0 - dummy sync flag']
  #allocation54 [shape = 's32[]', space=sflag, size = 0x4, offset = 0, fixed_abs, tag = 'sflag constant byte address 0x0 - dummy sync flag']
  #allocation55 [shape = 's32[]', space=sflag, size = 0x4, offset = 0, fixed_abs, tag = 'sflag constant byte address 0x0 - dummy sync flag']
  #allocation56 [shape = 's32[]', space=sflag, size = 0x4, offset = 0, fixed_abs, tag = 'sflag constant byte address 0x0 - dummy sync flag']
  #allocation57 [shape = 's32[]', space=sflag, size = 0x4, offset = 0, fixed_abs, tag = 'sflag constant byte address 0x0 - dummy sync flag']
  #allocation58 [shape = 's32[]', space=sflag, size = 0x4, offset = 0, fixed_abs, tag = 'sflag constant byte address 0x0 - dummy sync flag']
  #allocation59 [shape = 's32[]', space=sflag, size = 0x4, offset = 0, fixed_abs, tag = 'sflag constant byte address 0x0 - dummy sync flag']
  #allocation60 [shape = 's32[]', space=sflag, size = 0x4, offset = 0, fixed_abs, tag = 'sflag constant byte address 0x0 - dummy sync flag']
  #allocation61 [shape = 's32[]', space=sflag, size = 0x4, offset = 0, fixed_abs, tag = 'sflag constant byte address 0x0 - dummy sync flag']
  #allocation62 [shape = 's32[]', space=sflag, size = 0x4, offset = 0, fixed_abs, tag = 'sflag constant byte address 0x0 - dummy sync flag']
  #allocation63 [shape = 's32[]', space=sflag, size = 0x4, offset = 0, fixed_abs, tag = 'sflag constant byte address 0x0 - dummy sync flag']
  #allocation64 [shape = 's32[]', space=sflag, size = 0x4, offset = 0, fixed_abs, tag = 'sflag constant byte address 0x0 - dummy sync flag']
  #allocation65 [shape = 's32[]', space=sflag, size = 0x4, offset = 0, fixed_abs, tag = 'sflag constant byte address 0x0 - dummy sync flag']
  #allocation66 [shape = 's32[]', space=sflag, size = 0x4, offset = 0, fixed_abs, tag = 'sflag constant byte address 0x0 - dummy sync flag']
  #allocation67 [shape = 's32[]', space=sflag, size = 0x4, offset = 0, fixed_abs, tag = 'sflag constant byte address 0x0 - dummy sync flag']
  #allocation68 [shape = 's32[]', space=sflag, size = 0x4, offset = 0, fixed_abs, tag = 'sflag constant byte address 0x0 - dummy sync flag']
  #allocation69 [shape = 's32[]', space=sflag, size = 0x4, offset = 0, fixed_abs, tag = 'sflag constant byte address 0x0 - dummy sync flag']
  #allocation70 [shape = 's32[]', space=sflag, size = 0x4, offset = 0, fixed_abs, tag = 'sflag constant byte address 0x0 - dummy sync flag']
  #allocation71 [shape = 's32[]', space=sflag, size = 0x4, offset = 0, fixed_abs, tag = 'sflag constant byte address 0x0 - dummy sync flag']
  #allocation72 [shape = 's32[]', space=sflag, size = 0x4, offset = 0, fixed_abs, tag = 'sflag constant byte address 0x0 - dummy sync flag']
  #allocation73 [shape = 's32[]', space=sflag, size = 0x4, offset = 0, fixed_abs, tag = 'sflag constant byte address 0x0 - dummy sync flag']
  #allocation74 [shape = 's32[]', space=sflag, size = 0x4, offset = 0, fixed_abs, tag = 'sflag constant byte address 0x0 - dummy sync flag']
  #allocation75 [shape = 's32[]', space=sflag, size = 0x4, offset = 0, fixed_abs, tag = 'sflag constant byte address 0x0 - dummy sync flag']
  #allocation76 [shape = 's32[]', space=sflag, size = 0x4, offset = 0, fixed_abs, tag = 'sflag constant byte address 0x0 - dummy sync flag']
  #allocation77 [shape = 's32[]', space=sflag, size = 0x4, offset = 0, fixed_abs, tag = 'sflag constant byte address 0x0 - dummy sync flag']
  #allocation78 [shape = 's32[]', space=sflag, size = 0x4, offset = 0, fixed_abs, tag = 'sflag constant byte address 0x0 - dummy sync flag']
  #allocation79 [shape = 's32[]', space=sflag, size = 0x4, offset = 0, fixed_abs, tag = 'sflag constant byte address 0x0 - dummy sync flag']
  #allocation80 [shape = 's32[]', space=sflag, size = 0x4, offset = 0, fixed_abs, tag = 'sflag constant byte address 0x0 - dummy sync flag']
  #allocation81 [shape = 's32[]', space=sflag, size = 0x4, offset = 0, fixed_abs, tag = 'sflag constant byte address 0x0 - dummy sync flag']
  #allocation82 [shape = 's32[]', space=sflag, size = 0x4, offset = 0, fixed_abs, tag = 'sflag constant byte address 0x0 - dummy sync flag']
  #allocation83 [shape = 's32[]', space=sflag, size = 0x4, offset = 0, fixed_abs, tag = 'sflag constant byte address 0x0 - dummy sync flag']
  #allocation84 [shape = 's32[]', space=sflag, size = 0x4, offset = 0, fixed_abs, tag = 'sflag constant byte address 0x0 - dummy sync flag']
  #allocation85 [shape = 's32[]', space=sflag, size = 0x4, offset = 0, fixed_abs, tag = 'sflag constant byte address 0x0 - dummy sync flag']
  #allocation86 [shape = 's32[]', space=sflag, size = 0x4, offset = 0, fixed_abs, tag = 'sflag constant byte address 0x0 - dummy sync flag']
  #allocation87 [shape = 's32[]', space=sflag, size = 0x4, offset = 0, fixed_abs, tag = 'sflag constant byte address 0x0 - dummy sync flag']
  #allocation88 [shape = 's32[]', space=sflag, size = 0x4, offset = 0, fixed_abs, tag = 'sflag constant byte address 0x0 - dummy sync flag']
  #allocation89 [shape = 's32[]', space=sflag, size = 0x4, offset = 0, fixed_abs, tag = 'sflag constant byte address 0x0 - dummy sync flag']
  #allocation90 [shape = 's32[]', space=sflag, size = 0x4, offset = 0, fixed_abs, tag = 'sflag constant byte address 0x0 - dummy sync flag']
  #allocation91 [shape = 's32[]', space=sflag, size = 0x4, offset = 0, fixed_abs, tag = 'sflag constant byte address 0x0 - dummy sync flag']
  #allocation92 [shape = 's32[]', space=sflag, size = 0x4, offset = 0, fixed_abs, tag = 'sflag constant byte address 0x0 - dummy sync flag']
  #allocation93 [shape = 's32[]', space=sflag, size = 0x4, offset = 0, fixed_abs, tag = 'sflag constant byte address 0x0 - dummy sync flag']
  #allocation94 [shape = 's32[]', space=sflag, size = 0x4, offset = 0, fixed_abs, tag = 'sflag constant byte address 0x0 - dummy sync flag']
  #allocation95 [shape = 's32[]', space=sflag, size = 0x4, offset = 0, fixed_abs, tag = 'sflag constant byte address 0x0 - dummy sync flag']
  #allocation96 [shape = 's32[]', space=sflag, size = 0x4, offset = 0, fixed_abs, tag = 'sflag constant byte address 0x0 - dummy sync flag']
  #allocation97 [shape = 's32[]', space=sflag, size = 0x4, offset = 0, fixed_abs, tag = 'sflag constant byte address 0x0 - dummy sync flag']
  #allocation98 [shape = 's32[]', space=sflag, size = 0x4, offset = 0, fixed_abs, tag = 'sflag constant byte address 0x0 - dummy sync flag']
  #allocation99 [shape = 's32[]', space=sflag, size = 0x4, offset = 0, fixed_abs, tag = 'sflag constant byte address 0x0 - dummy sync flag']
  #allocation100 [shape = 's32[]', space=sflag, size = 0x4, offset = 0, fixed_abs, tag = 'sflag constant byte address 0x0 - dummy sync flag']
  #allocation101 [shape = 's32[]', space=sflag, size = 0x4, offset = 0, fixed_abs, tag = 'sflag constant byte address 0x0 - dummy sync flag']
  #allocation102 [shape = 's32[]', space=sflag, size = 0x4, offset = 0, fixed_abs, tag = 'sflag constant byte address 0x0 - dummy sync flag']
  #allocation103 [shape = 's32[]', space=sflag, size = 0x4, offset = 0, fixed_abs, tag = 'sflag constant byte address 0x0 - dummy sync flag']
  #allocation104 [shape = 's32[]', space=sflag, size = 0x4, offset = 0, fixed_abs, tag = 'sflag constant byte address 0x0 - dummy sync flag']
  #allocation105 [shape = 's32[]', space=sflag, size = 0x4, offset = 0, fixed_abs, tag = 'sflag constant byte address 0x0 - dummy sync flag']
  #allocation106 [shape = 's32[]', space=sflag, size = 0x4, offset = 0, fixed_abs, tag = 'sflag constant byte address 0x0 - dummy sync flag']
  #allocation107 [shape = 's32[]', space=sflag, size = 0x4, offset = 0, fixed_abs, tag = 'sflag constant byte address 0x0 - dummy sync flag']
  #allocation108 [shape = 's32[]', space=sflag, size = 0x4, offset = 0, fixed_abs, tag = 'sflag constant byte address 0x0 - dummy sync flag']
  #allocation109 [shape = 's32[]', space=sflag, size = 0x4, offset = 0, fixed_abs, tag = 'sflag constant byte address 0x0 - dummy sync flag']
  #allocation110 [shape = 's32[]', space=sflag, size = 0x4, offset = 0, fixed_abs, tag = 'sflag constant byte address 0x0 - dummy sync flag']
  #allocation111 [shape = 's32[]', space=sflag, size = 0x4, offset = 0, fixed_abs, tag = 'sflag constant byte address 0x0 - dummy sync flag']
  #allocation112 [shape = 's32[]', space=sflag, size = 0x4, offset = 0, fixed_abs, tag = 'sflag constant byte address 0x0 - dummy sync flag']
  #allocation113 [shape = 's32[]', space=sflag, size = 0x4, offset = 0, fixed_abs, tag = 'sflag constant byte address 0x0 - dummy sync flag']
  #allocation114 [shape = 's32[]', space=sflag, size = 0x4, offset = 0, fixed_abs, tag = 'sflag constant byte address 0x0 - dummy sync flag']
  #allocation115 [shape = 's32[]', space=sflag, size = 0x4, offset = 0, fixed_abs, tag = 'sflag constant byte address 0x0 - dummy sync flag']
  #allocation116 [shape = 's32[]', space=sflag, size = 0x4, offset = 0, fixed_abs, tag = 'sflag constant byte address 0x0 - dummy sync flag']
  #allocation117 [shape = 's32[]', space=sflag, size = 0x4, offset = 0, fixed_abs, tag = 'sflag constant byte address 0x0 - dummy sync flag']
  #allocation118 [shape = 's32[]', space=sflag, size = 0x4, offset = 0, fixed_abs, tag = 'sflag constant byte address 0x0 - dummy sync flag']
  #allocation119 [shape = 's32[]', space=sflag, size = 0x4, offset = 0, fixed_abs, tag = 'sflag constant byte address 0x0 - dummy sync flag']
  #allocation120 [shape = 's32[]', space=sflag, size = 0x4, offset = 0, fixed_abs, tag = 'sflag constant byte address 0x0 - dummy sync flag']
  #allocation121 [shape = 's32[]', space=sflag, size = 0x4, offset = 0, fixed_abs, tag = 'sflag constant byte address 0x0 - dummy sync flag']
  #allocation122 [shape = 's32[]', space=sflag, size = 0x4, offset = 0, fixed_abs, tag = 'sflag constant byte address 0x0 - dummy sync flag']
  #allocation123 [shape = 's32[]', space=sflag, size = 0x4, offset = 0, fixed_abs, tag = 'sflag constant byte address 0x0 - dummy sync flag']
  #allocation124 [shape = 's32[]', space=sflag, size = 0x4, offset = 0, fixed_abs, tag = 'sflag constant byte address 0x0 - dummy sync flag']
  #allocation125 [shape = 's32[]', space=sflag, size = 0x4, offset = 0, fixed_abs, tag = 'sflag constant byte address 0x0 - dummy sync flag']
  #allocation126 [shape = 's32[]', space=sflag, size = 0x4, offset = 0, fixed_abs, tag = 'sflag constant byte address 0x0 - dummy sync flag']
  #allocation127 [shape = 's32[]', space=sflag, size = 0x4, offset = 0, fixed_abs, tag = 'sflag constant byte address 0x0 - dummy sync flag']
  #allocation128 [shape = 's32[]', space=sflag, size = 0x4, offset = 0, fixed_abs, tag = 'sflag constant byte address 0x0 - dummy sync flag']
  #allocation129 [shape = 's32[]', space=sflag, size = 0x4, offset = 0, fixed_abs, tag = 'sflag constant byte address 0x0 - dummy sync flag']
  #allocation130 [shape = 's32[]', space=sflag, size = 0x4, offset = 0, fixed_abs, tag = 'sflag constant byte address 0x0 - dummy sync flag']
  #allocation131 [shape = 's32[]', space=sflag, size = 0x4, offset = 0, fixed_abs, tag = 'sflag constant byte address 0x0 - dummy sync flag']
  #allocation132 [shape = 's32[]', space=sflag, size = 0x4, offset = 0, fixed_abs, tag = 'sflag constant byte address 0x0 - dummy sync flag']
  #allocation133 [shape = 's32[]', space=sflag, size = 0x4, offset = 0, fixed_abs, tag = 'sflag constant byte address 0x0 - dummy sync flag']
  #allocation134 [shape = 's32[]', space=sflag, size = 0x4, offset = 0, fixed_abs, tag = 'sflag constant byte address 0x0 - dummy sync flag']
  #allocation135 [shape = 's32[]', space=sflag, size = 0x4, offset = 0, fixed_abs, tag = 'sflag constant byte address 0x0 - dummy sync flag']
  #allocation136 [shape = 's32[]', space=sflag, size = 0x4, offset = 0, fixed_abs, tag = 'sflag constant byte address 0x0 - dummy sync flag']
  #allocation137 [shape = 's32[]', space=sflag, size = 0x4, offset = 0, fixed_abs, tag = 'sflag constant byte address 0x0 - dummy sync flag']
  #allocation138 [shape = 's32[]', space=sflag, size = 0x4, offset = 0, fixed_abs, tag = 'sflag constant byte address 0x0 - dummy sync flag']
  #allocation139 [shape = 's32[]', space=sflag, size = 0x4, offset = 0, fixed_abs, tag = 'sflag constant byte address 0x0 - dummy sync flag']
  #allocation140 [shape = 's32[]', space=sflag, size = 0x4, offset = 0, fixed_abs, tag = 'sflag constant byte address 0x0 - dummy sync flag']
  %s0 = inlined_call_operand.hbm [shape: s32[8,8], index: 0, kind: input, shape index: {}]
  %s1 = inlined_call_operand.hbm [shape: f32[1024,128], index: 1, kind: input, shape index: {}]
  %s2 = inlined_call_operand.hbm [shape: f32[1024,128], index: 2, kind: input, shape index: {}]
  %s3 = inlined_call_operand.hbm [shape: f32[8,1024], index: 3, kind: output, shape index: {}]
  %s4 = sld [smem:[#allocation0]]
  $region301: #{tpu_custom_call.1} parent=0
    _
  %s6 = ssub.s32 1, %s4
  %s7 = scalar_select 0, %s6, %s4
  %9 = dma.hbm_to_smem %s0, 128, [#allocation6], [#allocation5]
  %10 = dma.done [#allocation5], 128
  %11 = sfence
  $region1: #{tpu_custom_call.1} parent=0
    #allocation7 [shape = 'u8[524288]{0}', space=vmem, size = 0x80000, scoped, tag = 'input window, operand 2']
    #allocation8 [shape = 's32[2]{0}', space=sflag, size = 0x8, scoped, tag = 'scoped memory for tpu_custom_call.1']
    #allocation9 [shape = 's32[2]{0}', space=sflag, size = 0x8, scoped, tag = 'scoped memory for tpu_custom_call.1']
    #allocation10 [shape = 'u8[32768]{0}', space=vmem, size = 0x8000, scoped, tag = 'output window, operand 0']
    %12 = vsyncpa [#allocation8], 0
    %s13 = scalar_lea.sflag [#allocation8], 1
    %14 = vsyncpa %s13, 0
    %15 = vsyncpa [#allocation9], 0
    %s16 = scalar_lea.sflag [#allocation9], 1
    %17 = vsyncpa %s16, 0
    loop: start=0, step=1, limit=4
    $region2: #{tpu_custom_call.1} parent=1 // loop_pre_header
      _
    $region3: #{tpu_custom_call.1} parent=1 // loop_header
      %s19 = sphi 0, %s23
      %p20 = scmp.ge.s32.totalorder %s19, 4
      %s29 = sphi 0, %s31
      %s32 = sphi 0, %s29
      %s33 = sphi 0, %s32
      %s49 = sphi 0, %s33
      %s55 = sphi 0, %s57
      %s58 = sphi 0, %s55
      %s59 = sphi 0, %s58
      %s75 = sphi 0, %s59
    $region4: #{tpu_custom_call.1} parent=1 // loop_header_branch
      %22 = sbr.rel (%p20) target = $region8
    $region5: #{tpu_custom_call.1} parent=1 // loop_body
      %s24 = ssub.s32 %s19, 1
      %s25 = ssub.s32 %s19, 2
      %s26 = sadd.s32 %s19, 1
      %s27 = ssub.s32 %s19, %s26
      %p28 = scmp.eq.s32.totalorder %s27, 0
      %s30 = sadd.s32 %s29, 1
      %s31 = scalar_select %p28, %s29, %s30
      %p34 = pneg %p28
      %p35 = scmp.eq.s32.totalorder %s19, 1
      %p36 = por %p34, %p35
      %p37 = scmp.ne.s32.totalorder %s29, %s32
      %p38 = scmp.eq.s32.totalorder %s19, 0
      %p39 = por %p37, %p38
      %p40 = scmp.ne.s32.totalorder %s29, %s32
      %p41 = scmp.eq.s32.totalorder %s24, 1
      %p42 = por %p40, %p41
      %p43 = scmp.ne.s32.totalorder %s32, %s33
      %p44 = scmp.eq.s32.totalorder %s24, 0
      %p45 = por %p43, %p44
      %p46 = scmp.ne.s32.totalorder %s32, %s33
      %p47 = scmp.eq.s32.totalorder %s25, 1
      %p48 = por %p46, %p47
      %p50 = scmp.ne.s32.totalorder %s33, %s49
      %p51 = scmp.eq.s32.totalorder %s25, 0
      %p52 = por %p50, %p51
      %s53 = ssub.s32 %s19, %s26
      %p54 = scmp.eq.s32.totalorder %s53, 0
      %s56 = sadd.s32 %s55, 1
      %s57 = scalar_select %p54, %s55, %s56
      %p60 = pneg %p54
      %p61 = scmp.eq.s32.totalorder %s19, 1
      %p62 = por %p60, %p61
      %p63 = scmp.ne.s32.totalorder %s55, %s58
      %p64 = scmp.eq.s32.totalorder %s19, 0
      %p65 = por %p63, %p64
      %p66 = scmp.ne.s32.totalorder %s55, %s58
      %p67 = scmp.eq.s32.totalorder %s24, 1
      %p68 = por %p66, %p67
      %p69 = scmp.ne.s32.totalorder %s58, %s59
      %p70 = scmp.eq.s32.totalorder %s24, 0
      %p71 = por %p69, %p70
      %p72 = scmp.ne.s32.totalorder %s58, %s59
      %p73 = scmp.eq.s32.totalorder %s25, 1
      %p74 = por %p72, %p73
      %p76 = scmp.ne.s32.totalorder %s59, %s75
      %p77 = scmp.eq.s32.totalorder %s25, 0
      %p78 = por %p76, %p77
      %p79 = scmp.le.s32.totalorder 1, %s19
      %p80 = scmp.lt.s32.totalorder %s19, 3
      %p81 = pnand %p79, %p80
      %p82 = pneg %p81
      // Predicated region
      $region9: #{tpu_custom_call.1} parent=5 // pred_check
        _
      $region10: #{tpu_custom_call.1} parent=5 // pred_check_branch
        %84 = sbr.rel (%p81) target = $region12
      $region11: #{tpu_custom_call.1} parent=5 // pred_region
        %s85 = ssub.s32 %s19, 1
      $region12: #{tpu_custom_call.1} parent=5 // pred_fallthru
        _
      %p86 = scmp.lt.s32.totalorder %s19, 2
      // Predicated region
      $region13: #{tpu_custom_call.1} parent=5 // pred_check
        %p87 = pneg %p86
      $region14: #{tpu_custom_call.1} parent=5 // pred_check_branch
        %89 = sbr.rel (%p87) target = $region16
      $region15: #{tpu_custom_call.1} parent=5 // pred_region
        // Predicated region
        $region17: #{tpu_custom_call.1} parent=15 // pred_check
          %p90 = pneg %p39
        $region18: #{tpu_custom_call.1} parent=15 // pred_check_branch
          %92 = sbr.rel (%p90) target = $region20
        $region19: #{tpu_custom_call.1} parent=15 // pred_region
          %s93 = sand.u32 %s29, 1
          %s94 = scalar_lea.sflag [#allocation8], %s93
          %s95 = sand.u32 %s29, 1
          %s96 = smul.addr %s95, 512
          %s97 = scalar_lea.vmem [#allocation7], %s96
          %s98 = smul.u32 64, %s19
          %s100 = ssub.s32 8192, 8192
          %101 = vsyncadd %s94, %s100
          %s102 = smul.addr %s98, 128
          %s103 = scalar_lea.hbm %s2, %s102
          %s104 = sshll.u32 %s97, 4
          %s105 = int_to_ptr.vmem [resolvable:$true] %s104
          %110 = dma.hbm_to_vmem [thread:$0]  %s103, 8192, %s105, %s94, 128, 128, 8
        $region20: #{tpu_custom_call.1} parent=15 // pred_fallthru
          _
      $region16: #{tpu_custom_call.1} parent=5 // pred_fallthru
        _
      %p111 = scmp.le.s32.totalorder 1, %s19
      %p112 = scmp.lt.s32.totalorder %s19, 3
      %p113 = pnand %p111, %p112
      %p114 = pneg %p113
      // Predicated region
      $region21: #{tpu_custom_call.1} parent=5 // pred_check
        _
      $region22: #{tpu_custom_call.1} parent=5 // pred_check_branch
        %116 = sbr.rel (%p113) target = $region24
      $region23: #{tpu_custom_call.1} parent=5 // pred_region
        %s117 = ssub.s32 %s19, 1
        %s118 = sand.u32 %s32, 1
        %s119 = scalar_lea.sflag [#allocation8], %s118
        %s120 = sand.u32 %s32, 1
        %s121 = smul.addr %s120, 512
        %s122 = scalar_lea.vmem [#allocation7], %s121
        // Predicated region
        $region25: #{tpu_custom_call.1} parent=23 // pred_check
          %p123 = pneg %p45
        $region26: #{tpu_custom_call.1} parent=23 // pred_check_branch
          %125 = sbr.rel (%p123) target = $region28
        $region27: #{tpu_custom_call.1} parent=23 // pred_region
          %126 = dma.done %s119, 8192
        $region28: #{tpu_custom_call.1} parent=23 // pred_fallthru
          _
        %s127 = sand.u32 %s32, 1
        %s128 = scalar_lea.sflag [#allocation8], %s127
        %s129 = sand.u32 %s32, 1
        %s130 = smul.addr %s129, 512
        %s131 = scalar_lea.vmem [#allocation7], %s130
        %p132 = pneg %p45
        %p133 = pneg %p42
        %p134 = pneg %p71
        %p135 = pneg %p68
        %s136 = sand.u32 %s58, 1
        %s137 = scalar_lea.sflag [#allocation9], %s136
        %s138 = sand.u32 %s58, 1
        %s139 = smul.addr %s138, 32
        %s140 = scalar_lea.vmem [#allocation10], %s139
        %s141 = smul.u32 64, %s24
        %s142 = smul.u32 4, %s24
        %p143 = scmp.eq.s32.totalorder %s24, 0
        // Predicated region
        $region29: #{tpu_custom_call.1} parent=23 // pred_check
          %p144 = pneg %p143
        $region30: #{tpu_custom_call.1} parent=23 // pred_check_branch
          %146 = sbr.rel (%p144) target = $region32
        $region31: #{tpu_custom_call.1} parent=23 // pred_region
          %s147 = sld [smem:[#allocation6]]
          %s148 = smul.addr %s147, 16
          %s149 = scalar_lea.hbm %s1, %s148
          // Predicated region
          $region33: #{tpu_custom_call.1} parent=31 // pred_check
            _
          $region34: #{tpu_custom_call.1} parent=31 // pred_check_branch
            %151 = sbr.rel target = $region36
          $region35: #{tpu_custom_call.1} parent=31 // pred_region
            %152 = sst [smem:[#allocation13]] [#allocation12]
            %153 = sst [smem:[#allocation14]] [#allocation11]
          $region36: #{tpu_custom_call.1} parent=31 // pred_fallthru
            _
          %155 = shalt.err (0)
          %s157 = sshll.u32 [#allocation3], 4
          %s158 = int_to_ptr.vmem [resolvable:$true] %s157
          %160 = dma.hbm_to_vmem [thread:$0]  %s149, 16, %s158, [#allocation4]
          %s161 = sld [smem:[#allocation6 + $0x1]]
          %s162 = smul.addr %s161, 16
          %s163 = scalar_lea.hbm %s1, %s162
          %s164 = scalar_lea.vmem [#allocation3], 8
          %s165 = scalar_lea.sflag [#allocation4], 1
          // Predicated region
          $region37: #{tpu_custom_call.1} parent=31 // pred_check
            _
          $region38: #{tpu_custom_call.1} parent=31 // pred_check_branch
            %167 = sbr.rel target = $region40
          $region39: #{tpu_custom_call.1} parent=31 // pred_region
            %168 = sst [smem:[#allocation13]] [#allocation16]
            %169 = sst [smem:[#allocation14]] [#allocation15]
          $region40: #{tpu_custom_call.1} parent=31 // pred_fallthru
            _
          %171 = shalt.err (0)
          %s173 = sshll.u32 %s164, 4
          %s174 = int_to_ptr.vmem [resolvable:$true] %s173
          %176 = dma.hbm_to_vmem [thread:$0]  %s163, 16, %s174, %s165
          %s177 = sld [smem:[#allocation6 + $0x2]]
          %s178 = smul.addr %s177, 16
          %s179 = scalar_lea.hbm %s1, %s178
          %s180 = scalar_lea.vmem [#allocation3], 16
          %s181 = scalar_lea.sflag [#allocation4], 2
          // Predicated region
          $region41: #{tpu_custom_call.1} parent=31 // pred_check
            _
          $region42: #{tpu_custom_call.1} parent=31 // pred_check_branch
            %183 = sbr.rel target = $region44
          $region43: #{tpu_custom_call.1} parent=31 // pred_region
            %184 = sst [smem:[#allocation13]] [#allocation18]
            %185 = sst [smem:[#allocation14]] [#allocation17]
          $region44: #{tpu_custom_call.1} parent=31 // pred_fallthru
            _
          %187 = shalt.err (0)
          %s189 = sshll.u32 %s180, 4
          %s190 = int_to_ptr.vmem [resolvable:$true] %s189
          %192 = dma.hbm_to_vmem [thread:$0]  %s179, 16, %s190, %s181
          %s193 = sld [smem:[#allocation6 + $0x3]]
          %s194 = smul.addr %s193, 16
          %s195 = scalar_lea.hbm %s1, %s194
          %s196 = scalar_lea.vmem [#allocation3], 24
          %s197 = scalar_lea.sflag [#allocation4], 3
          // Predicated region
          $region45: #{tpu_custom_call.1} parent=31 // pred_check
            _
          $region46: #{tpu_custom_call.1} parent=31 // pred_check_branch
            %199 = sbr.rel target = $region48
          $region47: #{tpu_custom_call.1} parent=31 // pred_region
            %200 = sst [smem:[#allocation13]] [#allocation20]
            %201 = sst [smem:[#allocation14]] [#allocation19]
          $region48: #{tpu_custom_call.1} parent=31 // pred_fallthru
            _
          %203 = shalt.err (0)
          %s205 = sshll.u32 %s196, 4
          %s206 = int_to_ptr.vmem [resolvable:$true] %s205
          %208 = dma.hbm_to_vmem [thread:$0]  %s195, 16, %s206, %s197
          %s209 = sld [smem:[#allocation6 + $0x4]]
          %s210 = smul.addr %s209, 16
          %s211 = scalar_lea.hbm %s1, %s210
          %s212 = scalar_lea.vmem [#allocation3], 32
          %s213 = scalar_lea.sflag [#allocation4], 4
          // Predicated region
          $region49: #{tpu_custom_call.1} parent=31 // pred_check
            _
          $region50: #{tpu_custom_call.1} parent=31 // pred_check_branch
            %215 = sbr.rel target = $region52
          $region51: #{tpu_custom_call.1} parent=31 // pred_region
            %216 = sst [smem:[#allocation13]] [#allocation22]
            %217 = sst [smem:[#allocation14]] [#allocation21]
          $region52: #{tpu_custom_call.1} parent=31 // pred_fallthru
            _
          %219 = shalt.err (0)
          %s221 = sshll.u32 %s212, 4
          %s222 = int_to_ptr.vmem [resolvable:$true] %s221
          %224 = dma.hbm_to_vmem [thread:$0]  %s211, 16, %s222, %s213
          %s225 = sld [smem:[#allocation6 + $0x5]]
          %s226 = smul.addr %s225, 16
          %s227 = scalar_lea.hbm %s1, %s226
          %s228 = scalar_lea.vmem [#allocation3], 40
          %s229 = scalar_lea.sflag [#allocation4], 5
          // Predicated region
          $region53: #{tpu_custom_call.1} parent=31 // pred_check
            _
          $region54: #{tpu_custom_call.1} parent=31 // pred_check_branch
            %231 = sbr.rel target = $region56
          $region55: #{tpu_custom_call.1} parent=31 // pred_region
            %232 = sst [smem:[#allocation13]] [#allocation24]
            %233 = sst [smem:[#allocation14]] [#allocation23]
          $region56: #{tpu_custom_call.1} parent=31 // pred_fallthru
            _
          %235 = shalt.err (0)
          %s237 = sshll.u32 %s228, 4
          %s238 = int_to_ptr.vmem [resolvable:$true] %s237
          %240 = dma.hbm_to_vmem [thread:$0]  %s227, 16, %s238, %s229
          %s241 = sld [smem:[#allocation6 + $0x6]]
          %s242 = smul.addr %s241, 16
          %s243 = scalar_lea.hbm %s1, %s242
          %s244 = scalar_lea.vmem [#allocation3], 48
          %s245 = scalar_lea.sflag [#allocation4], 6
          // Predicated region
          $region57: #{tpu_custom_call.1} parent=31 // pred_check
            _
          $region58: #{tpu_custom_call.1} parent=31 // pred_check_branch
            %247 = sbr.rel target = $region60
          $region59: #{tpu_custom_call.1} parent=31 // pred_region
            %248 = sst [smem:[#allocation13]] [#allocation26]
            %249 = sst [smem:[#allocation14]] [#allocation25]
          $region60: #{tpu_custom_call.1} parent=31 // pred_fallthru
            _
          %251 = shalt.err (0)
          %s253 = sshll.u32 %s244, 4
          %s254 = int_to_ptr.vmem [resolvable:$true] %s253
          %256 = dma.hbm_to_vmem [thread:$0]  %s243, 16, %s254, %s245
          %s257 = sld [smem:[#allocation6 + $0x7]]
          %s258 = smul.addr %s257, 16
          %s259 = scalar_lea.hbm %s1, %s258
          %s260 = scalar_lea.vmem [#allocation3], 56
          %s261 = scalar_lea.sflag [#allocation4], 7
          // Predicated region
          $region61: #{tpu_custom_call.1} parent=31 // pred_check
            _
          $region62: #{tpu_custom_call.1} parent=31 // pred_check_branch
            %263 = sbr.rel target = $region64
          $region63: #{tpu_custom_call.1} parent=31 // pred_region
            %264 = sst [smem:[#allocation13]] [#allocation28]
            %265 = sst [smem:[#allocation14]] [#allocation27]
          $region64: #{tpu_custom_call.1} parent=31 // pred_fallthru
            _
          %267 = shalt.err (0)
          %s269 = sshll.u32 %s260, 4
          %s270 = int_to_ptr.vmem [resolvable:$true] %s269
          %272 = dma.hbm_to_vmem [thread:$0]  %s259, 16, %s270, %s261
          %s273 = sld [smem:[#allocation6 + $0x80]]
          %s274 = smul.addr %s273, 16
          %s275 = scalar_lea.hbm %s1, %s274
          %s276 = scalar_lea.vmem [#allocation3], 1
          // Predicated region
          $region65: #{tpu_custom_call.1} parent=31 // pred_check
            _
          $region66: #{tpu_custom_call.1} parent=31 // pred_check_branch
            %278 = sbr.rel target = $region68
          $region67: #{tpu_custom_call.1} parent=31 // pred_region
            %279 = sst [smem:[#allocation13]] [#allocation30]
            %280 = sst [smem:[#allocation14]] [#allocation29]
          $region68: #{tpu_custom_call.1} parent=31 // pred_fallthru
            _
          %282 = shalt.err (0)
          %s284 = sshll.u32 %s276, 4
          %s285 = int_to_ptr.vmem [resolvable:$true] %s284
          %287 = dma.hbm_to_vmem [thread:$0]  %s275, 16, %s285, [#allocation4]
          %s288 = sld [smem:[#allocation6 + $0x81]]
          %s289 = smul.addr %s288, 16
          %s290 = scalar_lea.hbm %s1, %s289
          %s291 = scalar_lea.vmem [#allocation3], 9
          // Predicated region
          $region69: #{tpu_custom_call.1} parent=31 // pred_check
            _
          $region70: #{tpu_custom_call.1} parent=31 // pred_check_branch
            %293 = sbr.rel target = $region72
          $region71: #{tpu_custom_call.1} parent=31 // pred_region
            %294 = sst [smem:[#allocation13]] [#allocation32]
            %295 = sst [smem:[#allocation14]] [#allocation31]
          $region72: #{tpu_custom_call.1} parent=31 // pred_fallthru
            _
          %297 = shalt.err (0)
          %s299 = sshll.u32 %s291, 4
          %s300 = int_to_ptr.vmem [resolvable:$true] %s299
          %302 = dma.hbm_to_vmem [thread:$0]  %s290, 16, %s300, %s165
          %s303 = sld [smem:[#allocation6 + $0x82]]
          %s304 = smul.addr %s303, 16
          %s305 = scalar_lea.hbm %s1, %s304
          %s306 = scalar_lea.vmem [#allocation3], 17
          // Predicated region
          $region73: #{tpu_custom_call.1} parent=31 // pred_check
            _
          $region74: #{tpu_custom_call.1} parent=31 // pred_check_branch
            %308 = sbr.rel target = $region76
          $region75: #{tpu_custom_call.1} parent=31 // pred_region
            %309 = sst [smem:[#allocation13]] [#allocation34]
            %310 = sst [smem:[#allocation14]] [#allocation33]
          $region76: #{tpu_custom_call.1} parent=31 // pred_fallthru
            _
          %312 = shalt.err (0)
          %s314 = sshll.u32 %s306, 4
          %s315 = int_to_ptr.vmem [resolvable:$true] %s314
          %317 = dma.hbm_to_vmem [thread:$0]  %s305, 16, %s315, %s181
          %s318 = sld [smem:[#allocation6 + $0x83]]
          %s319 = smul.addr %s318, 16
          %s320 = scalar_lea.hbm %s1, %s319
          %s321 = scalar_lea.vmem [#allocation3], 25
          // Predicated region
          $region77: #{tpu_custom_call.1} parent=31 // pred_check
            _
          $region78: #{tpu_custom_call.1} parent=31 // pred_check_branch
            %323 = sbr.rel target = $region80
          $region79: #{tpu_custom_call.1} parent=31 // pred_region
            %324 = sst [smem:[#allocation13]] [#allocation36]
            %325 = sst [smem:[#allocation14]] [#allocation35]
          $region80: #{tpu_custom_call.1} parent=31 // pred_fallthru
            _
          %327 = shalt.err (0)
          %s329 = sshll.u32 %s321, 4
          %s330 = int_to_ptr.vmem [resolvable:$true] %s329
          %332 = dma.hbm_to_vmem [thread:$0]  %s320, 16, %s330, %s197
          %s333 = sld [smem:[#allocation6 + $0x84]]
          %s334 = smul.addr %s333, 16
          %s335 = scalar_lea.hbm %s1, %s334
          %s336 = scalar_lea.vmem [#allocation3], 33
          // Predicated region
          $region81: #{tpu_custom_call.1} parent=31 // pred_check
            _
          $region82: #{tpu_custom_call.1} parent=31 // pred_check_branch
            %338 = sbr.rel target = $region84
          $region83: #{tpu_custom_call.1} parent=31 // pred_region
            %339 = sst [smem:[#allocation13]] [#allocation38]
            %340 = sst [smem:[#allocation14]] [#allocation37]
          $region84: #{tpu_custom_call.1} parent=31 // pred_fallthru
            _
          %342 = shalt.err (0)
          %s344 = sshll.u32 %s336, 4
          %s345 = int_to_ptr.vmem [resolvable:$true] %s344
          %347 = dma.hbm_to_vmem [thread:$0]  %s335, 16, %s345, %s213
          %s348 = sld [smem:[#allocation6 + $0x85]]
          %s349 = smul.addr %s348, 16
          %s350 = scalar_lea.hbm %s1, %s349
          %s351 = scalar_lea.vmem [#allocation3], 41
          // Predicated region
          $region85: #{tpu_custom_call.1} parent=31 // pred_check
            _
          $region86: #{tpu_custom_call.1} parent=31 // pred_check_branch
            %353 = sbr.rel target = $region88
          $region87: #{tpu_custom_call.1} parent=31 // pred_region
            %354 = sst [smem:[#allocation13]] [#allocation40]
            %355 = sst [smem:[#allocation14]] [#allocation39]
          $region88: #{tpu_custom_call.1} parent=31 // pred_fallthru
            _
          %357 = shalt.err (0)
          %s359 = sshll.u32 %s351, 4
          %s360 = int_to_ptr.vmem [resolvable:$true] %s359
          %362 = dma.hbm_to_vmem [thread:$0]  %s350, 16, %s360, %s229
          %s363 = sld [smem:[#allocation6 + $0x86]]
          %s364 = smul.addr %s363, 16
          %s365 = scalar_lea.hbm %s1, %s364
          %s366 = scalar_lea.vmem [#allocation3], 49
          // Predicated region
          $region89: #{tpu_custom_call.1} parent=31 // pred_check
            _
          $region90: #{tpu_custom_call.1} parent=31 // pred_check_branch
            %368 = sbr.rel target = $region92
          $region91: #{tpu_custom_call.1} parent=31 // pred_region
            %369 = sst [smem:[#allocation13]] [#allocation42]
            %370 = sst [smem:[#allocation14]] [#allocation41]
          $region92: #{tpu_custom_call.1} parent=31 // pred_fallthru
            _
          %372 = shalt.err (0)
          %s374 = sshll.u32 %s366, 4
          %s375 = int_to_ptr.vmem [resolvable:$true] %s374
          %377 = dma.hbm_to_vmem [thread:$0]  %s365, 16, %s375, %s245
          %s378 = sld [smem:[#allocation6 + $0x87]]
          %s379 = smul.addr %s378, 16
          %s380 = scalar_lea.hbm %s1, %s379
          %s381 = scalar_lea.vmem [#allocation3], 57
          // Predicated region
          $region93: #{tpu_custom_call.1} parent=31 // pred_check
            _
          $region94: #{tpu_custom_call.1} parent=31 // pred_check_branch
            %383 = sbr.rel target = $region96
          $region95: #{tpu_custom_call.1} parent=31 // pred_region
            %384 = sst [smem:[#allocation13]] [#allocation44]
            %385 = sst [smem:[#allocation14]] [#allocation43]
          $region96: #{tpu_custom_call.1} parent=31 // pred_fallthru
            _
          %387 = shalt.err (0)
          %s389 = sshll.u32 %s381, 4
          %s390 = int_to_ptr.vmem [resolvable:$true] %s389
          %392 = dma.hbm_to_vmem [thread:$0]  %s380, 16, %s390, %s261
          %s393 = sld [smem:[#allocation6 + $0x100]]
          %s394 = smul.addr %s393, 16
          %s395 = scalar_lea.hbm %s1, %s394
          %s396 = scalar_lea.vmem [#allocation3], 2
          // Predicated region
          $region97: #{tpu_custom_call.1} parent=31 // pred_check
            _
          $region98: #{tpu_custom_call.1} parent=31 // pred_check_branch
            %398 = sbr.rel target = $region100
          $region99: #{tpu_custom_call.1} parent=31 // pred_region
            %399 = sst [smem:[#allocation13]] [#allocation46]
            %400 = sst [smem:[#allocation14]] [#allocation45]
          $region100: #{tpu_custom_call.1} parent=31 // pred_fallthru
            _
          %402 = shalt.err (0)
          %s404 = sshll.u32 %s396, 4
          %s405 = int_to_ptr.vmem [resolvable:$true] %s404
          %407 = dma.hbm_to_vmem [thread:$0]  %s395, 16, %s405, [#allocation4]
          %s408 = sld [smem:[#allocation6 + $0x101]]
          %s409 = smul.addr %s408, 16
          %s410 = scalar_lea.hbm %s1, %s409
          %s411 = scalar_lea.vmem [#allocation3], 10
          // Predicated region
          $region101: #{tpu_custom_call.1} parent=31 // pred_check
            _
          $region102: #{tpu_custom_call.1} parent=31 // pred_check_branch
            %413 = sbr.rel target = $region104
          $region103: #{tpu_custom_call.1} parent=31 // pred_region
            %414 = sst [smem:[#allocation13]] [#allocation48]
            %415 = sst [smem:[#allocation14]] [#allocation47]
          $region104: #{tpu_custom_call.1} parent=31 // pred_fallthru
            _
          %417 = shalt.err (0)
          %s419 = sshll.u32 %s411, 4
          %s420 = int_to_ptr.vmem [resolvable:$true] %s419
          %422 = dma.hbm_to_vmem [thread:$0]  %s410, 16, %s420, %s165
          %s423 = sld [smem:[#allocation6 + $0x102]]
          %s424 = smul.addr %s423, 16
          %s425 = scalar_lea.hbm %s1, %s424
          %s426 = scalar_lea.vmem [#allocation3], 18
          // Predicated region
          $region105: #{tpu_custom_call.1} parent=31 // pred_check
            _
          $region106: #{tpu_custom_call.1} parent=31 // pred_check_branch
            %428 = sbr.rel target = $region108
          $region107: #{tpu_custom_call.1} parent=31 // pred_region
            %429 = sst [smem:[#allocation13]] [#allocation50]
            %430 = sst [smem:[#allocation14]] [#allocation49]
          $region108: #{tpu_custom_call.1} parent=31 // pred_fallthru
            _
          %432 = shalt.err (0)
          %s434 = sshll.u32 %s426, 4
          %s435 = int_to_ptr.vmem [resolvable:$true] %s434
          %437 = dma.hbm_to_vmem [thread:$0]  %s425, 16, %s435, %s181
          %s438 = sld [smem:[#allocation6 + $0x103]]
          %s439 = smul.addr %s438, 16
          %s440 = scalar_lea.hbm %s1, %s439
          %s441 = scalar_lea.vmem [#allocation3], 26
          // Predicated region
          $region109: #{tpu_custom_call.1} parent=31 // pred_check
            _
          $region110: #{tpu_custom_call.1} parent=31 // pred_check_branch
            %443 = sbr.rel target = $region112
          $region111: #{tpu_custom_call.1} parent=31 // pred_region
            %444 = sst [smem:[#allocation13]] [#allocation52]
            %445 = sst [smem:[#allocation14]] [#allocation51]
          $region112: #{tpu_custom_call.1} parent=31 // pred_fallthru
            _
          %447 = shalt.err (0)
          %s449 = sshll.u32 %s441, 4
          %s450 = int_to_ptr.vmem [resolvable:$true] %s449
          %452 = dma.hbm_to_vmem [thread:$0]  %s440, 16, %s450, %s197
          %s453 = sld [smem:[#allocation6 + $0x104]]
          %s454 = smul.addr %s453, 16
          %s455 = scalar_lea.hbm %s1, %s454
          %s456 = scalar_lea.vmem [#allocation3], 34
          // Predicated region
          $region113: #{tpu_custom_call.1} parent=31 // pred_check
            _
          $region114: #{tpu_custom_call.1} parent=31 // pred_check_branch
            %458 = sbr.rel target = $region116
          $region115: #{tpu_custom_call.1} parent=31 // pred_region
            %459 = sst [smem:[#allocation13]] [#allocation54]
            %460 = sst [smem:[#allocation14]] [#allocation53]
          $region116: #{tpu_custom_call.1} parent=31 // pred_fallthru
            _
          %462 = shalt.err (0)
          %s464 = sshll.u32 %s456, 4
          %s465 = int_to_ptr.vmem [resolvable:$true] %s464
          %467 = dma.hbm_to_vmem [thread:$0]  %s455, 16, %s465, %s213
          %s468 = sld [smem:[#allocation6 + $0x105]]
          %s469 = smul.addr %s468, 16
          %s470 = scalar_lea.hbm %s1, %s469
          %s471 = scalar_lea.vmem [#allocation3], 42
          // Predicated region
          $region117: #{tpu_custom_call.1} parent=31 // pred_check
            _
          $region118: #{tpu_custom_call.1} parent=31 // pred_check_branch
            %473 = sbr.rel target = $region120
          $region119: #{tpu_custom_call.1} parent=31 // pred_region
            %474 = sst [smem:[#allocation13]] [#allocation56]
            %475 = sst [smem:[#allocation14]] [#allocation55]
          $region120: #{tpu_custom_call.1} parent=31 // pred_fallthru
            _
          %477 = shalt.err (0)
          %s479 = sshll.u32 %s471, 4
          %s480 = int_to_ptr.vmem [resolvable:$true] %s479
          %482 = dma.hbm_to_vmem [thread:$0]  %s470, 16, %s480, %s229
          %s483 = sld [smem:[#allocation6 + $0x106]]
          %s484 = smul.addr %s483, 16
          %s485 = scalar_lea.hbm %s1, %s484
          %s486 = scalar_lea.vmem [#allocation3], 50
          // Predicated region
          $region121: #{tpu_custom_call.1} parent=31 // pred_check
            _
          $region122: #{tpu_custom_call.1} parent=31 // pred_check_branch
            %488 = sbr.rel target = $region124
          $region123: #{tpu_custom_call.1} parent=31 // pred_region
            %489 = sst [smem:[#allocation13]] [#allocation58]
            %490 = sst [smem:[#allocation14]] [#allocation57]
          $region124: #{tpu_custom_call.1} parent=31 // pred_fallthru
            _
          %492 = shalt.err (0)
          %s494 = sshll.u32 %s486, 4
          %s495 = int_to_ptr.vmem [resolvable:$true] %s494
          %497 = dma.hbm_to_vmem [thread:$0]  %s485, 16, %s495, %s245
          %s498 = sld [smem:[#allocation6 + $0x107]]
          %s499 = smul.addr %s498, 16
          %s500 = scalar_lea.hbm %s1, %s499
          %s501 = scalar_lea.vmem [#allocation3], 58
          // Predicated region
          $region125: #{tpu_custom_call.1} parent=31 // pred_check
            _
          $region126: #{tpu_custom_call.1} parent=31 // pred_check_branch
            %503 = sbr.rel target = $region128
          $region127: #{tpu_custom_call.1} parent=31 // pred_region
            %504 = sst [smem:[#allocation13]] [#allocation60]
            %505 = sst [smem:[#allocation14]] [#allocation59]
          $region128: #{tpu_custom_call.1} parent=31 // pred_fallthru
            _
          %507 = shalt.err (0)
          %s509 = sshll.u32 %s501, 4
          %s510 = int_to_ptr.vmem [resolvable:$true] %s509
          %512 = dma.hbm_to_vmem [thread:$0]  %s500, 16, %s510, %s261
          %s513 = sld [smem:[#allocation6 + $0x180]]
          %s514 = smul.addr %s513, 16
          %s515 = scalar_lea.hbm %s1, %s514
          %s516 = scalar_lea.vmem [#allocation3], 3
          // Predicated region
          $region129: #{tpu_custom_call.1} parent=31 // pred_check
            _
          $region130: #{tpu_custom_call.1} parent=31 // pred_check_branch
            %518 = sbr.rel target = $region132
          $region131: #{tpu_custom_call.1} parent=31 // pred_region
            %519 = sst [smem:[#allocation13]] [#allocation62]
            %520 = sst [smem:[#allocation14]] [#allocation61]
          $region132: #{tpu_custom_call.1} parent=31 // pred_fallthru
            _
          %522 = shalt.err (0)
          %s524 = sshll.u32 %s516, 4
          %s525 = int_to_ptr.vmem [resolvable:$true] %s524
          %527 = dma.hbm_to_vmem [thread:$0]  %s515, 16, %s525, [#allocation4]
          %s528 = sld [smem:[#allocation6 + $0x181]]
          %s529 = smul.addr %s528, 16
          %s530 = scalar_lea.hbm %s1, %s529
          %s531 = scalar_lea.vmem [#allocation3], 11
          // Predicated region
          $region133: #{tpu_custom_call.1} parent=31 // pred_check
            _
          $region134: #{tpu_custom_call.1} parent=31 // pred_check_branch
            %533 = sbr.rel target = $region136
          $region135: #{tpu_custom_call.1} parent=31 // pred_region
            %534 = sst [smem:[#allocation13]] [#allocation64]
            %535 = sst [smem:[#allocation14]] [#allocation63]
          $region136: #{tpu_custom_call.1} parent=31 // pred_fallthru
            _
          %537 = shalt.err (0)
          %s539 = sshll.u32 %s531, 4
          %s540 = int_to_ptr.vmem [resolvable:$true] %s539
          %542 = dma.hbm_to_vmem [thread:$0]  %s530, 16, %s540, %s165
          %s543 = sld [smem:[#allocation6 + $0x182]]
          %s544 = smul.addr %s543, 16
          %s545 = scalar_lea.hbm %s1, %s544
          %s546 = scalar_lea.vmem [#allocation3], 19
          // Predicated region
          $region137: #{tpu_custom_call.1} parent=31 // pred_check
            _
          $region138: #{tpu_custom_call.1} parent=31 // pred_check_branch
            %548 = sbr.rel target = $region140
          $region139: #{tpu_custom_call.1} parent=31 // pred_region
            %549 = sst [smem:[#allocation13]] [#allocation66]
            %550 = sst [smem:[#allocation14]] [#allocation65]
          $region140: #{tpu_custom_call.1} parent=31 // pred_fallthru
            _
          %552 = shalt.err (0)
          %s554 = sshll.u32 %s546, 4
          %s555 = int_to_ptr.vmem [resolvable:$true] %s554
          %557 = dma.hbm_to_vmem [thread:$0]  %s545, 16, %s555, %s181
          %s558 = sld [smem:[#allocation6 + $0x183]]
          %s559 = smul.addr %s558, 16
          %s560 = scalar_lea.hbm %s1, %s559
          %s561 = scalar_lea.vmem [#allocation3], 27
          // Predicated region
          $region141: #{tpu_custom_call.1} parent=31 // pred_check
            _
          $region142: #{tpu_custom_call.1} parent=31 // pred_check_branch
            %563 = sbr.rel target = $region144
          $region143: #{tpu_custom_call.1} parent=31 // pred_region
            %564 = sst [smem:[#allocation13]] [#allocation68]
            %565 = sst [smem:[#allocation14]] [#allocation67]
          $region144: #{tpu_custom_call.1} parent=31 // pred_fallthru
            _
          %567 = shalt.err (0)
          %s569 = sshll.u32 %s561, 4
          %s570 = int_to_ptr.vmem [resolvable:$true] %s569
          %572 = dma.hbm_to_vmem [thread:$0]  %s560, 16, %s570, %s197
          %s573 = sld [smem:[#allocation6 + $0x184]]
          %s574 = smul.addr %s573, 16
          %s575 = scalar_lea.hbm %s1, %s574
          %s576 = scalar_lea.vmem [#allocation3], 35
          // Predicated region
          $region145: #{tpu_custom_call.1} parent=31 // pred_check
            _
          $region146: #{tpu_custom_call.1} parent=31 // pred_check_branch
            %578 = sbr.rel target = $region148
          $region147: #{tpu_custom_call.1} parent=31 // pred_region
            %579 = sst [smem:[#allocation13]] [#allocation70]
            %580 = sst [smem:[#allocation14]] [#allocation69]
          $region148: #{tpu_custom_call.1} parent=31 // pred_fallthru
            _
          %582 = shalt.err (0)
          %s584 = sshll.u32 %s576, 4
          %s585 = int_to_ptr.vmem [resolvable:$true] %s584
          %587 = dma.hbm_to_vmem [thread:$0]  %s575, 16, %s585, %s213
          %s588 = sld [smem:[#allocation6 + $0x185]]
          %s589 = smul.addr %s588, 16
          %s590 = scalar_lea.hbm %s1, %s589
          %s591 = scalar_lea.vmem [#allocation3], 43
          // Predicated region
          $region149: #{tpu_custom_call.1} parent=31 // pred_check
            _
          $region150: #{tpu_custom_call.1} parent=31 // pred_check_branch
            %593 = sbr.rel target = $region152
          $region151: #{tpu_custom_call.1} parent=31 // pred_region
            %594 = sst [smem:[#allocation13]] [#allocation72]
            %595 = sst [smem:[#allocation14]] [#allocation71]
          $region152: #{tpu_custom_call.1} parent=31 // pred_fallthru
            _
          %597 = shalt.err (0)
          %s599 = sshll.u32 %s591, 4
          %s600 = int_to_ptr.vmem [resolvable:$true] %s599
          %602 = dma.hbm_to_vmem [thread:$0]  %s590, 16, %s600, %s229
          %s603 = sld [smem:[#allocation6 + $0x186]]
          %s604 = smul.addr %s603, 16
          %s605 = scalar_lea.hbm %s1, %s604
          %s606 = scalar_lea.vmem [#allocation3], 51
          // Predicated region
          $region153: #{tpu_custom_call.1} parent=31 // pred_check
            _
          $region154: #{tpu_custom_call.1} parent=31 // pred_check_branch
            %608 = sbr.rel target = $region156
          $region155: #{tpu_custom_call.1} parent=31 // pred_region
            %609 = sst [smem:[#allocation13]] [#allocation74]
            %610 = sst [smem:[#allocation14]] [#allocation73]
          $region156: #{tpu_custom_call.1} parent=31 // pred_fallthru
            _
          %612 = shalt.err (0)
          %s614 = sshll.u32 %s606, 4
          %s615 = int_to_ptr.vmem [resolvable:$true] %s614
          %617 = dma.hbm_to_vmem [thread:$0]  %s605, 16, %s615, %s245
          %s618 = sld [smem:[#allocation6 + $0x187]]
          %s619 = smul.addr %s618, 16
          %s620 = scalar_lea.hbm %s1, %s619
          %s621 = scalar_lea.vmem [#allocation3], 59
          // Predicated region
          $region157: #{tpu_custom_call.1} parent=31 // pred_check
            _
          $region158: #{tpu_custom_call.1} parent=31 // pred_check_branch
            %623 = sbr.rel target = $region160
          $region159: #{tpu_custom_call.1} parent=31 // pred_region
            %624 = sst [smem:[#allocation13]] [#allocation76]
            %625 = sst [smem:[#allocation14]] [#allocation75]
          $region160: #{tpu_custom_call.1} parent=31 // pred_fallthru
            _
          %627 = shalt.err (0)
          %s629 = sshll.u32 %s621, 4
          %s630 = int_to_ptr.vmem [resolvable:$true] %s629
          %632 = dma.hbm_to_vmem [thread:$0]  %s620, 16, %s630, %s261
          %s633 = sld [smem:[#allocation6 + $0x200]]
          %s634 = smul.addr %s633, 16
          %s635 = scalar_lea.hbm %s1, %s634
          %s636 = scalar_lea.vmem [#allocation3], 4
          // Predicated region
          $region161: #{tpu_custom_call.1} parent=31 // pred_check
            _
          $region162: #{tpu_custom_call.1} parent=31 // pred_check_branch
            %638 = sbr.rel target = $region164
          $region163: #{tpu_custom_call.1} parent=31 // pred_region
            %639 = sst [smem:[#allocation13]] [#allocation78]
            %640 = sst [smem:[#allocation14]] [#allocation77]
          $region164: #{tpu_custom_call.1} parent=31 // pred_fallthru
            _
          %642 = shalt.err (0)
          %s644 = sshll.u32 %s636, 4
          %s645 = int_to_ptr.vmem [resolvable:$true] %s644
          %647 = dma.hbm_to_vmem [thread:$0]  %s635, 16, %s645, [#allocation4]
          %s648 = sld [smem:[#allocation6 + $0x201]]
          %s649 = smul.addr %s648, 16
          %s650 = scalar_lea.hbm %s1, %s649
          %s651 = scalar_lea.vmem [#allocation3], 12
          // Predicated region
          $region165: #{tpu_custom_call.1} parent=31 // pred_check
            _
          $region166: #{tpu_custom_call.1} parent=31 // pred_check_branch
            %653 = sbr.rel target = $region168
          $region167: #{tpu_custom_call.1} parent=31 // pred_region
            %654 = sst [smem:[#allocation13]] [#allocation80]
            %655 = sst [smem:[#allocation14]] [#allocation79]
          $region168: #{tpu_custom_call.1} parent=31 // pred_fallthru
            _
          %657 = shalt.err (0)
          %s659 = sshll.u32 %s651, 4
          %s660 = int_to_ptr.vmem [resolvable:$true] %s659
          %662 = dma.hbm_to_vmem [thread:$0]  %s650, 16, %s660, %s165
          %s663 = sld [smem:[#allocation6 + $0x202]]
          %s664 = smul.addr %s663, 16
          %s665 = scalar_lea.hbm %s1, %s664
          %s666 = scalar_lea.vmem [#allocation3], 20
          // Predicated region
          $region169: #{tpu_custom_call.1} parent=31 // pred_check
            _
          $region170: #{tpu_custom_call.1} parent=31 // pred_check_branch
            %668 = sbr.rel target = $region172
          $region171: #{tpu_custom_call.1} parent=31 // pred_region
            %669 = sst [smem:[#allocation13]] [#allocation82]
            %670 = sst [smem:[#allocation14]] [#allocation81]
          $region172: #{tpu_custom_call.1} parent=31 // pred_fallthru
            _
          %672 = shalt.err (0)
          %s674 = sshll.u32 %s666, 4
          %s675 = int_to_ptr.vmem [resolvable:$true] %s674
          %677 = dma.hbm_to_vmem [thread:$0]  %s665, 16, %s675, %s181
          %s678 = sld [smem:[#allocation6 + $0x203]]
          %s679 = smul.addr %s678, 16
          %s680 = scalar_lea.hbm %s1, %s679
          %s681 = scalar_lea.vmem [#allocation3], 28
          // Predicated region
          $region173: #{tpu_custom_call.1} parent=31 // pred_check
            _
          $region174: #{tpu_custom_call.1} parent=31 // pred_check_branch
            %683 = sbr.rel target = $region176
          $region175: #{tpu_custom_call.1} parent=31 // pred_region
            %684 = sst [smem:[#allocation13]] [#allocation84]
            %685 = sst [smem:[#allocation14]] [#allocation83]
          $region176: #{tpu_custom_call.1} parent=31 // pred_fallthru
            _
          %687 = shalt.err (0)
          %s689 = sshll.u32 %s681, 4
          %s690 = int_to_ptr.vmem [resolvable:$true] %s689
          %692 = dma.hbm_to_vmem [thread:$0]  %s680, 16, %s690, %s197
          %s693 = sld [smem:[#allocation6 + $0x204]]
          %s694 = smul.addr %s693, 16
          %s695 = scalar_lea.hbm %s1, %s694
          %s696 = scalar_lea.vmem [#allocation3], 36
          // Predicated region
          $region177: #{tpu_custom_call.1} parent=31 // pred_check
            _
          $region178: #{tpu_custom_call.1} parent=31 // pred_check_branch
            %698 = sbr.rel target = $region180
          $region179: #{tpu_custom_call.1} parent=31 // pred_region
            %699 = sst [smem:[#allocation13]] [#allocation86]
            %700 = sst [smem:[#allocation14]] [#allocation85]
          $region180: #{tpu_custom_call.1} parent=31 // pred_fallthru
            _
          %702 = shalt.err (0)
          %s704 = sshll.u32 %s696, 4
          %s705 = int_to_ptr.vmem [resolvable:$true] %s704
          %707 = dma.hbm_to_vmem [thread:$0]  %s695, 16, %s705, %s213
          %s708 = sld [smem:[#allocation6 + $0x205]]
          %s709 = smul.addr %s708, 16
          %s710 = scalar_lea.hbm %s1, %s709
          %s711 = scalar_lea.vmem [#allocation3], 44
          // Predicated region
          $region181: #{tpu_custom_call.1} parent=31 // pred_check
            _
          $region182: #{tpu_custom_call.1} parent=31 // pred_check_branch
            %713 = sbr.rel target = $region184
          $region183: #{tpu_custom_call.1} parent=31 // pred_region
            %714 = sst [smem:[#allocation13]] [#allocation88]
            %715 = sst [smem:[#allocation14]] [#allocation87]
          $region184: #{tpu_custom_call.1} parent=31 // pred_fallthru
            _
          %717 = shalt.err (0)
          %s719 = sshll.u32 %s711, 4
          %s720 = int_to_ptr.vmem [resolvable:$true] %s719
          %722 = dma.hbm_to_vmem [thread:$0]  %s710, 16, %s720, %s229
          %s723 = sld [smem:[#allocation6 + $0x206]]
          %s724 = smul.addr %s723, 16
          %s725 = scalar_lea.hbm %s1, %s724
          %s726 = scalar_lea.vmem [#allocation3], 52
          // Predicated region
          $region185: #{tpu_custom_call.1} parent=31 // pred_check
            _
          $region186: #{tpu_custom_call.1} parent=31 // pred_check_branch
            %728 = sbr.rel target = $region188
          $region187: #{tpu_custom_call.1} parent=31 // pred_region
            %729 = sst [smem:[#allocation13]] [#allocation90]
            %730 = sst [smem:[#allocation14]] [#allocation89]
          $region188: #{tpu_custom_call.1} parent=31 // pred_fallthru
            _
          %732 = shalt.err (0)
          %s734 = sshll.u32 %s726, 4
          %s735 = int_to_ptr.vmem [resolvable:$true] %s734
          %737 = dma.hbm_to_vmem [thread:$0]  %s725, 16, %s735, %s245
          %s738 = sld [smem:[#allocation6 + $0x207]]
          %s739 = smul.addr %s738, 16
          %s740 = scalar_lea.hbm %s1, %s739
          %s741 = scalar_lea.vmem [#allocation3], 60
          // Predicated region
          $region189: #{tpu_custom_call.1} parent=31 // pred_check
            _
          $region190: #{tpu_custom_call.1} parent=31 // pred_check_branch
            %743 = sbr.rel target = $region192
          $region191: #{tpu_custom_call.1} parent=31 // pred_region
            %744 = sst [smem:[#allocation13]] [#allocation92]
            %745 = sst [smem:[#allocation14]] [#allocation91]
          $region192: #{tpu_custom_call.1} parent=31 // pred_fallthru
            _
          %747 = shalt.err (0)
          %s749 = sshll.u32 %s741, 4
          %s750 = int_to_ptr.vmem [resolvable:$true] %s749
          %752 = dma.hbm_to_vmem [thread:$0]  %s740, 16, %s750, %s261
          %s753 = sld [smem:[#allocation6 + $0x280]]
          %s754 = smul.addr %s753, 16
          %s755 = scalar_lea.hbm %s1, %s754
          %s756 = scalar_lea.vmem [#allocation3], 5
          // Predicated region
          $region193: #{tpu_custom_call.1} parent=31 // pred_check
            _
          $region194: #{tpu_custom_call.1} parent=31 // pred_check_branch
            %758 = sbr.rel target = $region196
          $region195: #{tpu_custom_call.1} parent=31 // pred_region
            %759 = sst [smem:[#allocation13]] [#allocation94]
            %760 = sst [smem:[#allocation14]] [#allocation93]
          $region196: #{tpu_custom_call.1} parent=31 // pred_fallthru
            _
          %762 = shalt.err (0)
          %s764 = sshll.u32 %s756, 4
          %s765 = int_to_ptr.vmem [resolvable:$true] %s764
          %767 = dma.hbm_to_vmem [thread:$0]  %s755, 16, %s765, [#allocation4]
          %s768 = sld [smem:[#allocation6 + $0x281]]
          %s769 = smul.addr %s768, 16
          %s770 = scalar_lea.hbm %s1, %s769
          %s771 = scalar_lea.vmem [#allocation3], 13
          // Predicated region
          $region197: #{tpu_custom_call.1} parent=31 // pred_check
            _
          $region198: #{tpu_custom_call.1} parent=31 // pred_check_branch
            %773 = sbr.rel target = $region200
          $region199: #{tpu_custom_call.1} parent=31 // pred_region
            %774 = sst [smem:[#allocation13]] [#allocation96]
            %775 = sst [smem:[#allocation14]] [#allocation95]
          $region200: #{tpu_custom_call.1} parent=31 // pred_fallthru
            _
          %777 = shalt.err (0)
          %s779 = sshll.u32 %s771, 4
          %s780 = int_to_ptr.vmem [resolvable:$true] %s779
          %782 = dma.hbm_to_vmem [thread:$0]  %s770, 16, %s780, %s165
          %s783 = sld [smem:[#allocation6 + $0x282]]
          %s784 = smul.addr %s783, 16
          %s785 = scalar_lea.hbm %s1, %s784
          %s786 = scalar_lea.vmem [#allocation3], 21
          // Predicated region
          $region201: #{tpu_custom_call.1} parent=31 // pred_check
            _
          $region202: #{tpu_custom_call.1} parent=31 // pred_check_branch
            %788 = sbr.rel target = $region204
          $region203: #{tpu_custom_call.1} parent=31 // pred_region
            %789 = sst [smem:[#allocation13]] [#allocation98]
            %790 = sst [smem:[#allocation14]] [#allocation97]
          $region204: #{tpu_custom_call.1} parent=31 // pred_fallthru
            _
          %792 = shalt.err (0)
          %s794 = sshll.u32 %s786, 4
          %s795 = int_to_ptr.vmem [resolvable:$true] %s794
          %797 = dma.hbm_to_vmem [thread:$0]  %s785, 16, %s795, %s181
          %s798 = sld [smem:[#allocation6 + $0x283]]
          %s799 = smul.addr %s798, 16
          %s800 = scalar_lea.hbm %s1, %s799
          %s801 = scalar_lea.vmem [#allocation3], 29
          // Predicated region
          $region205: #{tpu_custom_call.1} parent=31 // pred_check
            _
          $region206: #{tpu_custom_call.1} parent=31 // pred_check_branch
            %803 = sbr.rel target = $region208
          $region207: #{tpu_custom_call.1} parent=31 // pred_region
            %804 = sst [smem:[#allocation13]] [#allocation100]
            %805 = sst [smem:[#allocation14]] [#allocation99]
          $region208: #{tpu_custom_call.1} parent=31 // pred_fallthru
            _
          %807 = shalt.err (0)
          %s809 = sshll.u32 %s801, 4
          %s810 = int_to_ptr.vmem [resolvable:$true] %s809
          %812 = dma.hbm_to_vmem [thread:$0]  %s800, 16, %s810, %s197
          %s813 = sld [smem:[#allocation6 + $0x284]]
          %s814 = smul.addr %s813, 16
          %s815 = scalar_lea.hbm %s1, %s814
          %s816 = scalar_lea.vmem [#allocation3], 37
          // Predicated region
          $region209: #{tpu_custom_call.1} parent=31 // pred_check
            _
          $region210: #{tpu_custom_call.1} parent=31 // pred_check_branch
            %818 = sbr.rel target = $region212
          $region211: #{tpu_custom_call.1} parent=31 // pred_region
            %819 = sst [smem:[#allocation13]] [#allocation102]
            %820 = sst [smem:[#allocation14]] [#allocation101]
          $region212: #{tpu_custom_call.1} parent=31 // pred_fallthru
            _
          %822 = shalt.err (0)
          %s824 = sshll.u32 %s816, 4
          %s825 = int_to_ptr.vmem [resolvable:$true] %s824
          %827 = dma.hbm_to_vmem [thread:$0]  %s815, 16, %s825, %s213
          %s828 = sld [smem:[#allocation6 + $0x285]]
          %s829 = smul.addr %s828, 16
          %s830 = scalar_lea.hbm %s1, %s829
          %s831 = scalar_lea.vmem [#allocation3], 45
          // Predicated region
          $region213: #{tpu_custom_call.1} parent=31 // pred_check
            _
          $region214: #{tpu_custom_call.1} parent=31 // pred_check_branch
            %833 = sbr.rel target = $region216
          $region215: #{tpu_custom_call.1} parent=31 // pred_region
            %834 = sst [smem:[#allocation13]] [#allocation104]
            %835 = sst [smem:[#allocation14]] [#allocation103]
          $region216: #{tpu_custom_call.1} parent=31 // pred_fallthru
            _
          %837 = shalt.err (0)
          %s839 = sshll.u32 %s831, 4
          %s840 = int_to_ptr.vmem [resolvable:$true] %s839
          %842 = dma.hbm_to_vmem [thread:$0]  %s830, 16, %s840, %s229
          %s843 = sld [smem:[#allocation6 + $0x286]]
          %s844 = smul.addr %s843, 16
          %s845 = scalar_lea.hbm %s1, %s844
          %s846 = scalar_lea.vmem [#allocation3], 53
          // Predicated region
          $region217: #{tpu_custom_call.1} parent=31 // pred_check
            _
          $region218: #{tpu_custom_call.1} parent=31 // pred_check_branch
            %848 = sbr.rel target = $region220
          $region219: #{tpu_custom_call.1} parent=31 // pred_region
            %849 = sst [smem:[#allocation13]] [#allocation106]
            %850 = sst [smem:[#allocation14]] [#allocation105]
          $region220: #{tpu_custom_call.1} parent=31 // pred_fallthru
            _
          %852 = shalt.err (0)
          %s854 = sshll.u32 %s846, 4
          %s855 = int_to_ptr.vmem [resolvable:$true] %s854
          %857 = dma.hbm_to_vmem [thread:$0]  %s845, 16, %s855, %s245
          %s858 = sld [smem:[#allocation6 + $0x287]]
          %s859 = smul.addr %s858, 16
          %s860 = scalar_lea.hbm %s1, %s859
          %s861 = scalar_lea.vmem [#allocation3], 61
          // Predicated region
          $region221: #{tpu_custom_call.1} parent=31 // pred_check
            _
          $region222: #{tpu_custom_call.1} parent=31 // pred_check_branch
            %863 = sbr.rel target = $region224
          $region223: #{tpu_custom_call.1} parent=31 // pred_region
            %864 = sst [smem:[#allocation13]] [#allocation108]
            %865 = sst [smem:[#allocation14]] [#allocation107]
          $region224: #{tpu_custom_call.1} parent=31 // pred_fallthru
            _
          %867 = shalt.err (0)
          %s869 = sshll.u32 %s861, 4
          %s870 = int_to_ptr.vmem [resolvable:$true] %s869
          %872 = dma.hbm_to_vmem [thread:$0]  %s860, 16, %s870, %s261
          %s873 = sld [smem:[#allocation6 + $0x300]]
          %s874 = smul.addr %s873, 16
          %s875 = scalar_lea.hbm %s1, %s874
          %s876 = scalar_lea.vmem [#allocation3], 6
          // Predicated region
          $region225: #{tpu_custom_call.1} parent=31 // pred_check
            _
          $region226: #{tpu_custom_call.1} parent=31 // pred_check_branch
            %878 = sbr.rel target = $region228
          $region227: #{tpu_custom_call.1} parent=31 // pred_region
            %879 = sst [smem:[#allocation13]] [#allocation110]
            %880 = sst [smem:[#allocation14]] [#allocation109]
          $region228: #{tpu_custom_call.1} parent=31 // pred_fallthru
            _
          %882 = shalt.err (0)
          %s884 = sshll.u32 %s876, 4
          %s885 = int_to_ptr.vmem [resolvable:$true] %s884
          %887 = dma.hbm_to_vmem [thread:$0]  %s875, 16, %s885, [#allocation4]
          %s888 = sld [smem:[#allocation6 + $0x301]]
          %s889 = smul.addr %s888, 16
          %s890 = scalar_lea.hbm %s1, %s889
          %s891 = scalar_lea.vmem [#allocation3], 14
          // Predicated region
          $region229: #{tpu_custom_call.1} parent=31 // pred_check
            _
          $region230: #{tpu_custom_call.1} parent=31 // pred_check_branch
            %893 = sbr.rel target = $region232
          $region231: #{tpu_custom_call.1} parent=31 // pred_region
            %894 = sst [smem:[#allocation13]] [#allocation112]
            %895 = sst [smem:[#allocation14]] [#allocation111]
          $region232: #{tpu_custom_call.1} parent=31 // pred_fallthru
            _
          %897 = shalt.err (0)
          %s899 = sshll.u32 %s891, 4
          %s900 = int_to_ptr.vmem [resolvable:$true] %s899
          %902 = dma.hbm_to_vmem [thread:$0]  %s890, 16, %s900, %s165
          %s903 = sld [smem:[#allocation6 + $0x302]]
          %s904 = smul.addr %s903, 16
          %s905 = scalar_lea.hbm %s1, %s904
          %s906 = scalar_lea.vmem [#allocation3], 22
          // Predicated region
          $region233: #{tpu_custom_call.1} parent=31 // pred_check
            _
          $region234: #{tpu_custom_call.1} parent=31 // pred_check_branch
            %908 = sbr.rel target = $region236
          $region235: #{tpu_custom_call.1} parent=31 // pred_region
            %909 = sst [smem:[#allocation13]] [#allocation114]
            %910 = sst [smem:[#allocation14]] [#allocation113]
          $region236: #{tpu_custom_call.1} parent=31 // pred_fallthru
            _
          %912 = shalt.err (0)
          %s914 = sshll.u32 %s906, 4
          %s915 = int_to_ptr.vmem [resolvable:$true] %s914
          %917 = dma.hbm_to_vmem [thread:$0]  %s905, 16, %s915, %s181
          %s918 = sld [smem:[#allocation6 + $0x303]]
          %s919 = smul.addr %s918, 16
          %s920 = scalar_lea.hbm %s1, %s919
          %s921 = scalar_lea.vmem [#allocation3], 30
          // Predicated region
          $region237: #{tpu_custom_call.1} parent=31 // pred_check
            _
          $region238: #{tpu_custom_call.1} parent=31 // pred_check_branch
            %923 = sbr.rel target = $region240
          $region239: #{tpu_custom_call.1} parent=31 // pred_region
            %924 = sst [smem:[#allocation13]] [#allocation116]
            %925 = sst [smem:[#allocation14]] [#allocation115]
          $region240: #{tpu_custom_call.1} parent=31 // pred_fallthru
            _
          %927 = shalt.err (0)
          %s929 = sshll.u32 %s921, 4
          %s930 = int_to_ptr.vmem [resolvable:$true] %s929
          %932 = dma.hbm_to_vmem [thread:$0]  %s920, 16, %s930, %s197
          %s933 = sld [smem:[#allocation6 + $0x304]]
          %s934 = smul.addr %s933, 16
          %s935 = scalar_lea.hbm %s1, %s934
          %s936 = scalar_lea.vmem [#allocation3], 38
          // Predicated region
          $region241: #{tpu_custom_call.1} parent=31 // pred_check
            _
          $region242: #{tpu_custom_call.1} parent=31 // pred_check_branch
            %938 = sbr.rel target = $region244
          $region243: #{tpu_custom_call.1} parent=31 // pred_region
            %939 = sst [smem:[#allocation13]] [#allocation118]
            %940 = sst [smem:[#allocation14]] [#allocation117]
          $region244: #{tpu_custom_call.1} parent=31 // pred_fallthru
            _
          %942 = shalt.err (0)
          %s944 = sshll.u32 %s936, 4
          %s945 = int_to_ptr.vmem [resolvable:$true] %s944
          %947 = dma.hbm_to_vmem [thread:$0]  %s935, 16, %s945, %s213
          %s948 = sld [smem:[#allocation6 + $0x305]]
          %s949 = smul.addr %s948, 16
          %s950 = scalar_lea.hbm %s1, %s949
          %s951 = scalar_lea.vmem [#allocation3], 46
          // Predicated region
          $region245: #{tpu_custom_call.1} parent=31 // pred_check
            _
          $region246: #{tpu_custom_call.1} parent=31 // pred_check_branch
            %953 = sbr.rel target = $region248
          $region247: #{tpu_custom_call.1} parent=31 // pred_region
            %954 = sst [smem:[#allocation13]] [#allocation120]
            %955 = sst [smem:[#allocation14]] [#allocation119]
          $region248: #{tpu_custom_call.1} parent=31 // pred_fallthru
            _
          %957 = shalt.err (0)
          %s959 = sshll.u32 %s951, 4
          %s960 = int_to_ptr.vmem [resolvable:$true] %s959
          %962 = dma.hbm_to_vmem [thread:$0]  %s950, 16, %s960, %s229
          %s963 = sld [smem:[#allocation6 + $0x306]]
          %s964 = smul.addr %s963, 16
          %s965 = scalar_lea.hbm %s1, %s964
          %s966 = scalar_lea.vmem [#allocation3], 54
          // Predicated region
          $region249: #{tpu_custom_call.1} parent=31 // pred_check
            _
          $region250: #{tpu_custom_call.1} parent=31 // pred_check_branch
            %968 = sbr.rel target = $region252
          $region251: #{tpu_custom_call.1} parent=31 // pred_region
            %969 = sst [smem:[#allocation13]] [#allocation122]
            %970 = sst [smem:[#allocation14]] [#allocation121]
          $region252: #{tpu_custom_call.1} parent=31 // pred_fallthru
            _
          %972 = shalt.err (0)
          %s974 = sshll.u32 %s966, 4
          %s975 = int_to_ptr.vmem [resolvable:$true] %s974
          %977 = dma.hbm_to_vmem [thread:$0]  %s965, 16, %s975, %s245
          %s978 = sld [smem:[#allocation6 + $0x307]]
          %s979 = smul.addr %s978, 16
          %s980 = scalar_lea.hbm %s1, %s979
          %s981 = scalar_lea.vmem [#allocation3], 62
          // Predicated region
          $region253: #{tpu_custom_call.1} parent=31 // pred_check
            _
          $region254: #{tpu_custom_call.1} parent=31 // pred_check_branch
            %983 = sbr.rel target = $region256
          $region255: #{tpu_custom_call.1} parent=31 // pred_region
            %984 = sst [smem:[#allocation13]] [#allocation124]
            %985 = sst [smem:[#allocation14]] [#allocation123]
          $region256: #{tpu_custom_call.1} parent=31 // pred_fallthru
            _
          %987 = shalt.err (0)
          %s989 = sshll.u32 %s981, 4
          %s990 = int_to_ptr.vmem [resolvable:$true] %s989
          %992 = dma.hbm_to_vmem [thread:$0]  %s980, 16, %s990, %s261
          %s993 = sld [smem:[#allocation6 + $0x380]]
          %s994 = smul.addr %s993, 16
          %s995 = scalar_lea.hbm %s1, %s994
          %s996 = scalar_lea.vmem [#allocation3], 7
          // Predicated region
          $region257: #{tpu_custom_call.1} parent=31 // pred_check
            _
          $region258: #{tpu_custom_call.1} parent=31 // pred_check_branch
            %998 = sbr.rel target = $region260
          $region259: #{tpu_custom_call.1} parent=31 // pred_region
            %999 = sst [smem:[#allocation13]] [#allocation126]
            %1000 = sst [smem:[#allocation14]] [#allocation125]
          $region260: #{tpu_custom_call.1} parent=31 // pred_fallthru
            _
          %1002 = shalt.err (0)
          %s1004 = sshll.u32 %s996, 4
          %s1005 = int_to_ptr.vmem [resolvable:$true] %s1004
          %1007 = dma.hbm_to_vmem [thread:$0]  %s995, 16, %s1005, [#allocation4]
          %s1008 = sld [smem:[#allocation6 + $0x381]]
          %s1009 = smul.addr %s1008, 16
          %s1010 = scalar_lea.hbm %s1, %s1009
          %s1011 = scalar_lea.vmem [#allocation3], 15
          // Predicated region
          $region261: #{tpu_custom_call.1} parent=31 // pred_check
            _
          $region262: #{tpu_custom_call.1} parent=31 // pred_check_branch
            %1013 = sbr.rel target = $region264
          $region263: #{tpu_custom_call.1} parent=31 // pred_region
            %1014 = sst [smem:[#allocation13]] [#allocation128]
            %1015 = sst [smem:[#allocation14]] [#allocation127]
          $region264: #{tpu_custom_call.1} parent=31 // pred_fallthru
            _
          %1017 = shalt.err (0)
          %s1019 = sshll.u32 %s1011, 4
          %s1020 = int_to_ptr.vmem [resolvable:$true] %s1019
          %1022 = dma.hbm_to_vmem [thread:$0]  %s1010, 16, %s1020, %s165
          %s1023 = sld [smem:[#allocation6 + $0x382]]
          %s1024 = smul.addr %s1023, 16
          %s1025 = scalar_lea.hbm %s1, %s1024
          %s1026 = scalar_lea.vmem [#allocation3], 23
          // Predicated region
          $region265: #{tpu_custom_call.1} parent=31 // pred_check
            _
          $region266: #{tpu_custom_call.1} parent=31 // pred_check_branch
            %1028 = sbr.rel target = $region268
          $region267: #{tpu_custom_call.1} parent=31 // pred_region
            %1029 = sst [smem:[#allocation13]] [#allocation130]
            %1030 = sst [smem:[#allocation14]] [#allocation129]
          $region268: #{tpu_custom_call.1} parent=31 // pred_fallthru
            _
          %1032 = shalt.err (0)
          %s1034 = sshll.u32 %s1026, 4
          %s1035 = int_to_ptr.vmem [resolvable:$true] %s1034
          %1037 = dma.hbm_to_vmem [thread:$0]  %s1025, 16, %s1035, %s181
          %s1038 = sld [smem:[#allocation6 + $0x383]]
          %s1039 = smul.addr %s1038, 16
          %s1040 = scalar_lea.hbm %s1, %s1039
          %s1041 = scalar_lea.vmem [#allocation3], 31
          // Predicated region
          $region269: #{tpu_custom_call.1} parent=31 // pred_check
            _
          $region270: #{tpu_custom_call.1} parent=31 // pred_check_branch
            %1043 = sbr.rel target = $region272
          $region271: #{tpu_custom_call.1} parent=31 // pred_region
            %1044 = sst [smem:[#allocation13]] [#allocation132]
            %1045 = sst [smem:[#allocation14]] [#allocation131]
          $region272: #{tpu_custom_call.1} parent=31 // pred_fallthru
            _
          %1047 = shalt.err (0)
          %s1049 = sshll.u32 %s1041, 4
          %s1050 = int_to_ptr.vmem [resolvable:$true] %s1049
          %1052 = dma.hbm_to_vmem [thread:$0]  %s1040, 16, %s1050, %s197
          %s1053 = sld [smem:[#allocation6 + $0x384]]
          %s1054 = smul.addr %s1053, 16
          %s1055 = scalar_lea.hbm %s1, %s1054
          %s1056 = scalar_lea.vmem [#allocation3], 39
          // Predicated region
          $region273: #{tpu_custom_call.1} parent=31 // pred_check
            _
          $region274: #{tpu_custom_call.1} parent=31 // pred_check_branch
            %1058 = sbr.rel target = $region276
          $region275: #{tpu_custom_call.1} parent=31 // pred_region
            %1059 = sst [smem:[#allocation13]] [#allocation134]
            %1060 = sst [smem:[#allocation14]] [#allocation133]
          $region276: #{tpu_custom_call.1} parent=31 // pred_fallthru
            _
          %1062 = shalt.err (0)
          %s1064 = sshll.u32 %s1056, 4
          %s1065 = int_to_ptr.vmem [resolvable:$true] %s1064
          %1067 = dma.hbm_to_vmem [thread:$0]  %s1055, 16, %s1065, %s213
          %s1068 = sld [smem:[#allocation6 + $0x385]]
          %s1069 = smul.addr %s1068, 16
          %s1070 = scalar_lea.hbm %s1, %s1069
          %s1071 = scalar_lea.vmem [#allocation3], 47
          // Predicated region
          $region277: #{tpu_custom_call.1} parent=31 // pred_check
            _
          $region278: #{tpu_custom_call.1} parent=31 // pred_check_branch
            %1073 = sbr.rel target = $region280
          $region279: #{tpu_custom_call.1} parent=31 // pred_region
            %1074 = sst [smem:[#allocation13]] [#allocation136]
            %1075 = sst [smem:[#allocation14]] [#allocation135]
          $region280: #{tpu_custom_call.1} parent=31 // pred_fallthru
            _
          %1077 = shalt.err (0)
          %s1079 = sshll.u32 %s1071, 4
          %s1080 = int_to_ptr.vmem [resolvable:$true] %s1079
          %1082 = dma.hbm_to_vmem [thread:$0]  %s1070, 16, %s1080, %s229
          %s1083 = sld [smem:[#allocation6 + $0x386]]
          %s1084 = smul.addr %s1083, 16
          %s1085 = scalar_lea.hbm %s1, %s1084
          %s1086 = scalar_lea.vmem [#allocation3], 55
          // Predicated region
          $region281: #{tpu_custom_call.1} parent=31 // pred_check
            _
          $region282: #{tpu_custom_call.1} parent=31 // pred_check_branch
            %1088 = sbr.rel target = $region284
          $region283: #{tpu_custom_call.1} parent=31 // pred_region
            %1089 = sst [smem:[#allocation13]] [#allocation138]
            %1090 = sst [smem:[#allocation14]] [#allocation137]
          $region284: #{tpu_custom_call.1} parent=31 // pred_fallthru
            _
          %1092 = shalt.err (0)
          %s1094 = sshll.u32 %s1086, 4
          %s1095 = int_to_ptr.vmem [resolvable:$true] %s1094
          %1097 = dma.hbm_to_vmem [thread:$0]  %s1085, 16, %s1095, %s245
          %s1098 = sld [smem:[#allocation6 + $0x387]]
          %s1099 = smul.addr %s1098, 16
          %s1100 = scalar_lea.hbm %s1, %s1099
          %s1101 = scalar_lea.vmem [#allocation3], 63
          // Predicated region
          $region285: #{tpu_custom_call.1} parent=31 // pred_check
            _
          $region286: #{tpu_custom_call.1} parent=31 // pred_check_branch
            %1103 = sbr.rel target = $region288
          $region287: #{tpu_custom_call.1} parent=31 // pred_region
            %1104 = sst [smem:[#allocation13]] [#allocation140]
            %1105 = sst [smem:[#allocation14]] [#allocation139]
          $region288: #{tpu_custom_call.1} parent=31 // pred_fallthru
            _
          %1107 = shalt.err (0)
          %s1109 = sshll.u32 %s1101, 4
          %s1110 = int_to_ptr.vmem [resolvable:$true] %s1109
          %1112 = dma.hbm_to_vmem [thread:$0]  %s1100, 16, %s1110, %s261
          %s1113 = smul.u32 8, 1
          %s1114 = sshll.u32 %s1113, 4
          %1115 = dma.done [#allocation4], %s1114
          %s1116 = sshll.u32 %s1113, 4
          %1117 = dma.done %s165, %s1116
          %s1118 = sshll.u32 %s1113, 4
          %1119 = dma.done %s181, %s1118
          %s1120 = sshll.u32 %s1113, 4
          %1121 = dma.done %s197, %s1120
          %s1122 = sshll.u32 %s1113, 4
          %1123 = dma.done %s213, %s1122
          %s1124 = sshll.u32 %s1113, 4
          %1125 = dma.done %s229, %s1124
          %s1126 = sshll.u32 %s1113, 4
          %1127 = dma.done %s245, %s1126
          %s1128 = sshll.u32 %s1113, 4
          %1129 = dma.done %s261, %s1128
          %v1130 = vld [vmem:[#allocation3] sm:$0xff]
          %v1131 = vld [vmem:[#allocation3 + $0x8] sm:$0xff]
          %v1132 = vld [vmem:[#allocation3 + $0x10] sm:$0xff]
          %v1133 = vld [vmem:[#allocation3 + $0x18] sm:$0xff]
          %v1134 = vld [vmem:[#allocation3 + $0x20] sm:$0xff]
          %v1135 = vld [vmem:[#allocation3 + $0x28] sm:$0xff]
          %v1136 = vld [vmem:[#allocation3 + $0x30] sm:$0xff]
          %v1137 = vld [vmem:[#allocation3 + $0x38] sm:$0xff]
          %v1138 = vmul.f32 %v1130, %v1130
          %v1139 = vmul.f32 %v1131, %v1131
          %v1140 = vmul.f32 %v1132, %v1132
          %v1141 = vmul.f32 %v1133, %v1133
          %v1142 = vmul.f32 %v1134, %v1134
          %v1143 = vmul.f32 %v1135, %v1135
          %v1144 = vmul.f32 %v1136, %v1136
          %v1145 = vmul.f32 %v1137, %v1137
          %1146 = vadd.xlane.f32.xlu0 %v1138
          %v1147 = vpop.xlane.xlu0 %1146
          %1148 = vadd.xlane.f32.xlu0 %v1139
          %v1149 = vpop.xlane.xlu0 %1148
          %1150 = vadd.xlane.f32.xlu0 %v1140
          %v1151 = vpop.xlane.xlu0 %1150
          %1152 = vadd.xlane.f32.xlu0 %v1141
          %v1153 = vpop.xlane.xlu0 %1152
          %1154 = vadd.xlane.f32.xlu0 %v1142
          %v1155 = vpop.xlane.xlu0 %1154
          %1156 = vadd.xlane.f32.xlu0 %v1143
          %v1157 = vpop.xlane.xlu0 %1156
          %1158 = vadd.xlane.f32.xlu0 %v1144
          %v1159 = vpop.xlane.xlu0 %1158
          %1160 = vadd.xlane.f32.xlu0 %v1145
          %v1161 = vpop.xlane.xlu0 %1160
          %v1162 = vmax.f32 %v1147, 1e-30
          %v1163 = vmax.f32 %v1149, 1e-30
          %v1164 = vmax.f32 %v1151, 1e-30
          %v1165 = vmax.f32 %v1153, 1e-30
          %v1166 = vmax.f32 %v1155, 1e-30
          %v1167 = vmax.f32 %v1157, 1e-30
          %v1168 = vmax.f32 %v1159, 1e-30
          %v1169 = vmax.f32 %v1161, 1e-30
          %v1170 = vrsqrt.pop %v1162
          %v1171 = vrsqrt.pop %v1163
          %v1172 = vrsqrt.pop %v1164
          %v1173 = vrsqrt.pop %v1165
          %v1174 = vrsqrt.pop %v1166
          %v1175 = vrsqrt.pop %v1167
          %v1176 = vrsqrt.pop %v1168
          %v1177 = vrsqrt.pop %v1169
          %vm1178 = vcmp.gt.f32.partialorder %v1147, 1.0
          %vm1179 = vcmp.gt.f32.partialorder %v1149, 1.0
          %vm1180 = vcmp.gt.f32.partialorder %v1151, 1.0
          %vm1181 = vcmp.gt.f32.partialorder %v1153, 1.0
          %vm1182 = vcmp.gt.f32.partialorder %v1155, 1.0
          %vm1183 = vcmp.gt.f32.partialorder %v1157, 1.0
          %vm1184 = vcmp.gt.f32.partialorder %v1159, 1.0
          %vm1185 = vcmp.gt.f32.partialorder %v1161, 1.0
          %v1186 = vsel %vm1178, %v1170, 1.0
          %v1187 = vsel %vm1179, %v1171, 1.0
          %v1188 = vsel %vm1180, %v1172, 1.0
          %v1189 = vsel %vm1181, %v1173, 1.0
          %v1190 = vsel %vm1182, %v1174, 1.0
          %v1191 = vsel %vm1183, %v1175, 1.0
          %v1192 = vsel %vm1184, %v1176, 1.0
          %v1193 = vsel %vm1185, %v1177, 1.0
          %v1194 = vmul.f32 %v1130, %v1186
          %v1195 = vmul.f32 %v1131, %v1187
          %v1196 = vmul.f32 %v1132, %v1188
          %v1197 = vmul.f32 %v1133, %v1189
          %v1198 = vmul.f32 %v1134, %v1190
          %v1199 = vmul.f32 %v1135, %v1191
          %v1200 = vmul.f32 %v1136, %v1192
          %v1201 = vmul.f32 %v1137, %v1193
          %v1202 = vadd.f32 %v1194, %v1195
          %v1203 = vadd.f32 %v1202, %v1196
          %v1204 = vadd.f32 %v1203, %v1197
          %v1205 = vadd.f32 %v1204, %v1198
          %v1206 = vadd.f32 %v1205, %v1199
          %v1207 = vadd.f32 %v1206, %v1200
          %v1208 = vadd.f32 %v1207, %v1201
          %v1209 = vmul.f32 %v1208, 0.125
          %1210 = vst [vmem:[#allocation2] sm:$0xff] %v1209
        $region32: #{tpu_custom_call.1} parent=23 // pred_fallthru
          _
        %v1211 = vld [vmem:[#allocation2] sm:$0xff]
        %v1212 = vld [vmem:[%s122] sm:$0xff]
        %v1213 = vld [vmem:[%s122 + $0x8] sm:$0xff]
        %v1214 = vld [vmem:[%s122 + $0x10] sm:$0xff]
        %v1215 = vld [vmem:[%s122 + $0x18] sm:$0xff]
        %v1216 = vld [vmem:[%s122 + $0x20] sm:$0xff]
        %v1217 = vld [vmem:[%s122 + $0x28] sm:$0xff]
        %v1218 = vld [vmem:[%s122 + $0x30] sm:$0xff]
        %v1219 = vld [vmem:[%s122 + $0x38] sm:$0xff]
        %v1220 = vld [vmem:[%s122 + $0x40] sm:$0xff]
        %v1221 = vld [vmem:[%s122 + $0x48] sm:$0xff]
        %v1222 = vld [vmem:[%s122 + $0x50] sm:$0xff]
        %v1223 = vld [vmem:[%s122 + $0x58] sm:$0xff]
        %v1224 = vld [vmem:[%s122 + $0x60] sm:$0xff]
        %v1225 = vld [vmem:[%s122 + $0x68] sm:$0xff]
        %v1226 = vld [vmem:[%s122 + $0x70] sm:$0xff]
        %v1227 = vld [vmem:[%s122 + $0x78] sm:$0xff]
        %v1228 = vld [vmem:[%s122 + $0x80] sm:$0xff]
        %v1229 = vld [vmem:[%s122 + $0x88] sm:$0xff]
        %v1230 = vld [vmem:[%s122 + $0x90] sm:$0xff]
        %v1231 = vld [vmem:[%s122 + $0x98] sm:$0xff]
        %v1232 = vld [vmem:[%s122 + $0xa0] sm:$0xff]
        %v1233 = vld [vmem:[%s122 + $0xa8] sm:$0xff]
        %v1234 = vld [vmem:[%s122 + $0xb0] sm:$0xff]
        %v1235 = vld [vmem:[%s122 + $0xb8] sm:$0xff]
        %v1236 = vld [vmem:[%s122 + $0xc0] sm:$0xff]
        %v1237 = vld [vmem:[%s122 + $0xc8] sm:$0xff]
        %v1238 = vld [vmem:[%s122 + $0xd0] sm:$0xff]
        %v1239 = vld [vmem:[%s122 + $0xd8] sm:$0xff]
        %v1240 = vld [vmem:[%s122 + $0xe0] sm:$0xff]
        %v1241 = vld [vmem:[%s122 + $0xe8] sm:$0xff]
        %v1242 = vld [vmem:[%s122 + $0xf0] sm:$0xff]
        %v1243 = vld [vmem:[%s122 + $0xf8] sm:$0xff]
        %v1244 = vld [vmem:[%s122 + $0x100] sm:$0xff]
        %v1245 = vld [vmem:[%s122 + $0x108] sm:$0xff]
        %v1246 = vld [vmem:[%s122 + $0x110] sm:$0xff]
        %v1247 = vld [vmem:[%s122 + $0x118] sm:$0xff]
        %v1248 = vld [vmem:[%s122 + $0x120] sm:$0xff]
        %v1249 = vld [vmem:[%s122 + $0x128] sm:$0xff]
        %v1250 = vld [vmem:[%s122 + $0x130] sm:$0xff]
        %v1251 = vld [vmem:[%s122 + $0x138] sm:$0xff]
        %v1252 = vld [vmem:[%s122 + $0x140] sm:$0xff]
        %v1253 = vld [vmem:[%s122 + $0x148] sm:$0xff]
        %v1254 = vld [vmem:[%s122 + $0x150] sm:$0xff]
        %v1255 = vld [vmem:[%s122 + $0x158] sm:$0xff]
        %v1256 = vld [vmem:[%s122 + $0x160] sm:$0xff]
        %v1257 = vld [vmem:[%s122 + $0x168] sm:$0xff]
        %v1258 = vld [vmem:[%s122 + $0x170] sm:$0xff]
        %v1259 = vld [vmem:[%s122 + $0x178] sm:$0xff]
        %v1260 = vld [vmem:[%s122 + $0x180] sm:$0xff]
        %v1261 = vld [vmem:[%s122 + $0x188] sm:$0xff]
        %v1262 = vld [vmem:[%s122 + $0x190] sm:$0xff]
        %v1263 = vld [vmem:[%s122 + $0x198] sm:$0xff]
        %v1264 = vld [vmem:[%s122 + $0x1a0] sm:$0xff]
        %v1265 = vld [vmem:[%s122 + $0x1a8] sm:$0xff]
        %v1266 = vld [vmem:[%s122 + $0x1b0] sm:$0xff]
        %v1267 = vld [vmem:[%s122 + $0x1b8] sm:$0xff]
        %v1268 = vld [vmem:[%s122 + $0x1c0] sm:$0xff]
        %v1269 = vld [vmem:[%s122 + $0x1c8] sm:$0xff]
        %v1270 = vld [vmem:[%s122 + $0x1d0] sm:$0xff]
        %v1271 = vld [vmem:[%s122 + $0x1d8] sm:$0xff]
        %v1272 = vld [vmem:[%s122 + $0x1e0] sm:$0xff]
        %v1273 = vld [vmem:[%s122 + $0x1e8] sm:$0xff]
        %v1274 = vld [vmem:[%s122 + $0x1f0] sm:$0xff]
        %v1275 = vld [vmem:[%s122 + $0x1f8] sm:$0xff]
        %1276 = vmatprep.subr.mxu0 0.0
        %1277 = vmatpush1.xpose.msra.mxu0 %v1227
        %1278 = vmatprep.subr.mxu0 0.0
        %1279 = vmatpush1.xpose.msra.mxu0 %v1226
        %1280 = vmatprep.subr.mxu0 0.0
        %1281 = vmatpush1.xpose.msra.mxu0 %v1225
        %1282 = vmatprep.subr.mxu0 0.0
        %1283 = vmatpush1.xpose.msra.mxu0 %v1224
        %1284 = vmatprep.subr.mxu0 0.0
        %1285 = vmatpush1.xpose.msra.mxu0 %v1223
        %1286 = vmatprep.subr.mxu0 0.0
        %1287 = vmatpush1.xpose.msra.mxu0 %v1222
        %1288 = vmatprep.subr.mxu0 0.0
        %1289 = vmatpush1.xpose.msra.mxu0 %v1221
        %1290 = vmatprep.subr.mxu0 0.0
        %1291 = vmatpush1.xpose.msra.mxu0 %v1220
        %1292 = vmatprep.subr.mxu0 0.0
        %1293 = vmatpush1.xpose.msra.mxu0 %v1219
        %1294 = vmatprep.subr.mxu0 0.0
        %1295 = vmatpush1.xpose.msra.mxu0 %v1218
        %1296 = vmatprep.subr.mxu0 0.0
        %1297 = vmatpush1.xpose.msra.mxu0 %v1217
        %1298 = vmatprep.subr.mxu0 0.0
        %1299 = vmatpush1.xpose.msra.mxu0 %v1216
        %1300 = vmatprep.subr.mxu0 0.0
        %1301 = vmatpush1.xpose.msra.mxu0 %v1215
        %1302 = vmatprep.subr.mxu0 0.0
        %1303 = vmatpush1.xpose.msra.mxu0 %v1214
        %1304 = vmatprep.subr.mxu0 0.0
        %1305 = vmatpush1.xpose.msra.mxu0 %v1213
        %1306 = vmatprep.subr.mxu0 0.0
        %1307 = vmatpush1.xpose.msra.mxu0 %v1212
        %1308 = vmatprep.subr.mxu0 0.0
        %1309 = vmatpush2.xpose.msra.mxu0 %v1243
        %1310 = vmatprep.subr.mxu0 0.0
        %1311 = vmatpush2.xpose.msra.mxu0 %v1242
        %1312 = vmatprep.subr.mxu0 0.0
        %1313 = vmatpush2.xpose.msra.mxu0 %v1241
        %1314 = vmatprep.subr.mxu0 0.0
        %1315 = vmatpush2.xpose.msra.mxu0 %v1240
        %1316 = vmatprep.subr.mxu0 0.0
        %1317 = vmatpush2.xpose.msra.mxu0 %v1239
        %1318 = vmatprep.subr.mxu0 0.0
        %1319 = vmatpush2.xpose.msra.mxu0 %v1238
        %1320 = vmatprep.subr.mxu0 0.0
        %1321 = vmatpush2.xpose.msra.mxu0 %v1237
        %1322 = vmatprep.subr.mxu0 0.0
        %1323 = vmatpush2.xpose.msra.mxu0 %v1236
        %1324 = vmatprep.subr.mxu0 0.0
        %1325 = vmatpush2.xpose.msra.mxu0 %v1235
        %1326 = vmatprep.subr.mxu0 0.0
        %1327 = vmatpush2.xpose.msra.mxu0 %v1234
        %1328 = vmatprep.subr.mxu0 0.0
        %1329 = vmatpush2.xpose.msra.mxu0 %v1233
        %1330 = vmatprep.subr.mxu0 0.0
        %1331 = vmatpush2.xpose.msra.mxu0 %v1232
        %1332 = vmatprep.subr.mxu0 0.0
        %1333 = vmatpush2.xpose.msra.mxu0 %v1231
        %1334 = vmatprep.subr.mxu0 0.0
        %1335 = vmatpush2.xpose.msra.mxu0 %v1230
        %1336 = vmatprep.subr.mxu0 0.0
        %1337 = vmatpush2.xpose.msra.mxu0 %v1229
        %1338 = vmatprep.subr.mxu0 0.0
        %1339 = vmatpush2.xpose.msra.mxu0 %v1228
        %1340 = vmatprep.mubr.f32.mxu0 0.0
        %1341 = vmatmul.mubr.f32.gmra.mxu0 %v1211
        %v1342 = vpop.f32.mrf.mxu0
        %v1343 = vadd.f32 0.0, %v1342
        %v1344 = vpop.f32.mrf.mxu0
        %v1345 = vadd.f32 0.0, %v1344
        %1346 = vdwg.mxu0
        %1347 = vmatprep.subr.mxu0 0.0
        %1348 = vmatpush1.xpose.msra.mxu0 %v1259
        %1349 = vmatprep.subr.mxu0 0.0
        %1350 = vmatpush1.xpose.msra.mxu0 %v1258
        %1351 = vmatprep.subr.mxu0 0.0
        %1352 = vmatpush1.xpose.msra.mxu0 %v1257
        %1353 = vmatprep.subr.mxu0 0.0
        %1354 = vmatpush1.xpose.msra.mxu0 %v1256
        %1355 = vmatprep.subr.mxu0 0.0
        %1356 = vmatpush1.xpose.msra.mxu0 %v1255
        %1357 = vmatprep.subr.mxu0 0.0
        %1358 = vmatpush1.xpose.msra.mxu0 %v1254
        %1359 = vmatprep.subr.mxu0 0.0
        %1360 = vmatpush1.xpose.msra.mxu0 %v1253
        %1361 = vmatprep.subr.mxu0 0.0
        %1362 = vmatpush1.xpose.msra.mxu0 %v1252
        %1363 = vmatprep.subr.mxu0 0.0
        %1364 = vmatpush1.xpose.msra.mxu0 %v1251
        %1365 = vmatprep.subr.mxu0 0.0
        %1366 = vmatpush1.xpose.msra.mxu0 %v1250
        %1367 = vmatprep.subr.mxu0 0.0
        %1368 = vmatpush1.xpose.msra.mxu0 %v1249
        %1369 = vmatprep.subr.mxu0 0.0
        %1370 = vmatpush1.xpose.msra.mxu0 %v1248
        %1371 = vmatprep.subr.mxu0 0.0
        %1372 = vmatpush1.xpose.msra.mxu0 %v1247
        %1373 = vmatprep.subr.mxu0 0.0
        %1374 = vmatpush1.xpose.msra.mxu0 %v1246
        %1375 = vmatprep.subr.mxu0 0.0
        %1376 = vmatpush1.xpose.msra.mxu0 %v1245
        %1377 = vmatprep.subr.mxu0 0.0
        %1378 = vmatpush1.xpose.msra.mxu0 %v1244
        %1379 = vmatprep.subr.mxu0 0.0
        %1380 = vmatpush2.xpose.msra.mxu0 %v1275
        %1381 = vmatprep.subr.mxu0 0.0
        %1382 = vmatpush2.xpose.msra.mxu0 %v1274
        %1383 = vmatprep.subr.mxu0 0.0
        %1384 = vmatpush2.xpose.msra.mxu0 %v1273
        %1385 = vmatprep.subr.mxu0 0.0
        %1386 = vmatpush2.xpose.msra.mxu0 %v1272
        %1387 = vmatprep.subr.mxu0 0.0
        %1388 = vmatpush2.xpose.msra.mxu0 %v1271
        %1389 = vmatprep.subr.mxu0 0.0
        %1390 = vmatpush2.xpose.msra.mxu0 %v1270
        %1391 = vmatprep.subr.mxu0 0.0
        %1392 = vmatpush2.xpose.msra.mxu0 %v1269
        %1393 = vmatprep.subr.mxu0 0.0
        %1394 = vmatpush2.xpose.msra.mxu0 %v1268
        %1395 = vmatprep.subr.mxu0 0.0
        %1396 = vmatpush2.xpose.msra.mxu0 %v1267
        %1397 = vmatprep.subr.mxu0 0.0
        %1398 = vmatpush2.xpose.msra.mxu0 %v1266
        %1399 = vmatprep.subr.mxu0 0.0
        %1400 = vmatpush2.xpose.msra.mxu0 %v1265
        %1401 = vmatprep.subr.mxu0 0.0
        %1402 = vmatpush2.xpose.msra.mxu0 %v1264
        %1403 = vmatprep.subr.mxu0 0.0
        %1404 = vmatpush2.xpose.msra.mxu0 %v1263
        %1405 = vmatprep.subr.mxu0 0.0
        %1406 = vmatpush2.xpose.msra.mxu0 %v1262
        %1407 = vmatprep.subr.mxu0 0.0
        %1408 = vmatpush2.xpose.msra.mxu0 %v1261
        %1409 = vmatprep.subr.mxu0 0.0
        %1410 = vmatpush2.xpose.msra.mxu0 %v1260
        %1411 = vmatprep.mubr.f32.mxu0 0.0
        %1412 = vmatmul.mubr.f32.gmra.mxu0 %v1211
        %v1413 = vpop.f32.mrf.mxu0
        %v1414 = vadd.f32 0.0, %v1413
        %v1415 = vpop.f32.mrf.mxu0
        %v1416 = vadd.f32 0.0, %v1415
        %1417 = vdwg.mxu0
        %1418 = vst [vmem:[%s140] sm:$0xff] %v1343
        %1419 = vst [vmem:[%s140 + $0x8] sm:$0xff] %v1345
        %1420 = vst [vmem:[%s140 + $0x10] sm:$0xff] %v1414
        %1421 = vst [vmem:[%s140 + $0x18] sm:$0xff] %v1416
        %s1422 = sand.u32 %s58, 1
        %s1423 = scalar_lea.sflag [#allocation9], %s1422
        %s1424 = sand.u32 %s58, 1
        %s1425 = smul.addr %s1424, 32
        %s1426 = scalar_lea.vmem [#allocation10], %s1425
        // Predicated region
        $region289: #{tpu_custom_call.1} parent=23 // pred_check
          %p1427 = pneg %p68
        $region290: #{tpu_custom_call.1} parent=23 // pred_check_branch
          %1429 = sbr.rel (%p1427) target = $region292
        $region291: #{tpu_custom_call.1} parent=23 // pred_region
          %s1430 = smul.u32 4, %s24
          %s1432 = ssub.s32 512, 512
          %1433 = vsyncadd %s1423, %s1432
          %s1434 = smul.addr %s1430, 128
          %s1435 = scalar_lea.hbm %s3, %s1434
          %s1437 = sshll.u32 %s1426, 4
          %s1438 = int_to_ptr.vmem [resolvable:$true] %s1437
          %1440 = dma.vmem_to_hbm [thread:$0]  %s1438, 512, %s1435, %s1423
        $region292: #{tpu_custom_call.1} parent=23 // pred_fallthru
          _
      $region24: #{tpu_custom_call.1} parent=5 // pred_fallthru
        _
      %p1441 = scmp.le.s32.totalorder 2, %s19
      // Predicated region
      $region293: #{tpu_custom_call.1} parent=5 // pred_check
        %p1442 = pneg %p1441
      $region294: #{tpu_custom_call.1} parent=5 // pred_check_branch
        %1444 = sbr.rel (%p1442) target = $region296
      $region295: #{tpu_custom_call.1} parent=5 // pred_region
        %s1445 = ssub.s32 %s19, 2
        // Predicated region
        $region297: #{tpu_custom_call.1} parent=295 // pred_check
          %p1446 = pneg %p74
        $region298: #{tpu_custom_call.1} parent=295 // pred_check_branch
          %1448 = sbr.rel (%p1446) target = $region300
        $region299: #{tpu_custom_call.1} parent=295 // pred_region
          %s1449 = sand.u32 %s59, 1
          %s1450 = scalar_lea.sflag [#allocation9], %s1449
          %s1451 = sand.u32 %s59, 1
          %s1452 = smul.addr %s1451, 32
          %s1453 = scalar_lea.vmem [#allocation10], %s1452
          %1454 = dma.done %s1450, 512
        $region300: #{tpu_custom_call.1} parent=295 // pred_fallthru
          _
      $region296: #{tpu_custom_call.1} parent=5 // pred_fallthru
        _
    $region6: #{tpu_custom_call.1} parent=1 // loop_footer
      %s23 = sadd.s32 1, %s19
    $region7: #{tpu_custom_call.1} parent=1 // loop_footer_branch
      %18 = sbr.rel target = $region3
    $region8: #{tpu_custom_call.1} parent=1 // loop_exit
      _
    %1455 = vsyncpa [#allocation8], 1
    %s1456 = scalar_lea.sflag [#allocation8], 1
    %1457 = vsyncpa %s1456, 1
    %1458 = vsyncpa [#allocation9], 1
    %s1459 = scalar_lea.sflag [#allocation9], 1
    %1460 = vsyncpa %s1459, 1
  %1461 = vsyncmov [#allocation4]
  %s1462 = vpop.sfrf %1461
  %p1463 = scmp.eq.s32.totalorder %s1462, 0
  %p1464 = pneg %p1463
  %1466 = shalt.err (%p1464)
  %s1467 = scalar_lea.sflag [#allocation4], 1
  %1468 = vsyncmov %s1467
  %s1469 = vpop.sfrf %1468
  %p1470 = scmp.eq.s32.totalorder %s1469, 0
  %p1471 = pneg %p1470
  %1473 = shalt.err (%p1471)
  %s1474 = scalar_lea.sflag [#allocation4], 2
  %1475 = vsyncmov %s1474
  %s1476 = vpop.sfrf %1475
  %p1477 = scmp.eq.s32.totalorder %s1476, 0
  %p1478 = pneg %p1477
  %1480 = shalt.err (%p1478)
  %s1481 = scalar_lea.sflag [#allocation4], 3
  %1482 = vsyncmov %s1481
  %s1483 = vpop.sfrf %1482
  %p1484 = scmp.eq.s32.totalorder %s1483, 0
  %p1485 = pneg %p1484
  %1487 = shalt.err (%p1485)
  %s1488 = scalar_lea.sflag [#allocation4], 4
  %1489 = vsyncmov %s1488
  %s1490 = vpop.sfrf %1489
  %p1491 = scmp.eq.s32.totalorder %s1490, 0
  %p1492 = pneg %p1491
  %1494 = shalt.err (%p1492)
  %s1495 = scalar_lea.sflag [#allocation4], 5
  %1496 = vsyncmov %s1495
  %s1497 = vpop.sfrf %1496
  %p1498 = scmp.eq.s32.totalorder %s1497, 0
  %p1499 = pneg %p1498
  %1501 = shalt.err (%p1499)
  %s1502 = scalar_lea.sflag [#allocation4], 6
  %1503 = vsyncmov %s1502
  %s1504 = vpop.sfrf %1503
  %p1505 = scmp.eq.s32.totalorder %s1504, 0
  %p1506 = pneg %p1505
  %1508 = shalt.err (%p1506)
  %s1509 = scalar_lea.sflag [#allocation4], 7
  %1510 = vsyncmov %s1509
  %s1511 = vpop.sfrf %1510
  %p1512 = scmp.eq.s32.totalorder %s1511, 0
  %p1513 = pneg %p1512
  %1515 = shalt.err (%p1513)

</llo_original>
